<compile_context>
chip_gen: v7x
topology: tpu7x:2x2x1
jax: 0.10.0
libtpu: 0.0.40
codegen_flags: <defaults>
</compile_context>

<pallas_src>
import jax
import jax.numpy as jnp
from jax.experimental import pallas as pl
from jax.experimental.pallas import tpu as pltpu

# Model / problem sizes (small, consistent with the module's forward).
B = 2          # batch
S = 8          # sequence length
IN_DIM = 8     # input_dim
H = 32         # hidden_dim (d_model)
NH = 4         # nhead
HD = H // NH   # head dim
L = 2          # num_layers
FF = 4 * H     # dim_feedforward
OUT_DIM = 4    # output_dim


def _linear(x, w, b):
    # x: (T, in), w: (in, out)  [pre-transposed host-side], b: (1, out)
    return jnp.dot(x, w, preferred_element_type=jnp.float32) + b


def _layer_norm(x, g, b, eps=1e-5):
    mu = jnp.mean(x, axis=-1, keepdims=True)
    xc = x - mu
    var = jnp.mean(xc * xc, axis=-1, keepdims=True)
    return xc * jax.lax.rsqrt(var + eps) * g + b


def tft_kernel(x_ref, emb_w_ref, emb_b_ref,
               inw_ref, inb_ref, ow_ref, ob_ref,
               w1_ref, b1_ref, w2_ref, b2_ref,
               g1_ref, be1_ref, g2_ref, be2_ref,
               outw_ref, outb_ref, o_ref):
    # ---- input embedding: one Linear over all B*S tokens ----
    x = x_ref[...].reshape(B * S, IN_DIM)                        # free reshape
    h = _linear(x, emb_w_ref[...], emb_b_ref[...])               # (B*S, H)

    # ---- L post-norm encoder layers (ReLU FFN, dropout = identity) ----
    for l in range(L):
        # fused QKV projection; 1/sqrt(HD) already folded into the Q weights
        qkv = _linear(h, inw_ref[l], inb_ref[l])                 # (B*S, 3H)
        qkv3 = qkv.reshape(B, S, 3 * H)                          # once per layer

        head_outs = []
        for n in range(NH):
            q = qkv3[:, :, n * HD:(n + 1) * HD]                  # (B, S, HD)
            k = qkv3[:, :, H + n * HD:H + (n + 1) * HD]
            v = qkv3[:, :, 2 * H + n * HD:2 * H + (n + 1) * HD]
            s = jnp.einsum('bqd,bkd->bqk', q, k,
                           preferred_element_type=jnp.float32)   # (B, S, S)
            s = s - jnp.max(s, axis=-1, keepdims=True)
            p = jnp.exp(s)
            p = p * pl.reciprocal(jnp.sum(p, axis=-1, keepdims=True),
                                  approx=True)
            head_outs.append(jnp.einsum('bqk,bkd->bqd', p, v,
                                        preferred_element_type=jnp.float32))
        attn = jnp.concatenate(head_outs, axis=-1).reshape(B * S, H)

        # output projection + residual + LayerNorm (post-norm)
        proj = _linear(attn, ow_ref[l], ob_ref[l])
        h = _layer_norm(h + proj, g1_ref[l], be1_ref[l])

        # feed-forward (ReLU) + residual + LayerNorm
        ff = jnp.maximum(_linear(h, w1_ref[l], b1_ref[l]), 0.0)
        ff = _linear(ff, w2_ref[l], b2_ref[l])
        h = _layer_norm(h + ff, g2_ref[l], be2_ref[l])

    # ---- last-timestep selection + final Linear, all in-kernel ----
    h_last = h.reshape(B, S, H)[:, S - 1, :]                     # (B, H)
    o_ref[...] = _linear(h_last, outw_ref[...], outb_ref[...])   # (B, OUT_DIM)


def _full_spec(a):
    nd = a.ndim
    return pl.BlockSpec(a.shape, lambda i, nd=nd: (0,) * nd)


@jax.jit
def aws_cost_transformer(x, prepped_params):
    args = (x,) + tuple(prepped_params)
    return pl.pallas_call(
        tft_kernel,
        out_shape=jax.ShapeDtypeStruct((B, OUT_DIM), jnp.float32),
        grid=(1,),
        in_specs=[_full_spec(a) for a in args],
        out_specs=pl.BlockSpec((B, OUT_DIM), lambda i: (0, 0)),
        compiler_params=pltpu.CompilerParams(
            dimension_semantics=("arbitrary",)),
    )(*args)


def init_params(key):
    """PyTorch-layout parameters (weights stored (out_features, in_features))."""
    ks = jax.random.split(key, 12)

    def w(k, shape, fan_in):
        bound = 1.0 / jnp.sqrt(float(fan_in))
        return jax.random.uniform(k, shape, jnp.float32, -bound, bound)

    emb_w = w(ks[0], (H, IN_DIM), IN_DIM)        # input_embedding.weight
    emb_b = w(ks[1], (1, H), IN_DIM)             # input_embedding.bias
    inw = w(ks[2], (L, 3 * H, H), H)             # self_attn.in_proj_weight
    inb = w(ks[3], (L, 1, 3 * H), H)             # self_attn.in_proj_bias
    ow = w(ks[4], (L, H, H), H)                  # self_attn.out_proj.weight
    ob = w(ks[5], (L, 1, H), H)                  # self_attn.out_proj.bias
    w1 = w(ks[6], (L, FF, H), H)                 # linear1.weight
    b1 = w(ks[7], (L, 1, FF), H)                 # linear1.bias
    w2 = w(ks[8], (L, H, FF), FF)                # linear2.weight
    b2 = w(ks[9], (L, 1, H), FF)                 # linear2.bias
    g1 = jnp.ones((L, 1, H), jnp.float32)        # norm1.weight
    be1 = jnp.zeros((L, 1, H), jnp.float32)      # norm1.bias
    g2 = jnp.ones((L, 1, H), jnp.float32)        # norm2.weight
    be2 = jnp.zeros((L, 1, H), jnp.float32)      # norm2.bias
    outw = w(ks[10], (OUT_DIM, H), H)            # output_layer.weight
    outb = w(ks[11], (1, OUT_DIM), H)            # output_layer.bias
    return (emb_w, emb_b, inw, inb, ow, ob, w1, b1, w2, b2,
            g1, be1, g2, be2, outw, outb)


def prepare_params(params):
    """Host-side (one-time) prep: transpose weights to (in, out) and fold the
    1/sqrt(HD) attention scale into the Q projection.  Mathematically
    equivalent to the PyTorch forward."""
    (emb_w, emb_b, inw, inb, ow, ob, w1, b1, w2, b2,
     g1, be1, g2, be2, outw, outb) = params
    scale = 1.0 / (HD ** 0.5)
    inw = inw.at[:, :H, :].multiply(scale)       # scale Q rows of in_proj_weight
    inb = inb.at[:, :, :H].multiply(scale)       # scale Q part of in_proj_bias

    emb_w_t = emb_w.T                            # (IN_DIM, H)
    inw_t = jnp.swapaxes(inw, 1, 2)              # (L, H, 3H)
    ow_t = jnp.swapaxes(ow, 1, 2)                # (L, H, H)
    w1_t = jnp.swapaxes(w1, 1, 2)                # (L, H, FF)
    w2_t = jnp.swapaxes(w2, 1, 2)                # (L, FF, H)
    outw_t = outw.T                              # (H, OUT_DIM)

    return (emb_w_t, emb_b, inw_t, inb, ow_t, ob, w1_t, b1, w2_t, b2,
            g1, be1, g2, be2, outw_t, outb)


if __name__ == "__main__":
    key = jax.random.PRNGKey(0)
    kx, kp = jax.random.split(key)
    x = jax.random.normal(kx, (B, S, IN_DIM), jnp.float32)
    params = init_params(kp)
    prepped = prepare_params(params)

    out = aws_cost_transformer(x, prepped)
    out = jax.block_until_ready(out)
    assert out.shape == (B, OUT_DIM) and out.dtype == jnp.float32
    assert bool(jnp.all(jnp.isfinite(out)))
    print("KERNEL_OK")
</pallas_src>

<mosaic_0001>
module attributes {stable_mosaic.version = 11 : i64} {
  func.func @tft_kernel(%arg0: i32, %arg1: memref<2x8x8xf32, #tpu.memory_space<vmem>>, %arg2: memref<8x32xf32, #tpu.memory_space<vmem>>, %arg3: memref<1x32xf32, #tpu.memory_space<vmem>>, %arg4: memref<2x32x96xf32, #tpu.memory_space<vmem>>, %arg5: memref<2x1x96xf32, #tpu.memory_space<vmem>>, %arg6: memref<2x32x32xf32, #tpu.memory_space<vmem>>, %arg7: memref<2x1x32xf32, #tpu.memory_space<vmem>>, %arg8: memref<2x32x128xf32, #tpu.memory_space<vmem>>, %arg9: memref<2x1x128xf32, #tpu.memory_space<vmem>>, %arg10: memref<2x128x32xf32, #tpu.memory_space<vmem>>, %arg11: memref<2x1x32xf32, #tpu.memory_space<vmem>>, %arg12: memref<2x1x32xf32, #tpu.memory_space<vmem>>, %arg13: memref<2x1x32xf32, #tpu.memory_space<vmem>>, %arg14: memref<2x1x32xf32, #tpu.memory_space<vmem>>, %arg15: memref<2x1x32xf32, #tpu.memory_space<vmem>>, %arg16: memref<32x4xf32, #tpu.memory_space<vmem>>, %arg17: memref<1x4xf32, #tpu.memory_space<vmem>>, %arg18: memref<2x4xf32, #tpu.memory_space<vmem>>) attributes {dimension_semantics = [#tpu.dimension_semantics<arbitrary>], iteration_bounds = array<i64: 1>, scalar_prefetch = 0 : i64, scratch_operands = 0 : i64, tpu.core_type = #tpu.core_type<tc>, window_params = [{pipeline_mode = #tpu.pipeline_mode<synchronous>, transform_indices = @transform_0, window_bounds = array<i64: 2, 8, 8>}, {pipeline_mode = #tpu.pipeline_mode<synchronous>, transform_indices = @transform_1, window_bounds = array<i64: 8, 32>}, {pipeline_mode = #tpu.pipeline_mode<synchronous>, transform_indices = @transform_2, window_bounds = array<i64: 1, 32>}, {pipeline_mode = #tpu.pipeline_mode<synchronous>, transform_indices = @transform_3, window_bounds = array<i64: 2, 32, 96>}, {pipeline_mode = #tpu.pipeline_mode<synchronous>, transform_indices = @transform_4, window_bounds = array<i64: 2, 1, 96>}, {pipeline_mode = #tpu.pipeline_mode<synchronous>, transform_indices = @transform_5, window_bounds = array<i64: 2, 32, 32>}, {pipeline_mode = #tpu.pipeline_mode<synchronous>, transform_indices = @transform_6, window_bounds = array<i64: 2, 1, 32>}, {pipeline_mode = #tpu.pipeline_mode<synchronous>, transform_indices = @transform_7, window_bounds = array<i64: 2, 32, 128>}, {pipeline_mode = #tpu.pipeline_mode<synchronous>, transform_indices = @transform_8, window_bounds = array<i64: 2, 1, 128>}, {pipeline_mode = #tpu.pipeline_mode<synchronous>, transform_indices = @transform_9, window_bounds = array<i64: 2, 128, 32>}, {pipeline_mode = #tpu.pipeline_mode<synchronous>, transform_indices = @transform_10, window_bounds = array<i64: 2, 1, 32>}, {pipeline_mode = #tpu.pipeline_mode<synchronous>, transform_indices = @transform_11, window_bounds = array<i64: 2, 1, 32>}, {pipeline_mode = #tpu.pipeline_mode<synchronous>, transform_indices = @transform_12, window_bounds = array<i64: 2, 1, 32>}, {pipeline_mode = #tpu.pipeline_mode<synchronous>, transform_indices = @transform_13, window_bounds = array<i64: 2, 1, 32>}, {pipeline_mode = #tpu.pipeline_mode<synchronous>, transform_indices = @transform_14, window_bounds = array<i64: 2, 1, 32>}, {pipeline_mode = #tpu.pipeline_mode<synchronous>, transform_indices = @transform_15, window_bounds = array<i64: 32, 4>}, {pipeline_mode = #tpu.pipeline_mode<synchronous>, transform_indices = @transform_16, window_bounds = array<i64: 1, 4>}, {pipeline_mode = #tpu.pipeline_mode<synchronous>, transform_indices = @transform_17, window_bounds = array<i64: 2, 4>}]} {
    %c0 = arith.constant 0 : index
    %c0_0 = arith.constant 0 : index
    %c0_1 = arith.constant 0 : index
    %0 = vector.load %arg1[%c0, %c0_0, %c0_1] : memref<2x8x8xf32, #tpu.memory_space<vmem>>, vector<2x8x8xf32>
    %1 = vector.shape_cast %0 : vector<2x8x8xf32> to vector<16x8xf32>
    %c0_2 = arith.constant 0 : index
    %c0_3 = arith.constant 0 : index
    %2 = vector.load %arg2[%c0_2, %c0_3] : memref<8x32xf32, #tpu.memory_space<vmem>>, vector<8x32xf32>
    %c0_4 = arith.constant 0 : index
    %c0_5 = arith.constant 0 : index
    %3 = vector.load %arg3[%c0_4, %c0_5] : memref<1x32xf32, #tpu.memory_space<vmem>>, vector<1x32xf32>
    %cst = arith.constant dense<0.000000e+00> : vector<16x32xf32>
    %4 = tpu.matmul %1, %2, %cst {dimension_numbers = #tpu.dot_dimension_numbers<[1], [0], [0], [1], [0, 0, 1, 1], [], []>} : vector<16x8xf32>, vector<8x32xf32>, vector<16x32xf32> -> vector<16x32xf32>
    %5 = vector.broadcast %3 : vector<1x32xf32> to vector<16x32xf32>
    %6 = arith.addf %4, %5 : vector<16x32xf32>
    %c0_6 = arith.constant 0 : index
    %c0_7 = arith.constant 0 : index
    %c0_8 = arith.constant 0 : index
    %7 = vector.load %arg4[%c0_6, %c0_7, %c0_8] : memref<2x32x96xf32, #tpu.memory_space<vmem>>, vector<1x32x96xf32>
    %8 = vector.shape_cast %7 : vector<1x32x96xf32> to vector<32x96xf32>
    %c0_9 = arith.constant 0 : index
    %c0_10 = arith.constant 0 : index
    %c0_11 = arith.constant 0 : index
    %9 = vector.load %arg5[%c0_9, %c0_10, %c0_11] : memref<2x1x96xf32, #tpu.memory_space<vmem>>, vector<1x1x96xf32>
    %10 = vector.shape_cast %9 : vector<1x1x96xf32> to vector<1x96xf32>
    %cst_12 = arith.constant dense<0.000000e+00> : vector<16x96xf32>
    %11 = tpu.matmul %6, %8, %cst_12 {dimension_numbers = #tpu.dot_dimension_numbers<[1], [0], [0], [1], [0, 0, 1, 1], [], []>} : vector<16x32xf32>, vector<32x96xf32>, vector<16x96xf32> -> vector<16x96xf32>
    %12 = vector.broadcast %10 : vector<1x96xf32> to vector<16x96xf32>
    %13 = arith.addf %11, %12 : vector<16x96xf32>
    %14 = vector.shape_cast %13 : vector<16x96xf32> to vector<2x8x96xf32>
    %15 = vector.extract_strided_slice %14 {offsets = [0, 0, 0], sizes = [2, 8, 8], strides = [1, 1, 1]} : vector<2x8x96xf32> to vector<2x8x8xf32>
    %16 = vector.extract_strided_slice %14 {offsets = [0, 0, 32], sizes = [2, 8, 8], strides = [1, 1, 1]} : vector<2x8x96xf32> to vector<2x8x8xf32>
    %17 = vector.extract_strided_slice %14 {offsets = [0, 0, 64], sizes = [2, 8, 8], strides = [1, 1, 1]} : vector<2x8x96xf32> to vector<2x8x8xf32>
    "tpu.trace_start"() <{level = 10 : i32, message = "bqd,bkd->bqk"}> : () -> ()
    %cst_13 = arith.constant dense<0.000000e+00> : vector<2x8x8xf32>
    %18 = tpu.matmul %15, %16, %cst_13 {dimension_numbers = #tpu.dot_dimension_numbers<[2], [2], [1], [1], [0, 0, 0, 1, 1, 1], [0], [0]>} : vector<2x8x8xf32>, vector<2x8x8xf32>, vector<2x8x8xf32> -> vector<2x8x8xf32>
    "tpu.trace_stop"() : () -> ()
    %cst_14 = arith.constant dense<0xFF800000> : vector<2x8xf32>
    %19 = vector.multi_reduction <maximumf>, %18, %cst_14 [2] : vector<2x8x8xf32> to vector<2x8xf32>
    %20 = vector.shape_cast %19 : vector<2x8xf32> to vector<2x8x1xf32>
    %21 = vector.broadcast %20 : vector<2x8x1xf32> to vector<2x8x8xf32>
    %22 = arith.subf %18, %21 : vector<2x8x8xf32>
    %23 = math.exp %22 : vector<2x8x8xf32>
    %cst_15 = arith.constant dense<0.000000e+00> : vector<2x8xf32>
    %24 = vector.multi_reduction <add>, %23, %cst_15 [2] : vector<2x8x8xf32> to vector<2x8xf32>
    %25 = vector.shape_cast %24 : vector<2x8xf32> to vector<2x8x1xf32>
    %26 = tpu.reciprocal %25 {approx = true} : vector<2x8x1xf32> -> vector<2x8x1xf32>
    %27 = vector.broadcast %26 : vector<2x8x1xf32> to vector<2x8x8xf32>
    %28 = arith.mulf %23, %27 : vector<2x8x8xf32>
    "tpu.trace_start"() <{level = 10 : i32, message = "bqk,bkd->bqd"}> : () -> ()
    %cst_16 = arith.constant dense<0.000000e+00> : vector<2x8x8xf32>
    %29 = tpu.matmul %28, %17, %cst_16 {dimension_numbers = #tpu.dot_dimension_numbers<[2], [1], [1], [2], [0, 0, 0, 1, 1, 2], [0], [0]>} : vector<2x8x8xf32>, vector<2x8x8xf32>, vector<2x8x8xf32> -> vector<2x8x8xf32>
    "tpu.trace_stop"() : () -> ()
    %30 = vector.extract_strided_slice %14 {offsets = [0, 0, 8], sizes = [2, 8, 8], strides = [1, 1, 1]} : vector<2x8x96xf32> to vector<2x8x8xf32>
    %31 = vector.extract_strided_slice %14 {offsets = [0, 0, 40], sizes = [2, 8, 8], strides = [1, 1, 1]} : vector<2x8x96xf32> to vector<2x8x8xf32>
    %32 = vector.extract_strided_slice %14 {offsets = [0, 0, 72], sizes = [2, 8, 8], strides = [1, 1, 1]} : vector<2x8x96xf32> to vector<2x8x8xf32>
    "tpu.trace_start"() <{level = 10 : i32, message = "bqd,bkd->bqk"}> : () -> ()
    %cst_17 = arith.constant dense<0.000000e+00> : vector<2x8x8xf32>
    %33 = tpu.matmul %30, %31, %cst_17 {dimension_numbers = #tpu.dot_dimension_numbers<[2], [2], [1], [1], [0, 0, 0, 1, 1, 1], [0], [0]>} : vector<2x8x8xf32>, vector<2x8x8xf32>, vector<2x8x8xf32> -> vector<2x8x8xf32>
    "tpu.trace_stop"() : () -> ()
    %cst_18 = arith.constant dense<0xFF800000> : vector<2x8xf32>
    %34 = vector.multi_reduction <maximumf>, %33, %cst_18 [2] : vector<2x8x8xf32> to vector<2x8xf32>
    %35 = vector.shape_cast %34 : vector<2x8xf32> to vector<2x8x1xf32>
    %36 = vector.broadcast %35 : vector<2x8x1xf32> to vector<2x8x8xf32>
    %37 = arith.subf %33, %36 : vector<2x8x8xf32>
    %38 = math.exp %37 : vector<2x8x8xf32>
    %cst_19 = arith.constant dense<0.000000e+00> : vector<2x8xf32>
    %39 = vector.multi_reduction <add>, %38, %cst_19 [2] : vector<2x8x8xf32> to vector<2x8xf32>
    %40 = vector.shape_cast %39 : vector<2x8xf32> to vector<2x8x1xf32>
    %41 = tpu.reciprocal %40 {approx = true} : vector<2x8x1xf32> -> vector<2x8x1xf32>
    %42 = vector.broadcast %41 : vector<2x8x1xf32> to vector<2x8x8xf32>
    %43 = arith.mulf %38, %42 : vector<2x8x8xf32>
    "tpu.trace_start"() <{level = 10 : i32, message = "bqk,bkd->bqd"}> : () -> ()
    %cst_20 = arith.constant dense<0.000000e+00> : vector<2x8x8xf32>
    %44 = tpu.matmul %43, %32, %cst_20 {dimension_numbers = #tpu.dot_dimension_numbers<[2], [1], [1], [2], [0, 0, 0, 1, 1, 2], [0], [0]>} : vector<2x8x8xf32>, vector<2x8x8xf32>, vector<2x8x8xf32> -> vector<2x8x8xf32>
    "tpu.trace_stop"() : () -> ()
    %45 = vector.extract_strided_slice %14 {offsets = [0, 0, 16], sizes = [2, 8, 8], strides = [1, 1, 1]} : vector<2x8x96xf32> to vector<2x8x8xf32>
    %46 = vector.extract_strided_slice %14 {offsets = [0, 0, 48], sizes = [2, 8, 8], strides = [1, 1, 1]} : vector<2x8x96xf32> to vector<2x8x8xf32>
    %47 = vector.extract_strided_slice %14 {offsets = [0, 0, 80], sizes = [2, 8, 8], strides = [1, 1, 1]} : vector<2x8x96xf32> to vector<2x8x8xf32>
    "tpu.trace_start"() <{level = 10 : i32, message = "bqd,bkd->bqk"}> : () -> ()
    %cst_21 = arith.constant dense<0.000000e+00> : vector<2x8x8xf32>
    %48 = tpu.matmul %45, %46, %cst_21 {dimension_numbers = #tpu.dot_dimension_numbers<[2], [2], [1], [1], [0, 0, 0, 1, 1, 1], [0], [0]>} : vector<2x8x8xf32>, vector<2x8x8xf32>, vector<2x8x8xf32> -> vector<2x8x8xf32>
    "tpu.trace_stop"() : () -> ()
    %cst_22 = arith.constant dense<0xFF800000> : vector<2x8xf32>
    %49 = vector.multi_reduction <maximumf>, %48, %cst_22 [2] : vector<2x8x8xf32> to vector<2x8xf32>
    %50 = vector.shape_cast %49 : vector<2x8xf32> to vector<2x8x1xf32>
    %51 = vector.broadcast %50 : vector<2x8x1xf32> to vector<2x8x8xf32>
    %52 = arith.subf %48, %51 : vector<2x8x8xf32>
    %53 = math.exp %52 : vector<2x8x8xf32>
    %cst_23 = arith.constant dense<0.000000e+00> : vector<2x8xf32>
    %54 = vector.multi_reduction <add>, %53, %cst_23 [2] : vector<2x8x8xf32> to vector<2x8xf32>
    %55 = vector.shape_cast %54 : vector<2x8xf32> to vector<2x8x1xf32>
    %56 = tpu.reciprocal %55 {approx = true} : vector<2x8x1xf32> -> vector<2x8x1xf32>
    %57 = vector.broadcast %56 : vector<2x8x1xf32> to vector<2x8x8xf32>
    %58 = arith.mulf %53, %57 : vector<2x8x8xf32>
    "tpu.trace_start"() <{level = 10 : i32, message = "bqk,bkd->bqd"}> : () -> ()
    %cst_24 = arith.constant dense<0.000000e+00> : vector<2x8x8xf32>
    %59 = tpu.matmul %58, %47, %cst_24 {dimension_numbers = #tpu.dot_dimension_numbers<[2], [1], [1], [2], [0, 0, 0, 1, 1, 2], [0], [0]>} : vector<2x8x8xf32>, vector<2x8x8xf32>, vector<2x8x8xf32> -> vector<2x8x8xf32>
    "tpu.trace_stop"() : () -> ()
    %60 = vector.extract_strided_slice %14 {offsets = [0, 0, 24], sizes = [2, 8, 8], strides = [1, 1, 1]} : vector<2x8x96xf32> to vector<2x8x8xf32>
    %61 = vector.extract_strided_slice %14 {offsets = [0, 0, 56], sizes = [2, 8, 8], strides = [1, 1, 1]} : vector<2x8x96xf32> to vector<2x8x8xf32>
    %62 = vector.extract_strided_slice %14 {offsets = [0, 0, 88], sizes = [2, 8, 8], strides = [1, 1, 1]} : vector<2x8x96xf32> to vector<2x8x8xf32>
    "tpu.trace_start"() <{level = 10 : i32, message = "bqd,bkd->bqk"}> : () -> ()
    %cst_25 = arith.constant dense<0.000000e+00> : vector<2x8x8xf32>
    %63 = tpu.matmul %60, %61, %cst_25 {dimension_numbers = #tpu.dot_dimension_numbers<[2], [2], [1], [1], [0, 0, 0, 1, 1, 1], [0], [0]>} : vector<2x8x8xf32>, vector<2x8x8xf32>, vector<2x8x8xf32> -> vector<2x8x8xf32>
    "tpu.trace_stop"() : () -> ()
    %cst_26 = arith.constant dense<0xFF800000> : vector<2x8xf32>
    %64 = vector.multi_reduction <maximumf>, %63, %cst_26 [2] : vector<2x8x8xf32> to vector<2x8xf32>
    %65 = vector.shape_cast %64 : vector<2x8xf32> to vector<2x8x1xf32>
    %66 = vector.broadcast %65 : vector<2x8x1xf32> to vector<2x8x8xf32>
    %67 = arith.subf %63, %66 : vector<2x8x8xf32>
    %68 = math.exp %67 : vector<2x8x8xf32>
    %cst_27 = arith.constant dense<0.000000e+00> : vector<2x8xf32>
    %69 = vector.multi_reduction <add>, %68, %cst_27 [2] : vector<2x8x8xf32> to vector<2x8xf32>
    %70 = vector.shape_cast %69 : vector<2x8xf32> to vector<2x8x1xf32>
    %71 = tpu.reciprocal %70 {approx = true} : vector<2x8x1xf32> -> vector<2x8x1xf32>
    %72 = vector.broadcast %71 : vector<2x8x1xf32> to vector<2x8x8xf32>
    %73 = arith.mulf %68, %72 : vector<2x8x8xf32>
    "tpu.trace_start"() <{level = 10 : i32, message = "bqk,bkd->bqd"}> : () -> ()
    %cst_28 = arith.constant dense<0.000000e+00> : vector<2x8x8xf32>
    %74 = tpu.matmul %73, %62, %cst_28 {dimension_numbers = #tpu.dot_dimension_numbers<[2], [1], [1], [2], [0, 0, 0, 1, 1, 2], [0], [0]>} : vector<2x8x8xf32>, vector<2x8x8xf32>, vector<2x8x8xf32> -> vector<2x8x8xf32>
    "tpu.trace_stop"() : () -> ()
    %75 = tpu.concatenate %29, %44, %59, %74 in 2 : vector<2x8x8xf32>, vector<2x8x8xf32>, vector<2x8x8xf32>, vector<2x8x8xf32> -> vector<2x8x32xf32>
    %76 = vector.shape_cast %75 : vector<2x8x32xf32> to vector<16x32xf32>
    %c0_29 = arith.constant 0 : index
    %c0_30 = arith.constant 0 : index
    %c0_31 = arith.constant 0 : index
    %77 = vector.load %arg6[%c0_29, %c0_30, %c0_31] : memref<2x32x32xf32, #tpu.memory_space<vmem>>, vector<1x32x32xf32>
    %78 = vector.shape_cast %77 : vector<1x32x32xf32> to vector<32x32xf32>
    %c0_32 = arith.constant 0 : index
    %c0_33 = arith.constant 0 : index
    %c0_34 = arith.constant 0 : index
    %79 = vector.load %arg7[%c0_32, %c0_33, %c0_34] : memref<2x1x32xf32, #tpu.memory_space<vmem>>, vector<1x1x32xf32>
    %80 = vector.shape_cast %79 : vector<1x1x32xf32> to vector<1x32xf32>
    %cst_35 = arith.constant dense<0.000000e+00> : vector<16x32xf32>
    %81 = tpu.matmul %76, %78, %cst_35 {dimension_numbers = #tpu.dot_dimension_numbers<[1], [0], [0], [1], [0, 0, 1, 1], [], []>} : vector<16x32xf32>, vector<32x32xf32>, vector<16x32xf32> -> vector<16x32xf32>
    %82 = vector.broadcast %80 : vector<1x32xf32> to vector<16x32xf32>
    %83 = arith.addf %81, %82 : vector<16x32xf32>
    %84 = arith.addf %6, %83 : vector<16x32xf32>
    %c0_36 = arith.constant 0 : index
    %c0_37 = arith.constant 0 : index
    %c0_38 = arith.constant 0 : index
    %85 = vector.load %arg12[%c0_36, %c0_37, %c0_38] : memref<2x1x32xf32, #tpu.memory_space<vmem>>, vector<1x1x32xf32>
    %86 = vector.shape_cast %85 : vector<1x1x32xf32> to vector<1x32xf32>
    %c0_39 = arith.constant 0 : index
    %c0_40 = arith.constant 0 : index
    %c0_41 = arith.constant 0 : index
    %87 = vector.load %arg13[%c0_39, %c0_40, %c0_41] : memref<2x1x32xf32, #tpu.memory_space<vmem>>, vector<1x1x32xf32>
    %88 = vector.shape_cast %87 : vector<1x1x32xf32> to vector<1x32xf32>
    %cst_42 = arith.constant dense<0.000000e+00> : vector<16xf32>
    %89 = vector.multi_reduction <add>, %84, %cst_42 [1] : vector<16x32xf32> to vector<16xf32>
    %90 = vector.shape_cast %89 : vector<16xf32> to vector<16x1xf32>
    %cst_43 = arith.constant 3.200000e+01 : f32
    %91 = vector.broadcast %cst_43 : f32 to vector<16x1xf32>
    %92 = arith.divf %90, %91 : vector<16x1xf32>
    %93 = vector.broadcast %92 : vector<16x1xf32> to vector<16x32xf32>
    %94 = arith.subf %84, %93 : vector<16x32xf32>
    %95 = arith.mulf %94, %94 : vector<16x32xf32>
    %cst_44 = arith.constant dense<0.000000e+00> : vector<16xf32>
    %96 = vector.multi_reduction <add>, %95, %cst_44 [1] : vector<16x32xf32> to vector<16xf32>
    %97 = vector.shape_cast %96 : vector<16xf32> to vector<16x1xf32>
    %cst_45 = arith.constant 3.200000e+01 : f32
    %98 = vector.broadcast %cst_45 : f32 to vector<16x1xf32>
    %99 = arith.divf %97, %98 : vector<16x1xf32>
    %cst_46 = arith.constant 9.99999974E-6 : f32
    %100 = vector.broadcast %cst_46 : f32 to vector<16x1xf32>
    %101 = arith.addf %99, %100 : vector<16x1xf32>
    %102 = math.rsqrt %101 : vector<16x1xf32>
    %103 = vector.broadcast %102 : vector<16x1xf32> to vector<16x32xf32>
    %104 = arith.mulf %94, %103 : vector<16x32xf32>
    %105 = vector.broadcast %86 : vector<1x32xf32> to vector<16x32xf32>
    %106 = arith.mulf %104, %105 : vector<16x32xf32>
    %107 = vector.broadcast %88 : vector<1x32xf32> to vector<16x32xf32>
    %108 = arith.addf %106, %107 : vector<16x32xf32>
    %c0_47 = arith.constant 0 : index
    %c0_48 = arith.constant 0 : index
    %c0_49 = arith.constant 0 : index
    %109 = vector.load %arg8[%c0_47, %c0_48, %c0_49] : memref<2x32x128xf32, #tpu.memory_space<vmem>>, vector<1x32x128xf32>
    %110 = vector.shape_cast %109 : vector<1x32x128xf32> to vector<32x128xf32>
    %c0_50 = arith.constant 0 : index
    %c0_51 = arith.constant 0 : index
    %c0_52 = arith.constant 0 : index
    %111 = vector.load %arg9[%c0_50, %c0_51, %c0_52] : memref<2x1x128xf32, #tpu.memory_space<vmem>>, vector<1x1x128xf32>
    %112 = vector.shape_cast %111 : vector<1x1x128xf32> to vector<1x128xf32>
    %cst_53 = arith.constant dense<0.000000e+00> : vector<16x128xf32>
    %113 = tpu.matmul %108, %110, %cst_53 {dimension_numbers = #tpu.dot_dimension_numbers<[1], [0], [0], [1], [0, 0, 1, 1], [], []>} : vector<16x32xf32>, vector<32x128xf32>, vector<16x128xf32> -> vector<16x128xf32>
    %114 = vector.broadcast %112 : vector<1x128xf32> to vector<16x128xf32>
    %115 = arith.addf %113, %114 : vector<16x128xf32>
    %cst_54 = arith.constant 0.000000e+00 : f32
    %116 = vector.broadcast %cst_54 : f32 to vector<16x128xf32>
    %117 = arith.maximumf %115, %116 : vector<16x128xf32>
    %c0_55 = arith.constant 0 : index
    %c0_56 = arith.constant 0 : index
    %c0_57 = arith.constant 0 : index
    %118 = vector.load %arg10[%c0_55, %c0_56, %c0_57] : memref<2x128x32xf32, #tpu.memory_space<vmem>>, vector<1x128x32xf32>
    %119 = vector.shape_cast %118 : vector<1x128x32xf32> to vector<128x32xf32>
    %c0_58 = arith.constant 0 : index
    %c0_59 = arith.constant 0 : index
    %c0_60 = arith.constant 0 : index
    %120 = vector.load %arg11[%c0_58, %c0_59, %c0_60] : memref<2x1x32xf32, #tpu.memory_space<vmem>>, vector<1x1x32xf32>
    %121 = vector.shape_cast %120 : vector<1x1x32xf32> to vector<1x32xf32>
    %cst_61 = arith.constant dense<0.000000e+00> : vector<16x32xf32>
    %122 = tpu.matmul %117, %119, %cst_61 {dimension_numbers = #tpu.dot_dimension_numbers<[1], [0], [0], [1], [0, 0, 1, 1], [], []>} : vector<16x128xf32>, vector<128x32xf32>, vector<16x32xf32> -> vector<16x32xf32>
    %123 = vector.broadcast %121 : vector<1x32xf32> to vector<16x32xf32>
    %124 = arith.addf %122, %123 : vector<16x32xf32>
    %125 = arith.addf %108, %124 : vector<16x32xf32>
    %c0_62 = arith.constant 0 : index
    %c0_63 = arith.constant 0 : index
    %c0_64 = arith.constant 0 : index
    %126 = vector.load %arg14[%c0_62, %c0_63, %c0_64] : memref<2x1x32xf32, #tpu.memory_space<vmem>>, vector<1x1x32xf32>
    %127 = vector.shape_cast %126 : vector<1x1x32xf32> to vector<1x32xf32>
    %c0_65 = arith.constant 0 : index
    %c0_66 = arith.constant 0 : index
    %c0_67 = arith.constant 0 : index
    %128 = vector.load %arg15[%c0_65, %c0_66, %c0_67] : memref<2x1x32xf32, #tpu.memory_space<vmem>>, vector<1x1x32xf32>
    %129 = vector.shape_cast %128 : vector<1x1x32xf32> to vector<1x32xf32>
    %cst_68 = arith.constant dense<0.000000e+00> : vector<16xf32>
    %130 = vector.multi_reduction <add>, %125, %cst_68 [1] : vector<16x32xf32> to vector<16xf32>
    %131 = vector.shape_cast %130 : vector<16xf32> to vector<16x1xf32>
    %cst_69 = arith.constant 3.200000e+01 : f32
    %132 = vector.broadcast %cst_69 : f32 to vector<16x1xf32>
    %133 = arith.divf %131, %132 : vector<16x1xf32>
    %134 = vector.broadcast %133 : vector<16x1xf32> to vector<16x32xf32>
    %135 = arith.subf %125, %134 : vector<16x32xf32>
    %136 = arith.mulf %135, %135 : vector<16x32xf32>
    %cst_70 = arith.constant dense<0.000000e+00> : vector<16xf32>
    %137 = vector.multi_reduction <add>, %136, %cst_70 [1] : vector<16x32xf32> to vector<16xf32>
    %138 = vector.shape_cast %137 : vector<16xf32> to vector<16x1xf32>
    %cst_71 = arith.constant 3.200000e+01 : f32
    %139 = vector.broadcast %cst_71 : f32 to vector<16x1xf32>
    %140 = arith.divf %138, %139 : vector<16x1xf32>
    %cst_72 = arith.constant 9.99999974E-6 : f32
    %141 = vector.broadcast %cst_72 : f32 to vector<16x1xf32>
    %142 = arith.addf %140, %141 : vector<16x1xf32>
    %143 = math.rsqrt %142 : vector<16x1xf32>
    %144 = vector.broadcast %143 : vector<16x1xf32> to vector<16x32xf32>
    %145 = arith.mulf %135, %144 : vector<16x32xf32>
    %146 = vector.broadcast %127 : vector<1x32xf32> to vector<16x32xf32>
    %147 = arith.mulf %145, %146 : vector<16x32xf32>
    %148 = vector.broadcast %129 : vector<1x32xf32> to vector<16x32xf32>
    %149 = arith.addf %147, %148 : vector<16x32xf32>
    %c1 = arith.constant 1 : index
    %c0_73 = arith.constant 0 : index
    %c0_74 = arith.constant 0 : index
    %150 = vector.load %arg4[%c1, %c0_73, %c0_74] : memref<2x32x96xf32, #tpu.memory_space<vmem>>, vector<1x32x96xf32>
    %151 = vector.shape_cast %150 : vector<1x32x96xf32> to vector<32x96xf32>
    %c1_75 = arith.constant 1 : index
    %c0_76 = arith.constant 0 : index
    %c0_77 = arith.constant 0 : index
    %152 = vector.load %arg5[%c1_75, %c0_76, %c0_77] : memref<2x1x96xf32, #tpu.memory_space<vmem>>, vector<1x1x96xf32>
    %153 = vector.shape_cast %152 : vector<1x1x96xf32> to vector<1x96xf32>
    %cst_78 = arith.constant dense<0.000000e+00> : vector<16x96xf32>
    %154 = tpu.matmul %149, %151, %cst_78 {dimension_numbers = #tpu.dot_dimension_numbers<[1], [0], [0], [1], [0, 0, 1, 1], [], []>} : vector<16x32xf32>, vector<32x96xf32>, vector<16x96xf32> -> vector<16x96xf32>
    %155 = vector.broadcast %153 : vector<1x96xf32> to vector<16x96xf32>
    %156 = arith.addf %154, %155 : vector<16x96xf32>
    %157 = vector.shape_cast %156 : vector<16x96xf32> to vector<2x8x96xf32>
    %158 = vector.extract_strided_slice %157 {offsets = [0, 0, 0], sizes = [2, 8, 8], strides = [1, 1, 1]} : vector<2x8x96xf32> to vector<2x8x8xf32>
    %159 = vector.extract_strided_slice %157 {offsets = [0, 0, 32], sizes = [2, 8, 8], strides = [1, 1, 1]} : vector<2x8x96xf32> to vector<2x8x8xf32>
    %160 = vector.extract_strided_slice %157 {offsets = [0, 0, 64], sizes = [2, 8, 8], strides = [1, 1, 1]} : vector<2x8x96xf32> to vector<2x8x8xf32>
    "tpu.trace_start"() <{level = 10 : i32, message = "bqd,bkd->bqk"}> : () -> ()
    %cst_79 = arith.constant dense<0.000000e+00> : vector<2x8x8xf32>
    %161 = tpu.matmul %158, %159, %cst_79 {dimension_numbers = #tpu.dot_dimension_numbers<[2], [2], [1], [1], [0, 0, 0, 1, 1, 1], [0], [0]>} : vector<2x8x8xf32>, vector<2x8x8xf32>, vector<2x8x8xf32> -> vector<2x8x8xf32>
    "tpu.trace_stop"() : () -> ()
    %cst_80 = arith.constant dense<0xFF800000> : vector<2x8xf32>
    %162 = vector.multi_reduction <maximumf>, %161, %cst_80 [2] : vector<2x8x8xf32> to vector<2x8xf32>
    %163 = vector.shape_cast %162 : vector<2x8xf32> to vector<2x8x1xf32>
    %164 = vector.broadcast %163 : vector<2x8x1xf32> to vector<2x8x8xf32>
    %165 = arith.subf %161, %164 : vector<2x8x8xf32>
    %166 = math.exp %165 : vector<2x8x8xf32>
    %cst_81 = arith.constant dense<0.000000e+00> : vector<2x8xf32>
    %167 = vector.multi_reduction <add>, %166, %cst_81 [2] : vector<2x8x8xf32> to vector<2x8xf32>
    %168 = vector.shape_cast %167 : vector<2x8xf32> to vector<2x8x1xf32>
    %169 = tpu.reciprocal %168 {approx = true} : vector<2x8x1xf32> -> vector<2x8x1xf32>
    %170 = vector.broadcast %169 : vector<2x8x1xf32> to vector<2x8x8xf32>
    %171 = arith.mulf %166, %170 : vector<2x8x8xf32>
    "tpu.trace_start"() <{level = 10 : i32, message = "bqk,bkd->bqd"}> : () -> ()
    %cst_82 = arith.constant dense<0.000000e+00> : vector<2x8x8xf32>
    %172 = tpu.matmul %171, %160, %cst_82 {dimension_numbers = #tpu.dot_dimension_numbers<[2], [1], [1], [2], [0, 0, 0, 1, 1, 2], [0], [0]>} : vector<2x8x8xf32>, vector<2x8x8xf32>, vector<2x8x8xf32> -> vector<2x8x8xf32>
    "tpu.trace_stop"() : () -> ()
    %173 = vector.extract_strided_slice %157 {offsets = [0, 0, 8], sizes = [2, 8, 8], strides = [1, 1, 1]} : vector<2x8x96xf32> to vector<2x8x8xf32>
    %174 = vector.extract_strided_slice %157 {offsets = [0, 0, 40], sizes = [2, 8, 8], strides = [1, 1, 1]} : vector<2x8x96xf32> to vector<2x8x8xf32>
    %175 = vector.extract_strided_slice %157 {offsets = [0, 0, 72], sizes = [2, 8, 8], strides = [1, 1, 1]} : vector<2x8x96xf32> to vector<2x8x8xf32>
    "tpu.trace_start"() <{level = 10 : i32, message = "bqd,bkd->bqk"}> : () -> ()
    %cst_83 = arith.constant dense<0.000000e+00> : vector<2x8x8xf32>
    %176 = tpu.matmul %173, %174, %cst_83 {dimension_numbers = #tpu.dot_dimension_numbers<[2], [2], [1], [1], [0, 0, 0, 1, 1, 1], [0], [0]>} : vector<2x8x8xf32>, vector<2x8x8xf32>, vector<2x8x8xf32> -> vector<2x8x8xf32>
    "tpu.trace_stop"() : () -> ()
    %cst_84 = arith.constant dense<0xFF800000> : vector<2x8xf32>
    %177 = vector.multi_reduction <maximumf>, %176, %cst_84 [2] : vector<2x8x8xf32> to vector<2x8xf32>
    %178 = vector.shape_cast %177 : vector<2x8xf32> to vector<2x8x1xf32>
    %179 = vector.broadcast %178 : vector<2x8x1xf32> to vector<2x8x8xf32>
    %180 = arith.subf %176, %179 : vector<2x8x8xf32>
    %181 = math.exp %180 : vector<2x8x8xf32>
    %cst_85 = arith.constant dense<0.000000e+00> : vector<2x8xf32>
    %182 = vector.multi_reduction <add>, %181, %cst_85 [2] : vector<2x8x8xf32> to vector<2x8xf32>
    %183 = vector.shape_cast %182 : vector<2x8xf32> to vector<2x8x1xf32>
    %184 = tpu.reciprocal %183 {approx = true} : vector<2x8x1xf32> -> vector<2x8x1xf32>
    %185 = vector.broadcast %184 : vector<2x8x1xf32> to vector<2x8x8xf32>
    %186 = arith.mulf %181, %185 : vector<2x8x8xf32>
    "tpu.trace_start"() <{level = 10 : i32, message = "bqk,bkd->bqd"}> : () -> ()
    %cst_86 = arith.constant dense<0.000000e+00> : vector<2x8x8xf32>
    %187 = tpu.matmul %186, %175, %cst_86 {dimension_numbers = #tpu.dot_dimension_numbers<[2], [1], [1], [2], [0, 0, 0, 1, 1, 2], [0], [0]>} : vector<2x8x8xf32>, vector<2x8x8xf32>, vector<2x8x8xf32> -> vector<2x8x8xf32>
    "tpu.trace_stop"() : () -> ()
    %188 = vector.extract_strided_slice %157 {offsets = [0, 0, 16], sizes = [2, 8, 8], strides = [1, 1, 1]} : vector<2x8x96xf32> to vector<2x8x8xf32>
    %189 = vector.extract_strided_slice %157 {offsets = [0, 0, 48], sizes = [2, 8, 8], strides = [1, 1, 1]} : vector<2x8x96xf32> to vector<2x8x8xf32>
    %190 = vector.extract_strided_slice %157 {offsets = [0, 0, 80], sizes = [2, 8, 8], strides = [1, 1, 1]} : vector<2x8x96xf32> to vector<2x8x8xf32>
    "tpu.trace_start"() <{level = 10 : i32, message = "bqd,bkd->bqk"}> : () -> ()
    %cst_87 = arith.constant dense<0.000000e+00> : vector<2x8x8xf32>
    %191 = tpu.matmul %188, %189, %cst_87 {dimension_numbers = #tpu.dot_dimension_numbers<[2], [2], [1], [1], [0, 0, 0, 1, 1, 1], [0], [0]>} : vector<2x8x8xf32>, vector<2x8x8xf32>, vector<2x8x8xf32> -> vector<2x8x8xf32>
    "tpu.trace_stop"() : () -> ()
    %cst_88 = arith.constant dense<0xFF800000> : vector<2x8xf32>
    %192 = vector.multi_reduction <maximumf>, %191, %cst_88 [2] : vector<2x8x8xf32> to vector<2x8xf32>
    %193 = vector.shape_cast %192 : vector<2x8xf32> to vector<2x8x1xf32>
    %194 = vector.broadcast %193 : vector<2x8x1xf32> to vector<2x8x8xf32>
    %195 = arith.subf %191, %194 : vector<2x8x8xf32>
    %196 = math.exp %195 : vector<2x8x8xf32>
    %cst_89 = arith.constant dense<0.000000e+00> : vector<2x8xf32>
    %197 = vector.multi_reduction <add>, %196, %cst_89 [2] : vector<2x8x8xf32> to vector<2x8xf32>
    %198 = vector.shape_cast %197 : vector<2x8xf32> to vector<2x8x1xf32>
    %199 = tpu.reciprocal %198 {approx = true} : vector<2x8x1xf32> -> vector<2x8x1xf32>
    %200 = vector.broadcast %199 : vector<2x8x1xf32> to vector<2x8x8xf32>
    %201 = arith.mulf %196, %200 : vector<2x8x8xf32>
    "tpu.trace_start"() <{level = 10 : i32, message = "bqk,bkd->bqd"}> : () -> ()
    %cst_90 = arith.constant dense<0.000000e+00> : vector<2x8x8xf32>
    %202 = tpu.matmul %201, %190, %cst_90 {dimension_numbers = #tpu.dot_dimension_numbers<[2], [1], [1], [2], [0, 0, 0, 1, 1, 2], [0], [0]>} : vector<2x8x8xf32>, vector<2x8x8xf32>, vector<2x8x8xf32> -> vector<2x8x8xf32>
    "tpu.trace_stop"() : () -> ()
    %203 = vector.extract_strided_slice %157 {offsets = [0, 0, 24], sizes = [2, 8, 8], strides = [1, 1, 1]} : vector<2x8x96xf32> to vector<2x8x8xf32>
    %204 = vector.extract_strided_slice %157 {offsets = [0, 0, 56], sizes = [2, 8, 8], strides = [1, 1, 1]} : vector<2x8x96xf32> to vector<2x8x8xf32>
    %205 = vector.extract_strided_slice %157 {offsets = [0, 0, 88], sizes = [2, 8, 8], strides = [1, 1, 1]} : vector<2x8x96xf32> to vector<2x8x8xf32>
    "tpu.trace_start"() <{level = 10 : i32, message = "bqd,bkd->bqk"}> : () -> ()
    %cst_91 = arith.constant dense<0.000000e+00> : vector<2x8x8xf32>
    %206 = tpu.matmul %203, %204, %cst_91 {dimension_numbers = #tpu.dot_dimension_numbers<[2], [2], [1], [1], [0, 0, 0, 1, 1, 1], [0], [0]>} : vector<2x8x8xf32>, vector<2x8x8xf32>, vector<2x8x8xf32> -> vector<2x8x8xf32>
    "tpu.trace_stop"() : () -> ()
    %cst_92 = arith.constant dense<0xFF800000> : vector<2x8xf32>
    %207 = vector.multi_reduction <maximumf>, %206, %cst_92 [2] : vector<2x8x8xf32> to vector<2x8xf32>
    %208 = vector.shape_cast %207 : vector<2x8xf32> to vector<2x8x1xf32>
    %209 = vector.broadcast %208 : vector<2x8x1xf32> to vector<2x8x8xf32>
    %210 = arith.subf %206, %209 : vector<2x8x8xf32>
    %211 = math.exp %210 : vector<2x8x8xf32>
    %cst_93 = arith.constant dense<0.000000e+00> : vector<2x8xf32>
    %212 = vector.multi_reduction <add>, %211, %cst_93 [2] : vector<2x8x8xf32> to vector<2x8xf32>
    %213 = vector.shape_cast %212 : vector<2x8xf32> to vector<2x8x1xf32>
    %214 = tpu.reciprocal %213 {approx = true} : vector<2x8x1xf32> -> vector<2x8x1xf32>
    %215 = vector.broadcast %214 : vector<2x8x1xf32> to vector<2x8x8xf32>
    %216 = arith.mulf %211, %215 : vector<2x8x8xf32>
    "tpu.trace_start"() <{level = 10 : i32, message = "bqk,bkd->bqd"}> : () -> ()
    %cst_94 = arith.constant dense<0.000000e+00> : vector<2x8x8xf32>
    %217 = tpu.matmul %216, %205, %cst_94 {dimension_numbers = #tpu.dot_dimension_numbers<[2], [1], [1], [2], [0, 0, 0, 1, 1, 2], [0], [0]>} : vector<2x8x8xf32>, vector<2x8x8xf32>, vector<2x8x8xf32> -> vector<2x8x8xf32>
    "tpu.trace_stop"() : () -> ()
    %218 = tpu.concatenate %172, %187, %202, %217 in 2 : vector<2x8x8xf32>, vector<2x8x8xf32>, vector<2x8x8xf32>, vector<2x8x8xf32> -> vector<2x8x32xf32>
    %219 = vector.shape_cast %218 : vector<2x8x32xf32> to vector<16x32xf32>
    %c1_95 = arith.constant 1 : index
    %c0_96 = arith.constant 0 : index
    %c0_97 = arith.constant 0 : index
    %220 = vector.load %arg6[%c1_95, %c0_96, %c0_97] : memref<2x32x32xf32, #tpu.memory_space<vmem>>, vector<1x32x32xf32>
    %221 = vector.shape_cast %220 : vector<1x32x32xf32> to vector<32x32xf32>
    %c1_98 = arith.constant 1 : index
    %c0_99 = arith.constant 0 : index
    %c0_100 = arith.constant 0 : index
    %222 = vector.load %arg7[%c1_98, %c0_99, %c0_100] : memref<2x1x32xf32, #tpu.memory_space<vmem>>, vector<1x1x32xf32>
    %223 = vector.shape_cast %222 : vector<1x1x32xf32> to vector<1x32xf32>
    %cst_101 = arith.constant dense<0.000000e+00> : vector<16x32xf32>
    %224 = tpu.matmul %219, %221, %cst_101 {dimension_numbers = #tpu.dot_dimension_numbers<[1], [0], [0], [1], [0, 0, 1, 1], [], []>} : vector<16x32xf32>, vector<32x32xf32>, vector<16x32xf32> -> vector<16x32xf32>
    %225 = vector.broadcast %223 : vector<1x32xf32> to vector<16x32xf32>
    %226 = arith.addf %224, %225 : vector<16x32xf32>
    %227 = arith.addf %149, %226 : vector<16x32xf32>
    %c1_102 = arith.constant 1 : index
    %c0_103 = arith.constant 0 : index
    %c0_104 = arith.constant 0 : index
    %228 = vector.load %arg12[%c1_102, %c0_103, %c0_104] : memref<2x1x32xf32, #tpu.memory_space<vmem>>, vector<1x1x32xf32>
    %229 = vector.shape_cast %228 : vector<1x1x32xf32> to vector<1x32xf32>
    %c1_105 = arith.constant 1 : index
    %c0_106 = arith.constant 0 : index
    %c0_107 = arith.constant 0 : index
    %230 = vector.load %arg13[%c1_105, %c0_106, %c0_107] : memref<2x1x32xf32, #tpu.memory_space<vmem>>, vector<1x1x32xf32>
    %231 = vector.shape_cast %230 : vector<1x1x32xf32> to vector<1x32xf32>
    %cst_108 = arith.constant dense<0.000000e+00> : vector<16xf32>
    %232 = vector.multi_reduction <add>, %227, %cst_108 [1] : vector<16x32xf32> to vector<16xf32>
    %233 = vector.shape_cast %232 : vector<16xf32> to vector<16x1xf32>
    %cst_109 = arith.constant 3.200000e+01 : f32
    %234 = vector.broadcast %cst_109 : f32 to vector<16x1xf32>
    %235 = arith.divf %233, %234 : vector<16x1xf32>
    %236 = vector.broadcast %235 : vector<16x1xf32> to vector<16x32xf32>
    %237 = arith.subf %227, %236 : vector<16x32xf32>
    %238 = arith.mulf %237, %237 : vector<16x32xf32>
    %cst_110 = arith.constant dense<0.000000e+00> : vector<16xf32>
    %239 = vector.multi_reduction <add>, %238, %cst_110 [1] : vector<16x32xf32> to vector<16xf32>
    %240 = vector.shape_cast %239 : vector<16xf32> to vector<16x1xf32>
    %cst_111 = arith.constant 3.200000e+01 : f32
    %241 = vector.broadcast %cst_111 : f32 to vector<16x1xf32>
    %242 = arith.divf %240, %241 : vector<16x1xf32>
    %cst_112 = arith.constant 9.99999974E-6 : f32
    %243 = vector.broadcast %cst_112 : f32 to vector<16x1xf32>
    %244 = arith.addf %242, %243 : vector<16x1xf32>
    %245 = math.rsqrt %244 : vector<16x1xf32>
    %246 = vector.broadcast %245 : vector<16x1xf32> to vector<16x32xf32>
    %247 = arith.mulf %237, %246 : vector<16x32xf32>
    %248 = vector.broadcast %229 : vector<1x32xf32> to vector<16x32xf32>
    %249 = arith.mulf %247, %248 : vector<16x32xf32>
    %250 = vector.broadcast %231 : vector<1x32xf32> to vector<16x32xf32>
    %251 = arith.addf %249, %250 : vector<16x32xf32>
    %c1_113 = arith.constant 1 : index
    %c0_114 = arith.constant 0 : index
    %c0_115 = arith.constant 0 : index
    %252 = vector.load %arg8[%c1_113, %c0_114, %c0_115] : memref<2x32x128xf32, #tpu.memory_space<vmem>>, vector<1x32x128xf32>
    %253 = vector.shape_cast %252 : vector<1x32x128xf32> to vector<32x128xf32>
    %c1_116 = arith.constant 1 : index
    %c0_117 = arith.constant 0 : index
    %c0_118 = arith.constant 0 : index
    %254 = vector.load %arg9[%c1_116, %c0_117, %c0_118] : memref<2x1x128xf32, #tpu.memory_space<vmem>>, vector<1x1x128xf32>
    %255 = vector.shape_cast %254 : vector<1x1x128xf32> to vector<1x128xf32>
    %cst_119 = arith.constant dense<0.000000e+00> : vector<16x128xf32>
    %256 = tpu.matmul %251, %253, %cst_119 {dimension_numbers = #tpu.dot_dimension_numbers<[1], [0], [0], [1], [0, 0, 1, 1], [], []>} : vector<16x32xf32>, vector<32x128xf32>, vector<16x128xf32> -> vector<16x128xf32>
    %257 = vector.broadcast %255 : vector<1x128xf32> to vector<16x128xf32>
    %258 = arith.addf %256, %257 : vector<16x128xf32>
    %cst_120 = arith.constant 0.000000e+00 : f32
    %259 = vector.broadcast %cst_120 : f32 to vector<16x128xf32>
    %260 = arith.maximumf %258, %259 : vector<16x128xf32>
    %c1_121 = arith.constant 1 : index
    %c0_122 = arith.constant 0 : index
    %c0_123 = arith.constant 0 : index
    %261 = vector.load %arg10[%c1_121, %c0_122, %c0_123] : memref<2x128x32xf32, #tpu.memory_space<vmem>>, vector<1x128x32xf32>
    %262 = vector.shape_cast %261 : vector<1x128x32xf32> to vector<128x32xf32>
    %c1_124 = arith.constant 1 : index
    %c0_125 = arith.constant 0 : index
    %c0_126 = arith.constant 0 : index
    %263 = vector.load %arg11[%c1_124, %c0_125, %c0_126] : memref<2x1x32xf32, #tpu.memory_space<vmem>>, vector<1x1x32xf32>
    %264 = vector.shape_cast %263 : vector<1x1x32xf32> to vector<1x32xf32>
    %cst_127 = arith.constant dense<0.000000e+00> : vector<16x32xf32>
    %265 = tpu.matmul %260, %262, %cst_127 {dimension_numbers = #tpu.dot_dimension_numbers<[1], [0], [0], [1], [0, 0, 1, 1], [], []>} : vector<16x128xf32>, vector<128x32xf32>, vector<16x32xf32> -> vector<16x32xf32>
    %266 = vector.broadcast %264 : vector<1x32xf32> to vector<16x32xf32>
    %267 = arith.addf %265, %266 : vector<16x32xf32>
    %268 = arith.addf %251, %267 : vector<16x32xf32>
    %c1_128 = arith.constant 1 : index
    %c0_129 = arith.constant 0 : index
    %c0_130 = arith.constant 0 : index
    %269 = vector.load %arg14[%c1_128, %c0_129, %c0_130] : memref<2x1x32xf32, #tpu.memory_space<vmem>>, vector<1x1x32xf32>
    %270 = vector.shape_cast %269 : vector<1x1x32xf32> to vector<1x32xf32>
    %c1_131 = arith.constant 1 : index
    %c0_132 = arith.constant 0 : index
    %c0_133 = arith.constant 0 : index
    %271 = vector.load %arg15[%c1_131, %c0_132, %c0_133] : memref<2x1x32xf32, #tpu.memory_space<vmem>>, vector<1x1x32xf32>
    %272 = vector.shape_cast %271 : vector<1x1x32xf32> to vector<1x32xf32>
    %cst_134 = arith.constant dense<0.000000e+00> : vector<16xf32>
    %273 = vector.multi_reduction <add>, %268, %cst_134 [1] : vector<16x32xf32> to vector<16xf32>
    %274 = vector.shape_cast %273 : vector<16xf32> to vector<16x1xf32>
    %cst_135 = arith.constant 3.200000e+01 : f32
    %275 = vector.broadcast %cst_135 : f32 to vector<16x1xf32>
    %276 = arith.divf %274, %275 : vector<16x1xf32>
    %277 = vector.broadcast %276 : vector<16x1xf32> to vector<16x32xf32>
    %278 = arith.subf %268, %277 : vector<16x32xf32>
    %279 = arith.mulf %278, %278 : vector<16x32xf32>
    %cst_136 = arith.constant dense<0.000000e+00> : vector<16xf32>
    %280 = vector.multi_reduction <add>, %279, %cst_136 [1] : vector<16x32xf32> to vector<16xf32>
    %281 = vector.shape_cast %280 : vector<16xf32> to vector<16x1xf32>
    %cst_137 = arith.constant 3.200000e+01 : f32
    %282 = vector.broadcast %cst_137 : f32 to vector<16x1xf32>
    %283 = arith.divf %281, %282 : vector<16x1xf32>
    %cst_138 = arith.constant 9.99999974E-6 : f32
    %284 = vector.broadcast %cst_138 : f32 to vector<16x1xf32>
    %285 = arith.addf %283, %284 : vector<16x1xf32>
    %286 = math.rsqrt %285 : vector<16x1xf32>
    %287 = vector.broadcast %286 : vector<16x1xf32> to vector<16x32xf32>
    %288 = arith.mulf %278, %287 : vector<16x32xf32>
    %289 = vector.broadcast %270 : vector<1x32xf32> to vector<16x32xf32>
    %290 = arith.mulf %288, %289 : vector<16x32xf32>
    %291 = vector.broadcast %272 : vector<1x32xf32> to vector<16x32xf32>
    %292 = arith.addf %290, %291 : vector<16x32xf32>
    %293 = vector.shape_cast %292 : vector<16x32xf32> to vector<2x8x32xf32>
    %294 = vector.extract_strided_slice %293 {offsets = [0, 7, 0], sizes = [2, 1, 32], strides = [1, 1, 1]} : vector<2x8x32xf32> to vector<2x1x32xf32>
    %295 = vector.shape_cast %294 : vector<2x1x32xf32> to vector<2x32xf32>
    %c0_139 = arith.constant 0 : index
    %c0_140 = arith.constant 0 : index
    %296 = vector.load %arg16[%c0_139, %c0_140] : memref<32x4xf32, #tpu.memory_space<vmem>>, vector<32x4xf32>
    %c0_141 = arith.constant 0 : index
    %c0_142 = arith.constant 0 : index
    %297 = vector.load %arg17[%c0_141, %c0_142] : memref<1x4xf32, #tpu.memory_space<vmem>>, vector<1x4xf32>
    %cst_143 = arith.constant dense<0.000000e+00> : vector<2x4xf32>
    %298 = tpu.matmul %295, %296, %cst_143 {dimension_numbers = #tpu.dot_dimension_numbers<[1], [0], [0], [1], [0, 0, 1, 1], [], []>} : vector<2x32xf32>, vector<32x4xf32>, vector<2x4xf32> -> vector<2x4xf32>
    %299 = vector.broadcast %297 : vector<1x4xf32> to vector<2x4xf32>
    %300 = arith.addf %298, %299 : vector<2x4xf32>
    %c0_144 = arith.constant 0 : index
    %c0_145 = arith.constant 0 : index
    %301 = vector.load %arg18[%c0_144, %c0_145] : memref<2x4xf32, #tpu.memory_space<vmem>>, vector<2x4xf32>
    tpu.vector_store %arg18[%c0_144, %c0_145], %300 {strides = array<i32>} : memref<2x4xf32, #tpu.memory_space<vmem>>, vector<2x4xf32>,
    return
  }
  func.func @transform_0(%arg0: i32) -> (i32, i32, i32) {
    %c0_i32 = arith.constant 0 : i32
    %c0_i32_0 = arith.constant 0 : i32
    %c0_i32_1 = arith.constant 0 : i32
    %c0_i32_2 = arith.constant 0 : i32
    return %c0_i32, %c0_i32_0, %c0_i32_1 : i32, i32, i32
  }
  func.func @transform_1(%arg0: i32) -> (i32, i32) {
    %c0_i32 = arith.constant 0 : i32
    %c0_i32_0 = arith.constant 0 : i32
    %c0_i32_1 = arith.constant 0 : i32
    return %c0_i32, %c0_i32_0 : i32, i32
  }
  func.func @transform_2(%arg0: i32) -> (i32, i32) {
    %c0_i32 = arith.constant 0 : i32
    %c0_i32_0 = arith.constant 0 : i32
    %c0_i32_1 = arith.constant 0 : i32
    return %c0_i32, %c0_i32_0 : i32, i32
  }
  func.func @transform_3(%arg0: i32) -> (i32, i32, i32) {
    %c0_i32 = arith.constant 0 : i32
    %c0_i32_0 = arith.constant 0 : i32
    %c0_i32_1 = arith.constant 0 : i32
    %c0_i32_2 = arith.constant 0 : i32
    return %c0_i32, %c0_i32_0, %c0_i32_1 : i32, i32, i32
  }
  func.func @transform_4(%arg0: i32) -> (i32, i32, i32) {
    %c0_i32 = arith.constant 0 : i32
    %c0_i32_0 = arith.constant 0 : i32
    %c0_i32_1 = arith.constant 0 : i32
    %c0_i32_2 = arith.constant 0 : i32
    return %c0_i32, %c0_i32_0, %c0_i32_1 : i32, i32, i32
  }
  func.func @transform_5(%arg0: i32) -> (i32, i32, i32) {
    %c0_i32 = arith.constant 0 : i32
    %c0_i32_0 = arith.constant 0 : i32
    %c0_i32_1 = arith.constant 0 : i32
    %c0_i32_2 = arith.constant 0 : i32
    return %c0_i32, %c0_i32_0, %c0_i32_1 : i32, i32, i32
  }
  func.func @transform_6(%arg0: i32) -> (i32, i32, i32) {
    %c0_i32 = arith.constant 0 : i32
    %c0_i32_0 = arith.constant 0 : i32
    %c0_i32_1 = arith.constant 0 : i32
    %c0_i32_2 = arith.constant 0 : i32
    return %c0_i32, %c0_i32_0, %c0_i32_1 : i32, i32, i32
  }
  func.func @transform_7(%arg0: i32) -> (i32, i32, i32) {
    %c0_i32 = arith.constant 0 : i32
    %c0_i32_0 = arith.constant 0 : i32
    %c0_i32_1 = arith.constant 0 : i32
    %c0_i32_2 = arith.constant 0 : i32
    return %c0_i32, %c0_i32_0, %c0_i32_1 : i32, i32, i32
  }
  func.func @transform_8(%arg0: i32) -> (i32, i32, i32) {
    %c0_i32 = arith.constant 0 : i32
    %c0_i32_0 = arith.constant 0 : i32
    %c0_i32_1 = arith.constant 0 : i32
    %c0_i32_2 = arith.constant 0 : i32
    return %c0_i32, %c0_i32_0, %c0_i32_1 : i32, i32, i32
  }
  func.func @transform_9(%arg0: i32) -> (i32, i32, i32) {
    %c0_i32 = arith.constant 0 : i32
    %c0_i32_0 = arith.constant 0 : i32
    %c0_i32_1 = arith.constant 0 : i32
    %c0_i32_2 = arith.constant 0 : i32
    return %c0_i32, %c0_i32_0, %c0_i32_1 : i32, i32, i32
  }
  func.func @transform_10(%arg0: i32) -> (i32, i32, i32) {
    %c0_i32 = arith.constant 0 : i32
    %c0_i32_0 = arith.constant 0 : i32
    %c0_i32_1 = arith.constant 0 : i32
    %c0_i32_2 = arith.constant 0 : i32
    return %c0_i32, %c0_i32_0, %c0_i32_1 : i32, i32, i32
  }
  func.func @transform_11(%arg0: i32) -> (i32, i32, i32) {
    %c0_i32 = arith.constant 0 : i32
    %c0_i32_0 = arith.constant 0 : i32
    %c0_i32_1 = arith.constant 0 : i32
    %c0_i32_2 = arith.constant 0 : i32
    return %c0_i32, %c0_i32_0, %c0_i32_1 : i32, i32, i32
  }
  func.func @transform_12(%arg0: i32) -> (i32, i32, i32) {
    %c0_i32 = arith.constant 0 : i32
    %c0_i32_0 = arith.constant 0 : i32
    %c0_i32_1 = arith.constant 0 : i32
    %c0_i32_2 = arith.constant 0 : i32
    return %c0_i32, %c0_i32_0, %c0_i32_1 : i32, i32, i32
  }
  func.func @transform_13(%arg0: i32) -> (i32, i32, i32) {
    %c0_i32 = arith.constant 0 : i32
    %c0_i32_0 = arith.constant 0 : i32
    %c0_i32_1 = arith.constant 0 : i32
    %c0_i32_2 = arith.constant 0 : i32
    return %c0_i32, %c0_i32_0, %c0_i32_1 : i32, i32, i32
  }
  func.func @transform_14(%arg0: i32) -> (i32, i32, i32) {
    %c0_i32 = arith.constant 0 : i32
    %c0_i32_0 = arith.constant 0 : i32
    %c0_i32_1 = arith.constant 0 : i32
    %c0_i32_2 = arith.constant 0 : i32
    return %c0_i32, %c0_i32_0, %c0_i32_1 : i32, i32, i32
  }
  func.func @transform_15(%arg0: i32) -> (i32, i32) {
    %c0_i32 = arith.constant 0 : i32
    %c0_i32_0 = arith.constant 0 : i32
    %c0_i32_1 = arith.constant 0 : i32
    return %c0_i32, %c0_i32_0 : i32, i32
  }
  func.func @transform_16(%arg0: i32) -> (i32, i32) {
    %c0_i32 = arith.constant 0 : i32
    %c0_i32_0 = arith.constant 0 : i32
    %c0_i32_1 = arith.constant 0 : i32
    return %c0_i32, %c0_i32_0 : i32, i32
  }
  func.func @transform_17(%arg0: i32) -> (i32, i32) {
    %c0_i32 = arith.constant 0 : i32
    %c0_i32_0 = arith.constant 0 : i32
    %c0_i32_1 = arith.constant 0 : i32
    return %c0_i32, %c0_i32_0 : i32, i32
  }
}

</mosaic_0001>

<llo_original>
// kernel: aws_cost_transformer.1
$region0: #{aws_cost_transformer.1}
  #allocation0 [shape = 'u32[]', space=smem, size = 0x4, offset = 0x4, fixed_abs, tag = 'smem constant byte address 0x4 - core index']
  #allocation1 [shape = 'u32[144,128]{1,0:T(1,128)}', space=vmem, size = 0x12000, scoped, tag = 'internal scratch']
  %s0 = inlined_call_operand.vmem [shape: f32[2,8,8], index: 0, kind: input, shape index: {}]
  %s1 = inlined_call_operand.vmem [shape: f32[8,32], index: 1, kind: input, shape index: {}]
  %s2 = inlined_call_operand.vmem [shape: f32[1,32], index: 2, kind: input, shape index: {}]
  %s3 = inlined_call_operand.vmem [shape: f32[2,32,96], index: 3, kind: input, shape index: {}]
  %s4 = inlined_call_operand.vmem [shape: f32[2,1,96], index: 4, kind: input, shape index: {}]
  %s5 = inlined_call_operand.vmem [shape: f32[2,32,32], index: 5, kind: input, shape index: {}]
  %s6 = inlined_call_operand.vmem [shape: f32[2,1,32], index: 6, kind: input, shape index: {}]
  %s7 = inlined_call_operand.vmem [shape: f32[2,32,128], index: 7, kind: input, shape index: {}]
  %s8 = inlined_call_operand.vmem [shape: f32[2,1,128], index: 8, kind: input, shape index: {}]
  %s9 = inlined_call_operand.vmem [shape: f32[2,128,32], index: 9, kind: input, shape index: {}]
  %s10 = inlined_call_operand.vmem [shape: f32[2,1,32], index: 10, kind: input, shape index: {}]
  %s11 = inlined_call_operand.vmem [shape: f32[2,1,32], index: 11, kind: input, shape index: {}]
  %s12 = inlined_call_operand.vmem [shape: f32[2,1,32], index: 12, kind: input, shape index: {}]
  %s13 = inlined_call_operand.vmem [shape: f32[2,1,32], index: 13, kind: input, shape index: {}]
  %s14 = inlined_call_operand.vmem [shape: f32[2,1,32], index: 14, kind: input, shape index: {}]
  %s15 = inlined_call_operand.vmem [shape: f32[32,4], index: 15, kind: input, shape index: {}]
  %s16 = inlined_call_operand.vmem [shape: f32[1,4], index: 16, kind: input, shape index: {}]
  %s17 = inlined_call_operand.hbm [shape: f32[2,4], index: 17, kind: output, shape index: {}]
  %s18 = sld [smem:[#allocation0]]
  $region78: #{aws_cost_transformer.1} parent=0
    _
  %s20 = ssub.s32 1, %s18
  %s21 = scalar_select 0, %s20, %s18
  $region1: #{aws_cost_transformer.1} parent=0
    #allocation2 [shape = 'u8[1024]{0}', space=vmem, size = 0x400, scoped, tag = 'output window, operand 0, single buffered']
    #allocation3 [shape = 's32[1]{0}', space=sflag, size = 0x4, scoped, tag = 'scoped memory for aws_cost_transformer.1']
    %22 = vsyncpa [#allocation3], 0
    // Predicated region
    $region2: #{aws_cost_transformer.1} parent=1 // pred_check
      _
    $region3: #{aws_cost_transformer.1} parent=1 // pred_check_branch
      %24 = sbr.rel (0) target = $region5
    $region4: #{aws_cost_transformer.1} parent=1 // pred_region
      _
    $region5: #{aws_cost_transformer.1} parent=1 // pred_fallthru
      _
    // Predicated region
    $region6: #{aws_cost_transformer.1} parent=1 // pred_check
      _
    $region7: #{aws_cost_transformer.1} parent=1 // pred_check_branch
      %26 = sbr.rel (0) target = $region9
    $region8: #{aws_cost_transformer.1} parent=1 // pred_region
      _
    $region9: #{aws_cost_transformer.1} parent=1 // pred_fallthru
      _
    // Predicated region
    $region10: #{aws_cost_transformer.1} parent=1 // pred_check
      _
    $region11: #{aws_cost_transformer.1} parent=1 // pred_check_branch
      %28 = sbr.rel (0) target = $region13
    $region12: #{aws_cost_transformer.1} parent=1 // pred_region
      _
    $region13: #{aws_cost_transformer.1} parent=1 // pred_fallthru
      _
    // Predicated region
    $region14: #{aws_cost_transformer.1} parent=1 // pred_check
      _
    $region15: #{aws_cost_transformer.1} parent=1 // pred_check_branch
      %30 = sbr.rel (0) target = $region17
    $region16: #{aws_cost_transformer.1} parent=1 // pred_region
      _
    $region17: #{aws_cost_transformer.1} parent=1 // pred_fallthru
      _
    // Predicated region
    $region18: #{aws_cost_transformer.1} parent=1 // pred_check
      _
    $region19: #{aws_cost_transformer.1} parent=1 // pred_check_branch
      %32 = sbr.rel (0) target = $region21
    $region20: #{aws_cost_transformer.1} parent=1 // pred_region
      _
    $region21: #{aws_cost_transformer.1} parent=1 // pred_fallthru
      _
    // Predicated region
    $region22: #{aws_cost_transformer.1} parent=1 // pred_check
      _
    $region23: #{aws_cost_transformer.1} parent=1 // pred_check_branch
      %34 = sbr.rel (0) target = $region25
    $region24: #{aws_cost_transformer.1} parent=1 // pred_region
      _
    $region25: #{aws_cost_transformer.1} parent=1 // pred_fallthru
      _
    // Predicated region
    $region26: #{aws_cost_transformer.1} parent=1 // pred_check
      _
    $region27: #{aws_cost_transformer.1} parent=1 // pred_check_branch
      %36 = sbr.rel (0) target = $region29
    $region28: #{aws_cost_transformer.1} parent=1 // pred_region
      _
    $region29: #{aws_cost_transformer.1} parent=1 // pred_fallthru
      _
    // Predicated region
    $region30: #{aws_cost_transformer.1} parent=1 // pred_check
      _
    $region31: #{aws_cost_transformer.1} parent=1 // pred_check_branch
      %38 = sbr.rel (0) target = $region33
    $region32: #{aws_cost_transformer.1} parent=1 // pred_region
      _
    $region33: #{aws_cost_transformer.1} parent=1 // pred_fallthru
      _
    // Predicated region
    $region34: #{aws_cost_transformer.1} parent=1 // pred_check
      _
    $region35: #{aws_cost_transformer.1} parent=1 // pred_check_branch
      %40 = sbr.rel (0) target = $region37
    $region36: #{aws_cost_transformer.1} parent=1 // pred_region
      _
    $region37: #{aws_cost_transformer.1} parent=1 // pred_fallthru
      _
    // Predicated region
    $region38: #{aws_cost_transformer.1} parent=1 // pred_check
      _
    $region39: #{aws_cost_transformer.1} parent=1 // pred_check_branch
      %42 = sbr.rel (0) target = $region41
    $region40: #{aws_cost_transformer.1} parent=1 // pred_region
      _
    $region41: #{aws_cost_transformer.1} parent=1 // pred_fallthru
      _
    // Predicated region
    $region42: #{aws_cost_transformer.1} parent=1 // pred_check
      _
    $region43: #{aws_cost_transformer.1} parent=1 // pred_check_branch
      %44 = sbr.rel (0) target = $region45
    $region44: #{aws_cost_transformer.1} parent=1 // pred_region
      _
    $region45: #{aws_cost_transformer.1} parent=1 // pred_fallthru
      _
    // Predicated region
    $region46: #{aws_cost_transformer.1} parent=1 // pred_check
      _
    $region47: #{aws_cost_transformer.1} parent=1 // pred_check_branch
      %46 = sbr.rel (0) target = $region49
    $region48: #{aws_cost_transformer.1} parent=1 // pred_region
      _
    $region49: #{aws_cost_transformer.1} parent=1 // pred_fallthru
      _
    // Predicated region
    $region50: #{aws_cost_transformer.1} parent=1 // pred_check
      _
    $region51: #{aws_cost_transformer.1} parent=1 // pred_check_branch
      %48 = sbr.rel (0) target = $region53
    $region52: #{aws_cost_transformer.1} parent=1 // pred_region
      _
    $region53: #{aws_cost_transformer.1} parent=1 // pred_fallthru
      _
    // Predicated region
    $region54: #{aws_cost_transformer.1} parent=1 // pred_check
      _
    $region55: #{aws_cost_transformer.1} parent=1 // pred_check_branch
      %50 = sbr.rel (0) target = $region57
    $region56: #{aws_cost_transformer.1} parent=1 // pred_region
      _
    $region57: #{aws_cost_transformer.1} parent=1 // pred_fallthru
      _
    // Predicated region
    $region58: #{aws_cost_transformer.1} parent=1 // pred_check
      _
    $region59: #{aws_cost_transformer.1} parent=1 // pred_check_branch
      %52 = sbr.rel (0) target = $region61
    $region60: #{aws_cost_transformer.1} parent=1 // pred_region
      _
    $region61: #{aws_cost_transformer.1} parent=1 // pred_fallthru
      _
    // Predicated region
    $region62: #{aws_cost_transformer.1} parent=1 // pred_check
      _
    $region63: #{aws_cost_transformer.1} parent=1 // pred_check_branch
      %54 = sbr.rel (0) target = $region65
    $region64: #{aws_cost_transformer.1} parent=1 // pred_region
      _
    $region65: #{aws_cost_transformer.1} parent=1 // pred_fallthru
      _
    // Predicated region
    $region66: #{aws_cost_transformer.1} parent=1 // pred_check
      _
    $region67: #{aws_cost_transformer.1} parent=1 // pred_check_branch
      %56 = sbr.rel (0) target = $region69
    $region68: #{aws_cost_transformer.1} parent=1 // pred_region
      _
    $region69: #{aws_cost_transformer.1} parent=1 // pred_fallthru
      _
    %v57 = vld [vmem:[%s0] sm:$0xff]
    %v58 = vld [vmem:[%s0 + $0x8] sm:$0xff]
    %v59 = vld [vmem:[%s1] sm:$0xff]
    %v60 = vld [vmem:[%s2] sm:$0x1]
    %v62 = vlaneseq
    %v63 = vshrl.u32 %v62, 7
    %v64 = vsub.s32 0, %v63
    %v65 = vrot.slane %v60, %v64
    %vm67 = vcmask 64512
    %v69 = vsel %vm67, %v57, 0
    %v72 = vsel %vm67, %v58, 0
    %74 = vmatprep.subr.mxu0 0.0
    %75 = vmatpush1.msra.mxu0 %v59
    %76 = vmatprep.subr.mxu0 0.0
    %77 = vmatpush1.msra.mxu0 0.0
    %78 = vmatprep.subr.mxu0 0.0
    %79 = vmatpush1.msra.mxu0 0.0
    %80 = vmatprep.subr.mxu0 0.0
    %81 = vmatpush1.msra.mxu0 0.0
    %82 = vmatprep.subr.mxu0 0.0
    %83 = vmatpush1.msra.mxu0 0.0
    %84 = vmatprep.subr.mxu0 0.0
    %85 = vmatpush1.msra.mxu0 0.0
    %86 = vmatprep.subr.mxu0 0.0
    %87 = vmatpush1.msra.mxu0 0.0
    %88 = vmatprep.subr.mxu0 0.0
    %89 = vmatpush1.msra.mxu0 0.0
    %90 = vmatprep.subr.mxu0 0.0
    %91 = vmatpush1.msra.mxu0 0.0
    %92 = vmatprep.subr.mxu0 0.0
    %93 = vmatpush1.msra.mxu0 0.0
    %94 = vmatprep.subr.mxu0 0.0
    %95 = vmatpush1.msra.mxu0 0.0
    %96 = vmatprep.subr.mxu0 0.0
    %97 = vmatpush1.msra.mxu0 0.0
    %98 = vmatprep.subr.mxu0 0.0
    %99 = vmatpush1.msra.mxu0 0.0
    %100 = vmatprep.subr.mxu0 0.0
    %101 = vmatpush1.msra.mxu0 0.0
    %102 = vmatprep.subr.mxu0 0.0
    %103 = vmatpush1.msra.mxu0 0.0
    %104 = vmatprep.subr.mxu0 0.0
    %105 = vmatpush1.msra.mxu0 0.0
    %106 = vmatprep.subr.mxu0 0.0
    %107 = vmatpush1.msra.mxu0 0.0
    %108 = vmatprep.subr.mxu0 0.0
    %109 = vmatpush1.msra.mxu0 0.0
    %110 = vmatprep.subr.mxu0 0.0
    %111 = vmatpush1.msra.mxu0 0.0
    %112 = vmatprep.subr.mxu0 0.0
    %113 = vmatpush1.msra.mxu0 0.0
    %114 = vmatprep.subr.mxu0 0.0
    %115 = vmatpush1.msra.mxu0 0.0
    %116 = vmatprep.subr.mxu0 0.0
    %117 = vmatpush1.msra.mxu0 0.0
    %118 = vmatprep.subr.mxu0 0.0
    %119 = vmatpush1.msra.mxu0 0.0
    %120 = vmatprep.subr.mxu0 0.0
    %121 = vmatpush1.msra.mxu0 0.0
    %122 = vmatprep.subr.mxu0 0.0
    %123 = vmatpush1.msra.mxu0 0.0
    %124 = vmatprep.subr.mxu0 0.0
    %125 = vmatpush1.msra.mxu0 0.0
    %126 = vmatprep.subr.mxu0 0.0
    %127 = vmatpush1.msra.mxu0 0.0
    %128 = vmatprep.subr.mxu0 0.0
    %129 = vmatpush1.msra.mxu0 0.0
    %130 = vmatprep.subr.mxu0 0.0
    %131 = vmatpush1.msra.mxu0 0.0
    %132 = vmatprep.subr.mxu0 0.0
    %133 = vmatpush1.msra.mxu0 0.0
    %134 = vmatprep.subr.mxu0 0.0
    %135 = vmatpush1.msra.mxu0 0.0
    %136 = vmatprep.subr.mxu0 0.0
    %137 = vmatpush1.msra.mxu0 0.0
    %138 = vmatprep.mubr.f32.mxu0 0.0
    %139 = vmatmul.mubr.f32.gmra.mrb[0].mxu0 %v69
    %v140 = vpop.f32.mrb[0].mxu0
    %v141 = vadd.f32 %v65, %v140
    %v142 = vpop.f32.mrb[0].mxu0
    %143 = vmatprep.mubr.f32.mxu0 0.0
    %144 = vmatmul.mubr.f32.gmra.mrb[0].mxu0 %v72
    %v145 = vpop.f32.mrb[0].mxu0
    %v146 = vadd.f32 %v65, %v145
    %v147 = vpop.f32.mrb[0].mxu0
    %148 = vdwg.mxu0
    %v149 = vld [vmem:[%s3] sm:$0xff]
    %v150 = vld [vmem:[%s3 + $0x8] sm:$0xff]
    %v151 = vld [vmem:[%s3 + $0x10] sm:$0xff]
    %v152 = vld [vmem:[%s3 + $0x18] sm:$0xff]
    %v153 = vld [vmem:[%s4] sm:$0x1]
    %v155 = vlaneseq
    %v156 = vshrl.u32 %v155, 7
    %v157 = vsub.s32 0, %v156
    %v158 = vrot.slane %v153, %v157
    %vm160 = vcmask 261120
    %v162 = vsel %vm160, %v141, 0
    %v165 = vsel %vm160, %v146, 0
    %167 = vmatprep.subr.mxu0 0.0
    %168 = vmatpush1.msra.mxu0 %v149
    %169 = vmatprep.subr.mxu0 0.0
    %170 = vmatpush1.msra.mxu0 %v150
    %171 = vmatprep.subr.mxu0 0.0
    %172 = vmatpush1.msra.mxu0 %v151
    %173 = vmatprep.subr.mxu0 0.0
    %174 = vmatpush1.msra.mxu0 %v152
    %175 = vmatprep.subr.mxu0 0.0
    %176 = vmatpush1.msra.mxu0 0.0
    %177 = vmatprep.subr.mxu0 0.0
    %178 = vmatpush1.msra.mxu0 0.0
    %179 = vmatprep.subr.mxu0 0.0
    %180 = vmatpush1.msra.mxu0 0.0
    %181 = vmatprep.subr.mxu0 0.0
    %182 = vmatpush1.msra.mxu0 0.0
    %183 = vmatprep.subr.mxu0 0.0
    %184 = vmatpush1.msra.mxu0 0.0
    %185 = vmatprep.subr.mxu0 0.0
    %186 = vmatpush1.msra.mxu0 0.0
    %187 = vmatprep.subr.mxu0 0.0
    %188 = vmatpush1.msra.mxu0 0.0
    %189 = vmatprep.subr.mxu0 0.0
    %190 = vmatpush1.msra.mxu0 0.0
    %191 = vmatprep.subr.mxu0 0.0
    %192 = vmatpush1.msra.mxu0 0.0
    %193 = vmatprep.subr.mxu0 0.0
    %194 = vmatpush1.msra.mxu0 0.0
    %195 = vmatprep.subr.mxu0 0.0
    %196 = vmatpush1.msra.mxu0 0.0
    %197 = vmatprep.subr.mxu0 0.0
    %198 = vmatpush1.msra.mxu0 0.0
    %199 = vmatprep.subr.mxu0 0.0
    %200 = vmatpush1.msra.mxu0 0.0
    %201 = vmatprep.subr.mxu0 0.0
    %202 = vmatpush1.msra.mxu0 0.0
    %203 = vmatprep.subr.mxu0 0.0
    %204 = vmatpush1.msra.mxu0 0.0
    %205 = vmatprep.subr.mxu0 0.0
    %206 = vmatpush1.msra.mxu0 0.0
    %207 = vmatprep.subr.mxu0 0.0
    %208 = vmatpush1.msra.mxu0 0.0
    %209 = vmatprep.subr.mxu0 0.0
    %210 = vmatpush1.msra.mxu0 0.0
    %211 = vmatprep.subr.mxu0 0.0
    %212 = vmatpush1.msra.mxu0 0.0
    %213 = vmatprep.subr.mxu0 0.0
    %214 = vmatpush1.msra.mxu0 0.0
    %215 = vmatprep.subr.mxu0 0.0
    %216 = vmatpush1.msra.mxu0 0.0
    %217 = vmatprep.subr.mxu0 0.0
    %218 = vmatpush1.msra.mxu0 0.0
    %219 = vmatprep.subr.mxu0 0.0
    %220 = vmatpush1.msra.mxu0 0.0
    %221 = vmatprep.subr.mxu0 0.0
    %222 = vmatpush1.msra.mxu0 0.0
    %223 = vmatprep.subr.mxu0 0.0
    %224 = vmatpush1.msra.mxu0 0.0
    %225 = vmatprep.subr.mxu0 0.0
    %226 = vmatpush1.msra.mxu0 0.0
    %227 = vmatprep.subr.mxu0 0.0
    %228 = vmatpush1.msra.mxu0 0.0
    %229 = vmatprep.subr.mxu0 0.0
    %230 = vmatpush1.msra.mxu0 0.0
    %231 = vmatprep.mubr.f32.mxu0 0.0
    %232 = vmatmul.mubr.f32.gmra.mrb[0].mxu0 %v162
    %v233 = vpop.f32.mrb[0].mxu0
    %v234 = vadd.f32 %v158, %v233
    %v235 = vpop.f32.mrb[0].mxu0
    %236 = vmatprep.mubr.f32.mxu0 0.0
    %237 = vmatmul.mubr.f32.gmra.mrb[0].mxu0 %v165
    %v238 = vpop.f32.mrb[0].mxu0
    %v239 = vadd.f32 %v158, %v238
    %v240 = vpop.f32.mrb[0].mxu0
    %241 = vdwg.mxu0
    %243 = vrot.lane.b32.xlu0 %v234, 96
    %v244 = vpop.permute.xlu0 %243
    %v245 = vsel %vm67, %v234, 0
    %v247 = vsel %vm67, %v244, 0
    %249 = vmatprep.subr.mxu0 0.0
    %250 = vmatpush1.xpose.msra.mxu0 %v247
    %251 = vmatprep.subr.mxu0 0.0
    %252 = vmatpush1.xpose.msra.mxu0 0.0
    %253 = vmatprep.subr.mxu0 0.0
    %254 = vmatpush1.xpose.msra.mxu0 0.0
    %255 = vmatprep.subr.mxu0 0.0
    %256 = vmatpush1.xpose.msra.mxu0 0.0
    %257 = vmatprep.subr.mxu0 0.0
    %258 = vmatpush1.xpose.msra.mxu0 0.0
    %259 = vmatprep.subr.mxu0 0.0
    %260 = vmatpush1.xpose.msra.mxu0 0.0
    %261 = vmatprep.subr.mxu0 0.0
    %262 = vmatpush1.xpose.msra.mxu0 0.0
    %263 = vmatprep.subr.mxu0 0.0
    %264 = vmatpush1.xpose.msra.mxu0 0.0
    %265 = vmatprep.subr.mxu0 0.0
    %266 = vmatpush1.xpose.msra.mxu0 0.0
    %267 = vmatprep.subr.mxu0 0.0
    %268 = vmatpush1.xpose.msra.mxu0 0.0
    %269 = vmatprep.subr.mxu0 0.0
    %270 = vmatpush1.xpose.msra.mxu0 0.0
    %271 = vmatprep.subr.mxu0 0.0
    %272 = vmatpush1.xpose.msra.mxu0 0.0
    %273 = vmatprep.subr.mxu0 0.0
    %274 = vmatpush1.xpose.msra.mxu0 0.0
    %275 = vmatprep.subr.mxu0 0.0
    %276 = vmatpush1.xpose.msra.mxu0 0.0
    %277 = vmatprep.subr.mxu0 0.0
    %278 = vmatpush1.xpose.msra.mxu0 0.0
    %279 = vmatprep.subr.mxu0 0.0
    %280 = vmatpush1.xpose.msra.mxu0 0.0
    %281 = vmatprep.subr.mxu0 0.0
    %282 = vmatpush1.xpose.msra.mxu0 0.0
    %283 = vmatprep.subr.mxu0 0.0
    %284 = vmatpush1.xpose.msra.mxu0 0.0
    %285 = vmatprep.subr.mxu0 0.0
    %286 = vmatpush1.xpose.msra.mxu0 0.0
    %287 = vmatprep.subr.mxu0 0.0
    %288 = vmatpush1.xpose.msra.mxu0 0.0
    %289 = vmatprep.subr.mxu0 0.0
    %290 = vmatpush1.xpose.msra.mxu0 0.0
    %291 = vmatprep.subr.mxu0 0.0
    %292 = vmatpush1.xpose.msra.mxu0 0.0
    %293 = vmatprep.subr.mxu0 0.0
    %294 = vmatpush1.xpose.msra.mxu0 0.0
    %295 = vmatprep.subr.mxu0 0.0
    %296 = vmatpush1.xpose.msra.mxu0 0.0
    %297 = vmatprep.subr.mxu0 0.0
    %298 = vmatpush1.xpose.msra.mxu0 0.0
    %299 = vmatprep.subr.mxu0 0.0
    %300 = vmatpush1.xpose.msra.mxu0 0.0
    %301 = vmatprep.subr.mxu0 0.0
    %302 = vmatpush1.xpose.msra.mxu0 0.0
    %303 = vmatprep.subr.mxu0 0.0
    %304 = vmatpush1.xpose.msra.mxu0 0.0
    %305 = vmatprep.subr.mxu0 0.0
    %306 = vmatpush1.xpose.msra.mxu0 0.0
    %307 = vmatprep.subr.mxu0 0.0
    %308 = vmatpush1.xpose.msra.mxu0 0.0
    %309 = vmatprep.subr.mxu0 0.0
    %310 = vmatpush1.xpose.msra.mxu0 0.0
    %311 = vmatprep.subr.mxu0 0.0
    %312 = vmatpush1.xpose.msra.mxu0 0.0
    %313 = vmatprep.mubr.f32.mxu0 0.0
    %314 = vmatmul.mubr.f32.gmra.mrb[0].mxu0 %v245
    %v315 = vpop.f32.mrb[0].mxu0
    %v316 = vadd.f32 0.0, %v315
    %v317 = vpop.f32.mrb[0].mxu0
    %318 = vdwg.mxu0
    %320 = vrot.lane.b32.xlu0 %v239, 96
    %v321 = vpop.permute.xlu0 %320
    %v322 = vsel %vm67, %v239, 0
    %v324 = vsel %vm67, %v321, 0
    %326 = vmatprep.subr.mxu0 0.0
    %327 = vmatpush1.xpose.msra.mxu0 %v324
    %328 = vmatprep.subr.mxu0 0.0
    %329 = vmatpush1.xpose.msra.mxu0 0.0
    %330 = vmatprep.subr.mxu0 0.0
    %331 = vmatpush1.xpose.msra.mxu0 0.0
    %332 = vmatprep.subr.mxu0 0.0
    %333 = vmatpush1.xpose.msra.mxu0 0.0
    %334 = vmatprep.subr.mxu0 0.0
    %335 = vmatpush1.xpose.msra.mxu0 0.0
    %336 = vmatprep.subr.mxu0 0.0
    %337 = vmatpush1.xpose.msra.mxu0 0.0
    %338 = vmatprep.subr.mxu0 0.0
    %339 = vmatpush1.xpose.msra.mxu0 0.0
    %340 = vmatprep.subr.mxu0 0.0
    %341 = vmatpush1.xpose.msra.mxu0 0.0
    %342 = vmatprep.subr.mxu0 0.0
    %343 = vmatpush1.xpose.msra.mxu0 0.0
    %344 = vmatprep.subr.mxu0 0.0
    %345 = vmatpush1.xpose.msra.mxu0 0.0
    %346 = vmatprep.subr.mxu0 0.0
    %347 = vmatpush1.xpose.msra.mxu0 0.0
    %348 = vmatprep.subr.mxu0 0.0
    %349 = vmatpush1.xpose.msra.mxu0 0.0
    %350 = vmatprep.subr.mxu0 0.0
    %351 = vmatpush1.xpose.msra.mxu0 0.0
    %352 = vmatprep.subr.mxu0 0.0
    %353 = vmatpush1.xpose.msra.mxu0 0.0
    %354 = vmatprep.subr.mxu0 0.0
    %355 = vmatpush1.xpose.msra.mxu0 0.0
    %356 = vmatprep.subr.mxu0 0.0
    %357 = vmatpush1.xpose.msra.mxu0 0.0
    %358 = vmatprep.subr.mxu0 0.0
    %359 = vmatpush1.xpose.msra.mxu0 0.0
    %360 = vmatprep.subr.mxu0 0.0
    %361 = vmatpush1.xpose.msra.mxu0 0.0
    %362 = vmatprep.subr.mxu0 0.0
    %363 = vmatpush1.xpose.msra.mxu0 0.0
    %364 = vmatprep.subr.mxu0 0.0
    %365 = vmatpush1.xpose.msra.mxu0 0.0
    %366 = vmatprep.subr.mxu0 0.0
    %367 = vmatpush1.xpose.msra.mxu0 0.0
    %368 = vmatprep.subr.mxu0 0.0
    %369 = vmatpush1.xpose.msra.mxu0 0.0
    %370 = vmatprep.subr.mxu0 0.0
    %371 = vmatpush1.xpose.msra.mxu0 0.0
    %372 = vmatprep.subr.mxu0 0.0
    %373 = vmatpush1.xpose.msra.mxu0 0.0
    %374 = vmatprep.subr.mxu0 0.0
    %375 = vmatpush1.xpose.msra.mxu0 0.0
    %376 = vmatprep.subr.mxu0 0.0
    %377 = vmatpush1.xpose.msra.mxu0 0.0
    %378 = vmatprep.subr.mxu0 0.0
    %379 = vmatpush1.xpose.msra.mxu0 0.0
    %380 = vmatprep.subr.mxu0 0.0
    %381 = vmatpush1.xpose.msra.mxu0 0.0
    %382 = vmatprep.subr.mxu0 0.0
    %383 = vmatpush1.xpose.msra.mxu0 0.0
    %384 = vmatprep.subr.mxu0 0.0
    %385 = vmatpush1.xpose.msra.mxu0 0.0
    %386 = vmatprep.subr.mxu0 0.0
    %387 = vmatpush1.xpose.msra.mxu0 0.0
    %388 = vmatprep.subr.mxu0 0.0
    %389 = vmatpush1.xpose.msra.mxu0 0.0
    %390 = vmatprep.mubr.f32.mxu0 0.0
    %391 = vmatmul.mubr.f32.gmra.mrb[0].mxu0 %v322
    %v392 = vpop.f32.mrb[0].mxu0
    %v393 = vadd.f32 0.0, %v392
    %v394 = vpop.f32.mrb[0].mxu0
    %395 = vdwg.mxu0
    %v396 = vsel %vm67, %v316, -inf
    %397 = vmax.xlane.f32.xlu0 %v396
    %v398 = vpop.xlane.xlu0 %397
    %v399 = vsel %vm67, %v393, -inf
    %400 = vmax.xlane.f32.xlu0 %v399
    %v401 = vpop.xlane.xlu0 %400
    %v402 = vsub.f32 %v316, %v398
    %v403 = vsub.f32 %v393, %v401
    %v404 = vmul.f32 %v402, 1.442695
    %v405 = vpow.pop %v404
    %v406 = vmul.f32 %v403, 1.442695
    %v407 = vpow.pop %v406
    %v408 = vsel %vm67, %v405, 0.0
    %409 = vadd.xlane.f32.xlu0 %v408
    %v410 = vpop.xlane.xlu0 %409
    %v411 = vsel %vm67, %v407, 0.0
    %412 = vadd.xlane.f32.xlu0 %v411
    %v413 = vpop.xlane.xlu0 %412
    %v414 = vrcp.pop %v410
    %v415 = vrcp.pop %v413
    %v416 = vmul.f32 %v405, %v414
    %v417 = vmul.f32 %v407, %v415
    %418 = vrot.lane.b32.xlu0 %v234, 64
    %v419 = vpop.permute.xlu0 %418
    %v422 = vsel %vm67, %v416, 0
    %424 = vmatprep.subr.mxu0 0.0
    %425 = vmatpush1.msra.mxu0 %v419
    %426 = vmatprep.subr.mxu0 0.0
    %427 = vmatpush1.msra.mxu0 0.0
    %428 = vmatprep.subr.mxu0 0.0
    %429 = vmatpush1.msra.mxu0 0.0
    %430 = vmatprep.subr.mxu0 0.0
    %431 = vmatpush1.msra.mxu0 0.0
    %432 = vmatprep.subr.mxu0 0.0
    %433 = vmatpush1.msra.mxu0 0.0
    %434 = vmatprep.subr.mxu0 0.0
    %435 = vmatpush1.msra.mxu0 0.0
    %436 = vmatprep.subr.mxu0 0.0
    %437 = vmatpush1.msra.mxu0 0.0
    %438 = vmatprep.subr.mxu0 0.0
    %439 = vmatpush1.msra.mxu0 0.0
    %440 = vmatprep.subr.mxu0 0.0
    %441 = vmatpush1.msra.mxu0 0.0
    %442 = vmatprep.subr.mxu0 0.0
    %443 = vmatpush1.msra.mxu0 0.0
    %444 = vmatprep.subr.mxu0 0.0
    %445 = vmatpush1.msra.mxu0 0.0
    %446 = vmatprep.subr.mxu0 0.0
    %447 = vmatpush1.msra.mxu0 0.0
    %448 = vmatprep.subr.mxu0 0.0
    %449 = vmatpush1.msra.mxu0 0.0
    %450 = vmatprep.subr.mxu0 0.0
    %451 = vmatpush1.msra.mxu0 0.0
    %452 = vmatprep.subr.mxu0 0.0
    %453 = vmatpush1.msra.mxu0 0.0
    %454 = vmatprep.subr.mxu0 0.0
    %455 = vmatpush1.msra.mxu0 0.0
    %456 = vmatprep.subr.mxu0 0.0
    %457 = vmatpush1.msra.mxu0 0.0
    %458 = vmatprep.subr.mxu0 0.0
    %459 = vmatpush1.msra.mxu0 0.0
    %460 = vmatprep.subr.mxu0 0.0
    %461 = vmatpush1.msra.mxu0 0.0
    %462 = vmatprep.subr.mxu0 0.0
    %463 = vmatpush1.msra.mxu0 0.0
    %464 = vmatprep.subr.mxu0 0.0
    %465 = vmatpush1.msra.mxu0 0.0
    %466 = vmatprep.subr.mxu0 0.0
    %467 = vmatpush1.msra.mxu0 0.0
    %468 = vmatprep.subr.mxu0 0.0
    %469 = vmatpush1.msra.mxu0 0.0
    %470 = vmatprep.subr.mxu0 0.0
    %471 = vmatpush1.msra.mxu0 0.0
    %472 = vmatprep.subr.mxu0 0.0
    %473 = vmatpush1.msra.mxu0 0.0
    %474 = vmatprep.subr.mxu0 0.0
    %475 = vmatpush1.msra.mxu0 0.0
    %476 = vmatprep.subr.mxu0 0.0
    %477 = vmatpush1.msra.mxu0 0.0
    %478 = vmatprep.subr.mxu0 0.0
    %479 = vmatpush1.msra.mxu0 0.0
    %480 = vmatprep.subr.mxu0 0.0
    %481 = vmatpush1.msra.mxu0 0.0
    %482 = vmatprep.subr.mxu0 0.0
    %483 = vmatpush1.msra.mxu0 0.0
    %484 = vmatprep.subr.mxu0 0.0
    %485 = vmatpush1.msra.mxu0 0.0
    %486 = vmatprep.subr.mxu0 0.0
    %487 = vmatpush1.msra.mxu0 0.0
    %488 = vmatprep.mubr.f32.mxu0 0.0
    %489 = vmatmul.mubr.f32.gmra.mrb[0].mxu0 %v422
    %v490 = vpop.f32.mrb[0].mxu0
    %v491 = vadd.f32 0.0, %v490
    %v492 = vpop.f32.mrb[0].mxu0
    %493 = vdwg.mxu0
    %494 = vrot.lane.b32.xlu0 %v239, 64
    %v495 = vpop.permute.xlu0 %494
    %v498 = vsel %vm67, %v417, 0
    %500 = vmatprep.subr.mxu0 0.0
    %501 = vmatpush1.msra.mxu0 %v495
    %502 = vmatprep.subr.mxu0 0.0
    %503 = vmatpush1.msra.mxu0 0.0
    %504 = vmatprep.subr.mxu0 0.0
    %505 = vmatpush1.msra.mxu0 0.0
    %506 = vmatprep.subr.mxu0 0.0
    %507 = vmatpush1.msra.mxu0 0.0
    %508 = vmatprep.subr.mxu0 0.0
    %509 = vmatpush1.msra.mxu0 0.0
    %510 = vmatprep.subr.mxu0 0.0
    %511 = vmatpush1.msra.mxu0 0.0
    %512 = vmatprep.subr.mxu0 0.0
    %513 = vmatpush1.msra.mxu0 0.0
    %514 = vmatprep.subr.mxu0 0.0
    %515 = vmatpush1.msra.mxu0 0.0
    %516 = vmatprep.subr.mxu0 0.0
    %517 = vmatpush1.msra.mxu0 0.0
    %518 = vmatprep.subr.mxu0 0.0
    %519 = vmatpush1.msra.mxu0 0.0
    %520 = vmatprep.subr.mxu0 0.0
    %521 = vmatpush1.msra.mxu0 0.0
    %522 = vmatprep.subr.mxu0 0.0
    %523 = vmatpush1.msra.mxu0 0.0
    %524 = vmatprep.subr.mxu0 0.0
    %525 = vmatpush1.msra.mxu0 0.0
    %526 = vmatprep.subr.mxu0 0.0
    %527 = vmatpush1.msra.mxu0 0.0
    %528 = vmatprep.subr.mxu0 0.0
    %529 = vmatpush1.msra.mxu0 0.0
    %530 = vmatprep.subr.mxu0 0.0
    %531 = vmatpush1.msra.mxu0 0.0
    %532 = vmatprep.subr.mxu0 0.0
    %533 = vmatpush1.msra.mxu0 0.0
    %534 = vmatprep.subr.mxu0 0.0
    %535 = vmatpush1.msra.mxu0 0.0
    %536 = vmatprep.subr.mxu0 0.0
    %537 = vmatpush1.msra.mxu0 0.0
    %538 = vmatprep.subr.mxu0 0.0
    %539 = vmatpush1.msra.mxu0 0.0
    %540 = vmatprep.subr.mxu0 0.0
    %541 = vmatpush1.msra.mxu0 0.0
    %542 = vmatprep.subr.mxu0 0.0
    %543 = vmatpush1.msra.mxu0 0.0
    %544 = vmatprep.subr.mxu0 0.0
    %545 = vmatpush1.msra.mxu0 0.0
    %546 = vmatprep.subr.mxu0 0.0
    %547 = vmatpush1.msra.mxu0 0.0
    %548 = vmatprep.subr.mxu0 0.0
    %549 = vmatpush1.msra.mxu0 0.0
    %550 = vmatprep.subr.mxu0 0.0
    %551 = vmatpush1.msra.mxu0 0.0
    %552 = vmatprep.subr.mxu0 0.0
    %553 = vmatpush1.msra.mxu0 0.0
    %554 = vmatprep.subr.mxu0 0.0
    %555 = vmatpush1.msra.mxu0 0.0
    %556 = vmatprep.subr.mxu0 0.0
    %557 = vmatpush1.msra.mxu0 0.0
    %558 = vmatprep.subr.mxu0 0.0
    %559 = vmatpush1.msra.mxu0 0.0
    %560 = vmatprep.subr.mxu0 0.0
    %561 = vmatpush1.msra.mxu0 0.0
    %562 = vmatprep.subr.mxu0 0.0
    %563 = vmatpush1.msra.mxu0 0.0
    %564 = vmatprep.mubr.f32.mxu0 0.0
    %565 = vmatmul.mubr.f32.gmra.mrb[0].mxu0 %v498
    %v566 = vpop.f32.mrb[0].mxu0
    %v567 = vadd.f32 0.0, %v566
    %v568 = vpop.f32.mrb[0].mxu0
    %569 = vdwg.mxu0
    %570 = vrot.lane.b32.xlu0 %v234, 120
    %v571 = vpop.permute.xlu0 %570
    %572 = vrot.lane.b32.xlu0 %v234, 88
    %v573 = vpop.permute.xlu0 %572
    %v574 = vsel %vm67, %v571, 0
    %v576 = vsel %vm67, %v573, 0
    %578 = vmatprep.subr.mxu0 0.0
    %579 = vmatpush1.xpose.msra.mxu0 %v576
    %580 = vmatprep.subr.mxu0 0.0
    %581 = vmatpush1.xpose.msra.mxu0 0.0
    %582 = vmatprep.subr.mxu0 0.0
    %583 = vmatpush1.xpose.msra.mxu0 0.0
    %584 = vmatprep.subr.mxu0 0.0
    %585 = vmatpush1.xpose.msra.mxu0 0.0
    %586 = vmatprep.subr.mxu0 0.0
    %587 = vmatpush1.xpose.msra.mxu0 0.0
    %588 = vmatprep.subr.mxu0 0.0
    %589 = vmatpush1.xpose.msra.mxu0 0.0
    %590 = vmatprep.subr.mxu0 0.0
    %591 = vmatpush1.xpose.msra.mxu0 0.0
    %592 = vmatprep.subr.mxu0 0.0
    %593 = vmatpush1.xpose.msra.mxu0 0.0
    %594 = vmatprep.subr.mxu0 0.0
    %595 = vmatpush1.xpose.msra.mxu0 0.0
    %596 = vmatprep.subr.mxu0 0.0
    %597 = vmatpush1.xpose.msra.mxu0 0.0
    %598 = vmatprep.subr.mxu0 0.0
    %599 = vmatpush1.xpose.msra.mxu0 0.0
    %600 = vmatprep.subr.mxu0 0.0
    %601 = vmatpush1.xpose.msra.mxu0 0.0
    %602 = vmatprep.subr.mxu0 0.0
    %603 = vmatpush1.xpose.msra.mxu0 0.0
    %604 = vmatprep.subr.mxu0 0.0
    %605 = vmatpush1.xpose.msra.mxu0 0.0
    %606 = vmatprep.subr.mxu0 0.0
    %607 = vmatpush1.xpose.msra.mxu0 0.0
    %608 = vmatprep.subr.mxu0 0.0
    %609 = vmatpush1.xpose.msra.mxu0 0.0
    %610 = vmatprep.subr.mxu0 0.0
    %611 = vmatpush1.xpose.msra.mxu0 0.0
    %612 = vmatprep.subr.mxu0 0.0
    %613 = vmatpush1.xpose.msra.mxu0 0.0
    %614 = vmatprep.subr.mxu0 0.0
    %615 = vmatpush1.xpose.msra.mxu0 0.0
    %616 = vmatprep.subr.mxu0 0.0
    %617 = vmatpush1.xpose.msra.mxu0 0.0
    %618 = vmatprep.subr.mxu0 0.0
    %619 = vmatpush1.xpose.msra.mxu0 0.0
    %620 = vmatprep.subr.mxu0 0.0
    %621 = vmatpush1.xpose.msra.mxu0 0.0
    %622 = vmatprep.subr.mxu0 0.0
    %623 = vmatpush1.xpose.msra.mxu0 0.0
    %624 = vmatprep.subr.mxu0 0.0
    %625 = vmatpush1.xpose.msra.mxu0 0.0
    %626 = vmatprep.subr.mxu0 0.0
    %627 = vmatpush1.xpose.msra.mxu0 0.0
    %628 = vmatprep.subr.mxu0 0.0
    %629 = vmatpush1.xpose.msra.mxu0 0.0
    %630 = vmatprep.subr.mxu0 0.0
    %631 = vmatpush1.xpose.msra.mxu0 0.0
    %632 = vmatprep.subr.mxu0 0.0
    %633 = vmatpush1.xpose.msra.mxu0 0.0
    %634 = vmatprep.subr.mxu0 0.0
    %635 = vmatpush1.xpose.msra.mxu0 0.0
    %636 = vmatprep.subr.mxu0 0.0
    %637 = vmatpush1.xpose.msra.mxu0 0.0
    %638 = vmatprep.subr.mxu0 0.0
    %639 = vmatpush1.xpose.msra.mxu0 0.0
    %640 = vmatprep.subr.mxu0 0.0
    %641 = vmatpush1.xpose.msra.mxu0 0.0
    %642 = vmatprep.mubr.f32.mxu0 0.0
    %643 = vmatmul.mubr.f32.gmra.mrb[0].mxu0 %v574
    %v644 = vpop.f32.mrb[0].mxu0
    %v645 = vadd.f32 0.0, %v644
    %v646 = vpop.f32.mrb[0].mxu0
    %647 = vdwg.mxu0
    %648 = vrot.lane.b32.xlu0 %v239, 120
    %v649 = vpop.permute.xlu0 %648
    %650 = vrot.lane.b32.xlu0 %v239, 88
    %v651 = vpop.permute.xlu0 %650
    %v652 = vsel %vm67, %v649, 0
    %v654 = vsel %vm67, %v651, 0
    %656 = vmatprep.subr.mxu0 0.0
    %657 = vmatpush1.xpose.msra.mxu0 %v654
    %658 = vmatprep.subr.mxu0 0.0
    %659 = vmatpush1.xpose.msra.mxu0 0.0
    %660 = vmatprep.subr.mxu0 0.0
    %661 = vmatpush1.xpose.msra.mxu0 0.0
    %662 = vmatprep.subr.mxu0 0.0
    %663 = vmatpush1.xpose.msra.mxu0 0.0
    %664 = vmatprep.subr.mxu0 0.0
    %665 = vmatpush1.xpose.msra.mxu0 0.0
    %666 = vmatprep.subr.mxu0 0.0
    %667 = vmatpush1.xpose.msra.mxu0 0.0
    %668 = vmatprep.subr.mxu0 0.0
    %669 = vmatpush1.xpose.msra.mxu0 0.0
    %670 = vmatprep.subr.mxu0 0.0
    %671 = vmatpush1.xpose.msra.mxu0 0.0
    %672 = vmatprep.subr.mxu0 0.0
    %673 = vmatpush1.xpose.msra.mxu0 0.0
    %674 = vmatprep.subr.mxu0 0.0
    %675 = vmatpush1.xpose.msra.mxu0 0.0
    %676 = vmatprep.subr.mxu0 0.0
    %677 = vmatpush1.xpose.msra.mxu0 0.0
    %678 = vmatprep.subr.mxu0 0.0
    %679 = vmatpush1.xpose.msra.mxu0 0.0
    %680 = vmatprep.subr.mxu0 0.0
    %681 = vmatpush1.xpose.msra.mxu0 0.0
    %682 = vmatprep.subr.mxu0 0.0
    %683 = vmatpush1.xpose.msra.mxu0 0.0
    %684 = vmatprep.subr.mxu0 0.0
    %685 = vmatpush1.xpose.msra.mxu0 0.0
    %686 = vmatprep.subr.mxu0 0.0
    %687 = vmatpush1.xpose.msra.mxu0 0.0
    %688 = vmatprep.subr.mxu0 0.0
    %689 = vmatpush1.xpose.msra.mxu0 0.0
    %690 = vmatprep.subr.mxu0 0.0
    %691 = vmatpush1.xpose.msra.mxu0 0.0
    %692 = vmatprep.subr.mxu0 0.0
    %693 = vmatpush1.xpose.msra.mxu0 0.0
    %694 = vmatprep.subr.mxu0 0.0
    %695 = vmatpush1.xpose.msra.mxu0 0.0
    %696 = vmatprep.subr.mxu0 0.0
    %697 = vmatpush1.xpose.msra.mxu0 0.0
    %698 = vmatprep.subr.mxu0 0.0
    %699 = vmatpush1.xpose.msra.mxu0 0.0
    %700 = vmatprep.subr.mxu0 0.0
    %701 = vmatpush1.xpose.msra.mxu0 0.0
    %702 = vmatprep.subr.mxu0 0.0
    %703 = vmatpush1.xpose.msra.mxu0 0.0
    %704 = vmatprep.subr.mxu0 0.0
    %705 = vmatpush1.xpose.msra.mxu0 0.0
    %706 = vmatprep.subr.mxu0 0.0
    %707 = vmatpush1.xpose.msra.mxu0 0.0
    %708 = vmatprep.subr.mxu0 0.0
    %709 = vmatpush1.xpose.msra.mxu0 0.0
    %710 = vmatprep.subr.mxu0 0.0
    %711 = vmatpush1.xpose.msra.mxu0 0.0
    %712 = vmatprep.subr.mxu0 0.0
    %713 = vmatpush1.xpose.msra.mxu0 0.0
    %714 = vmatprep.subr.mxu0 0.0
    %715 = vmatpush1.xpose.msra.mxu0 0.0
    %716 = vmatprep.subr.mxu0 0.0
    %717 = vmatpush1.xpose.msra.mxu0 0.0
    %718 = vmatprep.subr.mxu0 0.0
    %719 = vmatpush1.xpose.msra.mxu0 0.0
    %720 = vmatprep.mubr.f32.mxu0 0.0
    %721 = vmatmul.mubr.f32.gmra.mrb[0].mxu0 %v652
    %v722 = vpop.f32.mrb[0].mxu0
    %v723 = vadd.f32 0.0, %v722
    %v724 = vpop.f32.mrb[0].mxu0
    %725 = vdwg.mxu0
    %v726 = vsel %vm67, %v645, -inf
    %727 = vmax.xlane.f32.xlu0 %v726
    %v728 = vpop.xlane.xlu0 %727
    %v729 = vsel %vm67, %v723, -inf
    %730 = vmax.xlane.f32.xlu0 %v729
    %v731 = vpop.xlane.xlu0 %730
    %v732 = vsub.f32 %v645, %v728
    %v733 = vsub.f32 %v723, %v731
    %v734 = vmul.f32 %v732, 1.442695
    %v735 = vpow.pop %v734
    %v736 = vmul.f32 %v733, 1.442695
    %v737 = vpow.pop %v736
    %v738 = vsel %vm67, %v735, 0.0
    %739 = vadd.xlane.f32.xlu0 %v738
    %v740 = vpop.xlane.xlu0 %739
    %v741 = vsel %vm67, %v737, 0.0
    %742 = vadd.xlane.f32.xlu0 %v741
    %v743 = vpop.xlane.xlu0 %742
    %v744 = vrcp.pop %v740
    %v745 = vrcp.pop %v743
    %v746 = vmul.f32 %v735, %v744
    %v747 = vmul.f32 %v737, %v745
    %748 = vrot.lane.b32.xlu0 %v234, 56
    %v749 = vpop.permute.xlu0 %748
    %v752 = vsel %vm67, %v746, 0
    %754 = vmatprep.subr.mxu0 0.0
    %755 = vmatpush1.msra.mxu0 %v749
    %756 = vmatprep.subr.mxu0 0.0
    %757 = vmatpush1.msra.mxu0 0.0
    %758 = vmatprep.subr.mxu0 0.0
    %759 = vmatpush1.msra.mxu0 0.0
    %760 = vmatprep.subr.mxu0 0.0
    %761 = vmatpush1.msra.mxu0 0.0
    %762 = vmatprep.subr.mxu0 0.0
    %763 = vmatpush1.msra.mxu0 0.0
    %764 = vmatprep.subr.mxu0 0.0
    %765 = vmatpush1.msra.mxu0 0.0
    %766 = vmatprep.subr.mxu0 0.0
    %767 = vmatpush1.msra.mxu0 0.0
    %768 = vmatprep.subr.mxu0 0.0
    %769 = vmatpush1.msra.mxu0 0.0
    %770 = vmatprep.subr.mxu0 0.0
    %771 = vmatpush1.msra.mxu0 0.0
    %772 = vmatprep.subr.mxu0 0.0
    %773 = vmatpush1.msra.mxu0 0.0
    %774 = vmatprep.subr.mxu0 0.0
    %775 = vmatpush1.msra.mxu0 0.0
    %776 = vmatprep.subr.mxu0 0.0
    %777 = vmatpush1.msra.mxu0 0.0
    %778 = vmatprep.subr.mxu0 0.0
    %779 = vmatpush1.msra.mxu0 0.0
    %780 = vmatprep.subr.mxu0 0.0
    %781 = vmatpush1.msra.mxu0 0.0
    %782 = vmatprep.subr.mxu0 0.0
    %783 = vmatpush1.msra.mxu0 0.0
    %784 = vmatprep.subr.mxu0 0.0
    %785 = vmatpush1.msra.mxu0 0.0
    %786 = vmatprep.subr.mxu0 0.0
    %787 = vmatpush1.msra.mxu0 0.0
    %788 = vmatprep.subr.mxu0 0.0
    %789 = vmatpush1.msra.mxu0 0.0
    %790 = vmatprep.subr.mxu0 0.0
    %791 = vmatpush1.msra.mxu0 0.0
    %792 = vmatprep.subr.mxu0 0.0
    %793 = vmatpush1.msra.mxu0 0.0
    %794 = vmatprep.subr.mxu0 0.0
    %795 = vmatpush1.msra.mxu0 0.0
    %796 = vmatprep.subr.mxu0 0.0
    %797 = vmatpush1.msra.mxu0 0.0
    %798 = vmatprep.subr.mxu0 0.0
    %799 = vmatpush1.msra.mxu0 0.0
    %800 = vmatprep.subr.mxu0 0.0
    %801 = vmatpush1.msra.mxu0 0.0
    %802 = vmatprep.subr.mxu0 0.0
    %803 = vmatpush1.msra.mxu0 0.0
    %804 = vmatprep.subr.mxu0 0.0
    %805 = vmatpush1.msra.mxu0 0.0
    %806 = vmatprep.subr.mxu0 0.0
    %807 = vmatpush1.msra.mxu0 0.0
    %808 = vmatprep.subr.mxu0 0.0
    %809 = vmatpush1.msra.mxu0 0.0
    %810 = vmatprep.subr.mxu0 0.0
    %811 = vmatpush1.msra.mxu0 0.0
    %812 = vmatprep.subr.mxu0 0.0
    %813 = vmatpush1.msra.mxu0 0.0
    %814 = vmatprep.subr.mxu0 0.0
    %815 = vmatpush1.msra.mxu0 0.0
    %816 = vmatprep.subr.mxu0 0.0
    %817 = vmatpush1.msra.mxu0 0.0
    %818 = vmatprep.mubr.f32.mxu0 0.0
    %819 = vmatmul.mubr.f32.gmra.mrb[0].mxu0 %v752
    %v820 = vpop.f32.mrb[0].mxu0
    %v821 = vadd.f32 0.0, %v820
    %v822 = vpop.f32.mrb[0].mxu0
    %823 = vdwg.mxu0
    %824 = vrot.lane.b32.xlu0 %v239, 56
    %v825 = vpop.permute.xlu0 %824
    %v828 = vsel %vm67, %v747, 0
    %830 = vmatprep.subr.mxu0 0.0
    %831 = vmatpush1.msra.mxu0 %v825
    %832 = vmatprep.subr.mxu0 0.0
    %833 = vmatpush1.msra.mxu0 0.0
    %834 = vmatprep.subr.mxu0 0.0
    %835 = vmatpush1.msra.mxu0 0.0
    %836 = vmatprep.subr.mxu0 0.0
    %837 = vmatpush1.msra.mxu0 0.0
    %838 = vmatprep.subr.mxu0 0.0
    %839 = vmatpush1.msra.mxu0 0.0
    %840 = vmatprep.subr.mxu0 0.0
    %841 = vmatpush1.msra.mxu0 0.0
    %842 = vmatprep.subr.mxu0 0.0
    %843 = vmatpush1.msra.mxu0 0.0
    %844 = vmatprep.subr.mxu0 0.0
    %845 = vmatpush1.msra.mxu0 0.0
    %846 = vmatprep.subr.mxu0 0.0
    %847 = vmatpush1.msra.mxu0 0.0
    %848 = vmatprep.subr.mxu0 0.0
    %849 = vmatpush1.msra.mxu0 0.0
    %850 = vmatprep.subr.mxu0 0.0
    %851 = vmatpush1.msra.mxu0 0.0
    %852 = vmatprep.subr.mxu0 0.0
    %853 = vmatpush1.msra.mxu0 0.0
    %854 = vmatprep.subr.mxu0 0.0
    %855 = vmatpush1.msra.mxu0 0.0
    %856 = vmatprep.subr.mxu0 0.0
    %857 = vmatpush1.msra.mxu0 0.0
    %858 = vmatprep.subr.mxu0 0.0
    %859 = vmatpush1.msra.mxu0 0.0
    %860 = vmatprep.subr.mxu0 0.0
    %861 = vmatpush1.msra.mxu0 0.0
    %862 = vmatprep.subr.mxu0 0.0
    %863 = vmatpush1.msra.mxu0 0.0
    %864 = vmatprep.subr.mxu0 0.0
    %865 = vmatpush1.msra.mxu0 0.0
    %866 = vmatprep.subr.mxu0 0.0
    %867 = vmatpush1.msra.mxu0 0.0
    %868 = vmatprep.subr.mxu0 0.0
    %869 = vmatpush1.msra.mxu0 0.0
    %870 = vmatprep.subr.mxu0 0.0
    %871 = vmatpush1.msra.mxu0 0.0
    %872 = vmatprep.subr.mxu0 0.0
    %873 = vmatpush1.msra.mxu0 0.0
    %874 = vmatprep.subr.mxu0 0.0
    %875 = vmatpush1.msra.mxu0 0.0
    %876 = vmatprep.subr.mxu0 0.0
    %877 = vmatpush1.msra.mxu0 0.0
    %878 = vmatprep.subr.mxu0 0.0
    %879 = vmatpush1.msra.mxu0 0.0
    %880 = vmatprep.subr.mxu0 0.0
    %881 = vmatpush1.msra.mxu0 0.0
    %882 = vmatprep.subr.mxu0 0.0
    %883 = vmatpush1.msra.mxu0 0.0
    %884 = vmatprep.subr.mxu0 0.0
    %885 = vmatpush1.msra.mxu0 0.0
    %886 = vmatprep.subr.mxu0 0.0
    %887 = vmatpush1.msra.mxu0 0.0
    %888 = vmatprep.subr.mxu0 0.0
    %889 = vmatpush1.msra.mxu0 0.0
    %890 = vmatprep.subr.mxu0 0.0
    %891 = vmatpush1.msra.mxu0 0.0
    %892 = vmatprep.subr.mxu0 0.0
    %893 = vmatpush1.msra.mxu0 0.0
    %894 = vmatprep.mubr.f32.mxu0 0.0
    %895 = vmatmul.mubr.f32.gmra.mrb[0].mxu0 %v828
    %v896 = vpop.f32.mrb[0].mxu0
    %v897 = vadd.f32 0.0, %v896
    %v898 = vpop.f32.mrb[0].mxu0
    %899 = vdwg.mxu0
    %900 = vrot.lane.b32.xlu0 %v234, 112
    %v901 = vpop.permute.xlu0 %900
    %902 = vrot.lane.b32.xlu0 %v234, 80
    %v903 = vpop.permute.xlu0 %902
    %v904 = vsel %vm67, %v901, 0
    %v906 = vsel %vm67, %v903, 0
    %908 = vmatprep.subr.mxu0 0.0
    %909 = vmatpush1.xpose.msra.mxu0 %v906
    %910 = vmatprep.subr.mxu0 0.0
    %911 = vmatpush1.xpose.msra.mxu0 0.0
    %912 = vmatprep.subr.mxu0 0.0
    %913 = vmatpush1.xpose.msra.mxu0 0.0
    %914 = vmatprep.subr.mxu0 0.0
    %915 = vmatpush1.xpose.msra.mxu0 0.0
    %916 = vmatprep.subr.mxu0 0.0
    %917 = vmatpush1.xpose.msra.mxu0 0.0
    %918 = vmatprep.subr.mxu0 0.0
    %919 = vmatpush1.xpose.msra.mxu0 0.0
    %920 = vmatprep.subr.mxu0 0.0
    %921 = vmatpush1.xpose.msra.mxu0 0.0
    %922 = vmatprep.subr.mxu0 0.0
    %923 = vmatpush1.xpose.msra.mxu0 0.0
    %924 = vmatprep.subr.mxu0 0.0
    %925 = vmatpush1.xpose.msra.mxu0 0.0
    %926 = vmatprep.subr.mxu0 0.0
    %927 = vmatpush1.xpose.msra.mxu0 0.0
    %928 = vmatprep.subr.mxu0 0.0
    %929 = vmatpush1.xpose.msra.mxu0 0.0
    %930 = vmatprep.subr.mxu0 0.0
    %931 = vmatpush1.xpose.msra.mxu0 0.0
    %932 = vmatprep.subr.mxu0 0.0
    %933 = vmatpush1.xpose.msra.mxu0 0.0
    %934 = vmatprep.subr.mxu0 0.0
    %935 = vmatpush1.xpose.msra.mxu0 0.0
    %936 = vmatprep.subr.mxu0 0.0
    %937 = vmatpush1.xpose.msra.mxu0 0.0
    %938 = vmatprep.subr.mxu0 0.0
    %939 = vmatpush1.xpose.msra.mxu0 0.0
    %940 = vmatprep.subr.mxu0 0.0
    %941 = vmatpush1.xpose.msra.mxu0 0.0
    %942 = vmatprep.subr.mxu0 0.0
    %943 = vmatpush1.xpose.msra.mxu0 0.0
    %944 = vmatprep.subr.mxu0 0.0
    %945 = vmatpush1.xpose.msra.mxu0 0.0
    %946 = vmatprep.subr.mxu0 0.0
    %947 = vmatpush1.xpose.msra.mxu0 0.0
    %948 = vmatprep.subr.mxu0 0.0
    %949 = vmatpush1.xpose.msra.mxu0 0.0
    %950 = vmatprep.subr.mxu0 0.0
    %951 = vmatpush1.xpose.msra.mxu0 0.0
    %952 = vmatprep.subr.mxu0 0.0
    %953 = vmatpush1.xpose.msra.mxu0 0.0
    %954 = vmatprep.subr.mxu0 0.0
    %955 = vmatpush1.xpose.msra.mxu0 0.0
    %956 = vmatprep.subr.mxu0 0.0
    %957 = vmatpush1.xpose.msra.mxu0 0.0
    %958 = vmatprep.subr.mxu0 0.0
    %959 = vmatpush1.xpose.msra.mxu0 0.0
    %960 = vmatprep.subr.mxu0 0.0
    %961 = vmatpush1.xpose.msra.mxu0 0.0
    %962 = vmatprep.subr.mxu0 0.0
    %963 = vmatpush1.xpose.msra.mxu0 0.0
    %964 = vmatprep.subr.mxu0 0.0
    %965 = vmatpush1.xpose.msra.mxu0 0.0
    %966 = vmatprep.subr.mxu0 0.0
    %967 = vmatpush1.xpose.msra.mxu0 0.0
    %968 = vmatprep.subr.mxu0 0.0
    %969 = vmatpush1.xpose.msra.mxu0 0.0
    %970 = vmatprep.subr.mxu0 0.0
    %971 = vmatpush1.xpose.msra.mxu0 0.0
    %972 = vmatprep.mubr.f32.mxu0 0.0
    %973 = vmatmul.mubr.f32.gmra.mrb[0].mxu0 %v904
    %v974 = vpop.f32.mrb[0].mxu0
    %v975 = vadd.f32 0.0, %v974
    %v976 = vpop.f32.mrb[0].mxu0
    %977 = vdwg.mxu0
    %978 = vrot.lane.b32.xlu0 %v239, 112
    %v979 = vpop.permute.xlu0 %978
    %980 = vrot.lane.b32.xlu0 %v239, 80
    %v981 = vpop.permute.xlu0 %980
    %v982 = vsel %vm67, %v979, 0
    %v984 = vsel %vm67, %v981, 0
    %986 = vmatprep.subr.mxu0 0.0
    %987 = vmatpush1.xpose.msra.mxu0 %v984
    %988 = vmatprep.subr.mxu0 0.0
    %989 = vmatpush1.xpose.msra.mxu0 0.0
    %990 = vmatprep.subr.mxu0 0.0
    %991 = vmatpush1.xpose.msra.mxu0 0.0
    %992 = vmatprep.subr.mxu0 0.0
    %993 = vmatpush1.xpose.msra.mxu0 0.0
    %994 = vmatprep.subr.mxu0 0.0
    %995 = vmatpush1.xpose.msra.mxu0 0.0
    %996 = vmatprep.subr.mxu0 0.0
    %997 = vmatpush1.xpose.msra.mxu0 0.0
    %998 = vmatprep.subr.mxu0 0.0
    %999 = vmatpush1.xpose.msra.mxu0 0.0
    %1000 = vmatprep.subr.mxu0 0.0
    %1001 = vmatpush1.xpose.msra.mxu0 0.0
    %1002 = vmatprep.subr.mxu0 0.0
    %1003 = vmatpush1.xpose.msra.mxu0 0.0
    %1004 = vmatprep.subr.mxu0 0.0
    %1005 = vmatpush1.xpose.msra.mxu0 0.0
    %1006 = vmatprep.subr.mxu0 0.0
    %1007 = vmatpush1.xpose.msra.mxu0 0.0
    %1008 = vmatprep.subr.mxu0 0.0
    %1009 = vmatpush1.xpose.msra.mxu0 0.0
    %1010 = vmatprep.subr.mxu0 0.0
    %1011 = vmatpush1.xpose.msra.mxu0 0.0
    %1012 = vmatprep.subr.mxu0 0.0
    %1013 = vmatpush1.xpose.msra.mxu0 0.0
    %1014 = vmatprep.subr.mxu0 0.0
    %1015 = vmatpush1.xpose.msra.mxu0 0.0
    %1016 = vmatprep.subr.mxu0 0.0
    %1017 = vmatpush1.xpose.msra.mxu0 0.0
    %1018 = vmatprep.subr.mxu0 0.0
    %1019 = vmatpush1.xpose.msra.mxu0 0.0
    %1020 = vmatprep.subr.mxu0 0.0
    %1021 = vmatpush1.xpose.msra.mxu0 0.0
    %1022 = vmatprep.subr.mxu0 0.0
    %1023 = vmatpush1.xpose.msra.mxu0 0.0
    %1024 = vmatprep.subr.mxu0 0.0
    %1025 = vmatpush1.xpose.msra.mxu0 0.0
    %1026 = vmatprep.subr.mxu0 0.0
    %1027 = vmatpush1.xpose.msra.mxu0 0.0
    %1028 = vmatprep.subr.mxu0 0.0
    %1029 = vmatpush1.xpose.msra.mxu0 0.0
    %1030 = vmatprep.subr.mxu0 0.0
    %1031 = vmatpush1.xpose.msra.mxu0 0.0
    %1032 = vmatprep.subr.mxu0 0.0
    %1033 = vmatpush1.xpose.msra.mxu0 0.0
    %1034 = vmatprep.subr.mxu0 0.0
    %1035 = vmatpush1.xpose.msra.mxu0 0.0
    %1036 = vmatprep.subr.mxu0 0.0
    %1037 = vmatpush1.xpose.msra.mxu0 0.0
    %1038 = vmatprep.subr.mxu0 0.0
    %1039 = vmatpush1.xpose.msra.mxu0 0.0
    %1040 = vmatprep.subr.mxu0 0.0
    %1041 = vmatpush1.xpose.msra.mxu0 0.0
    %1042 = vmatprep.subr.mxu0 0.0
    %1043 = vmatpush1.xpose.msra.mxu0 0.0
    %1044 = vmatprep.subr.mxu0 0.0
    %1045 = vmatpush1.xpose.msra.mxu0 0.0
    %1046 = vmatprep.subr.mxu0 0.0
    %1047 = vmatpush1.xpose.msra.mxu0 0.0
    %1048 = vmatprep.subr.mxu0 0.0
    %1049 = vmatpush1.xpose.msra.mxu0 0.0
    %1050 = vmatprep.mubr.f32.mxu0 0.0
    %1051 = vmatmul.mubr.f32.gmra.mrb[0].mxu0 %v982
    %v1052 = vpop.f32.mrb[0].mxu0
    %v1053 = vadd.f32 0.0, %v1052
    %v1054 = vpop.f32.mrb[0].mxu0
    %1055 = vdwg.mxu0
    %v1056 = vsel %vm67, %v975, -inf
    %1057 = vmax.xlane.f32.xlu0 %v1056
    %v1058 = vpop.xlane.xlu0 %1057
    %v1059 = vsel %vm67, %v1053, -inf
    %1060 = vmax.xlane.f32.xlu0 %v1059
    %v1061 = vpop.xlane.xlu0 %1060
    %v1062 = vsub.f32 %v975, %v1058
    %v1063 = vsub.f32 %v1053, %v1061
    %v1064 = vmul.f32 %v1062, 1.442695
    %v1065 = vpow.pop %v1064
    %v1066 = vmul.f32 %v1063, 1.442695
    %v1067 = vpow.pop %v1066
    %v1068 = vsel %vm67, %v1065, 0.0
    %1069 = vadd.xlane.f32.xlu0 %v1068
    %v1070 = vpop.xlane.xlu0 %1069
    %v1071 = vsel %vm67, %v1067, 0.0
    %1072 = vadd.xlane.f32.xlu0 %v1071
    %v1073 = vpop.xlane.xlu0 %1072
    %v1074 = vrcp.pop %v1070
    %v1075 = vrcp.pop %v1073
    %v1076 = vmul.f32 %v1065, %v1074
    %v1077 = vmul.f32 %v1067, %v1075
    %1078 = vrot.lane.b32.xlu0 %v234, 48
    %v1079 = vpop.permute.xlu0 %1078
    %v1082 = vsel %vm67, %v1076, 0
    %1084 = vmatprep.subr.mxu0 0.0
    %1085 = vmatpush1.msra.mxu0 %v1079
    %1086 = vmatprep.subr.mxu0 0.0
    %1087 = vmatpush1.msra.mxu0 0.0
    %1088 = vmatprep.subr.mxu0 0.0
    %1089 = vmatpush1.msra.mxu0 0.0
    %1090 = vmatprep.subr.mxu0 0.0
    %1091 = vmatpush1.msra.mxu0 0.0
    %1092 = vmatprep.subr.mxu0 0.0
    %1093 = vmatpush1.msra.mxu0 0.0
    %1094 = vmatprep.subr.mxu0 0.0
    %1095 = vmatpush1.msra.mxu0 0.0
    %1096 = vmatprep.subr.mxu0 0.0
    %1097 = vmatpush1.msra.mxu0 0.0
    %1098 = vmatprep.subr.mxu0 0.0
    %1099 = vmatpush1.msra.mxu0 0.0
    %1100 = vmatprep.subr.mxu0 0.0
    %1101 = vmatpush1.msra.mxu0 0.0
    %1102 = vmatprep.subr.mxu0 0.0
    %1103 = vmatpush1.msra.mxu0 0.0
    %1104 = vmatprep.subr.mxu0 0.0
    %1105 = vmatpush1.msra.mxu0 0.0
    %1106 = vmatprep.subr.mxu0 0.0
    %1107 = vmatpush1.msra.mxu0 0.0
    %1108 = vmatprep.subr.mxu0 0.0
    %1109 = vmatpush1.msra.mxu0 0.0
    %1110 = vmatprep.subr.mxu0 0.0
    %1111 = vmatpush1.msra.mxu0 0.0
    %1112 = vmatprep.subr.mxu0 0.0
    %1113 = vmatpush1.msra.mxu0 0.0
    %1114 = vmatprep.subr.mxu0 0.0
    %1115 = vmatpush1.msra.mxu0 0.0
    %1116 = vmatprep.subr.mxu0 0.0
    %1117 = vmatpush1.msra.mxu0 0.0
    %1118 = vmatprep.subr.mxu0 0.0
    %1119 = vmatpush1.msra.mxu0 0.0
    %1120 = vmatprep.subr.mxu0 0.0
    %1121 = vmatpush1.msra.mxu0 0.0
    %1122 = vmatprep.subr.mxu0 0.0
    %1123 = vmatpush1.msra.mxu0 0.0
    %1124 = vmatprep.subr.mxu0 0.0
    %1125 = vmatpush1.msra.mxu0 0.0
    %1126 = vmatprep.subr.mxu0 0.0
    %1127 = vmatpush1.msra.mxu0 0.0
    %1128 = vmatprep.subr.mxu0 0.0
    %1129 = vmatpush1.msra.mxu0 0.0
    %1130 = vmatprep.subr.mxu0 0.0
    %1131 = vmatpush1.msra.mxu0 0.0
    %1132 = vmatprep.subr.mxu0 0.0
    %1133 = vmatpush1.msra.mxu0 0.0
    %1134 = vmatprep.subr.mxu0 0.0
    %1135 = vmatpush1.msra.mxu0 0.0
    %1136 = vmatprep.subr.mxu0 0.0
    %1137 = vmatpush1.msra.mxu0 0.0
    %1138 = vmatprep.subr.mxu0 0.0
    %1139 = vmatpush1.msra.mxu0 0.0
    %1140 = vmatprep.subr.mxu0 0.0
    %1141 = vmatpush1.msra.mxu0 0.0
    %1142 = vmatprep.subr.mxu0 0.0
    %1143 = vmatpush1.msra.mxu0 0.0
    %1144 = vmatprep.subr.mxu0 0.0
    %1145 = vmatpush1.msra.mxu0 0.0
    %1146 = vmatprep.subr.mxu0 0.0
    %1147 = vmatpush1.msra.mxu0 0.0
    %1148 = vmatprep.mubr.f32.mxu0 0.0
    %1149 = vmatmul.mubr.f32.gmra.mrb[0].mxu0 %v1082
    %v1150 = vpop.f32.mrb[0].mxu0
    %v1151 = vadd.f32 0.0, %v1150
    %v1152 = vpop.f32.mrb[0].mxu0
    %1153 = vdwg.mxu0
    %1154 = vrot.lane.b32.xlu0 %v239, 48
    %v1155 = vpop.permute.xlu0 %1154
    %v1158 = vsel %vm67, %v1077, 0
    %1160 = vmatprep.subr.mxu0 0.0
    %1161 = vmatpush1.msra.mxu0 %v1155
    %1162 = vmatprep.subr.mxu0 0.0
    %1163 = vmatpush1.msra.mxu0 0.0
    %1164 = vmatprep.subr.mxu0 0.0
    %1165 = vmatpush1.msra.mxu0 0.0
    %1166 = vmatprep.subr.mxu0 0.0
    %1167 = vmatpush1.msra.mxu0 0.0
    %1168 = vmatprep.subr.mxu0 0.0
    %1169 = vmatpush1.msra.mxu0 0.0
    %1170 = vmatprep.subr.mxu0 0.0
    %1171 = vmatpush1.msra.mxu0 0.0
    %1172 = vmatprep.subr.mxu0 0.0
    %1173 = vmatpush1.msra.mxu0 0.0
    %1174 = vmatprep.subr.mxu0 0.0
    %1175 = vmatpush1.msra.mxu0 0.0
    %1176 = vmatprep.subr.mxu0 0.0
    %1177 = vmatpush1.msra.mxu0 0.0
    %1178 = vmatprep.subr.mxu0 0.0
    %1179 = vmatpush1.msra.mxu0 0.0
    %1180 = vmatprep.subr.mxu0 0.0
    %1181 = vmatpush1.msra.mxu0 0.0
    %1182 = vmatprep.subr.mxu0 0.0
    %1183 = vmatpush1.msra.mxu0 0.0
    %1184 = vmatprep.subr.mxu0 0.0
    %1185 = vmatpush1.msra.mxu0 0.0
    %1186 = vmatprep.subr.mxu0 0.0
    %1187 = vmatpush1.msra.mxu0 0.0
    %1188 = vmatprep.subr.mxu0 0.0
    %1189 = vmatpush1.msra.mxu0 0.0
    %1190 = vmatprep.subr.mxu0 0.0
    %1191 = vmatpush1.msra.mxu0 0.0
    %1192 = vmatprep.subr.mxu0 0.0
    %1193 = vmatpush1.msra.mxu0 0.0
    %1194 = vmatprep.subr.mxu0 0.0
    %1195 = vmatpush1.msra.mxu0 0.0
    %1196 = vmatprep.subr.mxu0 0.0
    %1197 = vmatpush1.msra.mxu0 0.0
    %1198 = vmatprep.subr.mxu0 0.0
    %1199 = vmatpush1.msra.mxu0 0.0
    %1200 = vmatprep.subr.mxu0 0.0
    %1201 = vmatpush1.msra.mxu0 0.0
    %1202 = vmatprep.subr.mxu0 0.0
    %1203 = vmatpush1.msra.mxu0 0.0
    %1204 = vmatprep.subr.mxu0 0.0
    %1205 = vmatpush1.msra.mxu0 0.0
    %1206 = vmatprep.subr.mxu0 0.0
    %1207 = vmatpush1.msra.mxu0 0.0
    %1208 = vmatprep.subr.mxu0 0.0
    %1209 = vmatpush1.msra.mxu0 0.0
    %1210 = vmatprep.subr.mxu0 0.0
    %1211 = vmatpush1.msra.mxu0 0.0
    %1212 = vmatprep.subr.mxu0 0.0
    %1213 = vmatpush1.msra.mxu0 0.0
    %1214 = vmatprep.subr.mxu0 0.0
    %1215 = vmatpush1.msra.mxu0 0.0
    %1216 = vmatprep.subr.mxu0 0.0
    %1217 = vmatpush1.msra.mxu0 0.0
    %1218 = vmatprep.subr.mxu0 0.0
    %1219 = vmatpush1.msra.mxu0 0.0
    %1220 = vmatprep.subr.mxu0 0.0
    %1221 = vmatpush1.msra.mxu0 0.0
    %1222 = vmatprep.subr.mxu0 0.0
    %1223 = vmatpush1.msra.mxu0 0.0
    %1224 = vmatprep.mubr.f32.mxu0 0.0
    %1225 = vmatmul.mubr.f32.gmra.mrb[0].mxu0 %v1158
    %v1226 = vpop.f32.mrb[0].mxu0
    %v1227 = vadd.f32 0.0, %v1226
    %v1228 = vpop.f32.mrb[0].mxu0
    %1229 = vdwg.mxu0
    %1230 = vrot.lane.b32.xlu0 %v234, 104
    %v1231 = vpop.permute.xlu0 %1230
    %1232 = vrot.lane.b32.xlu0 %v234, 72
    %v1233 = vpop.permute.xlu0 %1232
    %v1234 = vsel %vm67, %v1231, 0
    %v1236 = vsel %vm67, %v1233, 0
    %1238 = vmatprep.subr.mxu0 0.0
    %1239 = vmatpush1.xpose.msra.mxu0 %v1236
    %1240 = vmatprep.subr.mxu0 0.0
    %1241 = vmatpush1.xpose.msra.mxu0 0.0
    %1242 = vmatprep.subr.mxu0 0.0
    %1243 = vmatpush1.xpose.msra.mxu0 0.0
    %1244 = vmatprep.subr.mxu0 0.0
    %1245 = vmatpush1.xpose.msra.mxu0 0.0
    %1246 = vmatprep.subr.mxu0 0.0
    %1247 = vmatpush1.xpose.msra.mxu0 0.0
    %1248 = vmatprep.subr.mxu0 0.0
    %1249 = vmatpush1.xpose.msra.mxu0 0.0
    %1250 = vmatprep.subr.mxu0 0.0
    %1251 = vmatpush1.xpose.msra.mxu0 0.0
    %1252 = vmatprep.subr.mxu0 0.0
    %1253 = vmatpush1.xpose.msra.mxu0 0.0
    %1254 = vmatprep.subr.mxu0 0.0
    %1255 = vmatpush1.xpose.msra.mxu0 0.0
    %1256 = vmatprep.subr.mxu0 0.0
    %1257 = vmatpush1.xpose.msra.mxu0 0.0
    %1258 = vmatprep.subr.mxu0 0.0
    %1259 = vmatpush1.xpose.msra.mxu0 0.0
    %1260 = vmatprep.subr.mxu0 0.0
    %1261 = vmatpush1.xpose.msra.mxu0 0.0
    %1262 = vmatprep.subr.mxu0 0.0
    %1263 = vmatpush1.xpose.msra.mxu0 0.0
    %1264 = vmatprep.subr.mxu0 0.0
    %1265 = vmatpush1.xpose.msra.mxu0 0.0
    %1266 = vmatprep.subr.mxu0 0.0
    %1267 = vmatpush1.xpose.msra.mxu0 0.0
    %1268 = vmatprep.subr.mxu0 0.0
    %1269 = vmatpush1.xpose.msra.mxu0 0.0
    %1270 = vmatprep.subr.mxu0 0.0
    %1271 = vmatpush1.xpose.msra.mxu0 0.0
    %1272 = vmatprep.subr.mxu0 0.0
    %1273 = vmatpush1.xpose.msra.mxu0 0.0
    %1274 = vmatprep.subr.mxu0 0.0
    %1275 = vmatpush1.xpose.msra.mxu0 0.0
    %1276 = vmatprep.subr.mxu0 0.0
    %1277 = vmatpush1.xpose.msra.mxu0 0.0
    %1278 = vmatprep.subr.mxu0 0.0
    %1279 = vmatpush1.xpose.msra.mxu0 0.0
    %1280 = vmatprep.subr.mxu0 0.0
    %1281 = vmatpush1.xpose.msra.mxu0 0.0
    %1282 = vmatprep.subr.mxu0 0.0
    %1283 = vmatpush1.xpose.msra.mxu0 0.0
    %1284 = vmatprep.subr.mxu0 0.0
    %1285 = vmatpush1.xpose.msra.mxu0 0.0
    %1286 = vmatprep.subr.mxu0 0.0
    %1287 = vmatpush1.xpose.msra.mxu0 0.0
    %1288 = vmatprep.subr.mxu0 0.0
    %1289 = vmatpush1.xpose.msra.mxu0 0.0
    %1290 = vmatprep.subr.mxu0 0.0
    %1291 = vmatpush1.xpose.msra.mxu0 0.0
    %1292 = vmatprep.subr.mxu0 0.0
    %1293 = vmatpush1.xpose.msra.mxu0 0.0
    %1294 = vmatprep.subr.mxu0 0.0
    %1295 = vmatpush1.xpose.msra.mxu0 0.0
    %1296 = vmatprep.subr.mxu0 0.0
    %1297 = vmatpush1.xpose.msra.mxu0 0.0
    %1298 = vmatprep.subr.mxu0 0.0
    %1299 = vmatpush1.xpose.msra.mxu0 0.0
    %1300 = vmatprep.subr.mxu0 0.0
    %1301 = vmatpush1.xpose.msra.mxu0 0.0
    %1302 = vmatprep.mubr.f32.mxu0 0.0
    %1303 = vmatmul.mubr.f32.gmra.mrb[0].mxu0 %v1234
    %v1304 = vpop.f32.mrb[0].mxu0
    %v1305 = vadd.f32 0.0, %v1304
    %v1306 = vpop.f32.mrb[0].mxu0
    %1307 = vdwg.mxu0
    %1308 = vrot.lane.b32.xlu0 %v239, 104
    %v1309 = vpop.permute.xlu0 %1308
    %1310 = vrot.lane.b32.xlu0 %v239, 72
    %v1311 = vpop.permute.xlu0 %1310
    %v1312 = vsel %vm67, %v1309, 0
    %v1314 = vsel %vm67, %v1311, 0
    %1316 = vmatprep.subr.mxu0 0.0
    %1317 = vmatpush1.xpose.msra.mxu0 %v1314
    %1318 = vmatprep.subr.mxu0 0.0
    %1319 = vmatpush1.xpose.msra.mxu0 0.0
    %1320 = vmatprep.subr.mxu0 0.0
    %1321 = vmatpush1.xpose.msra.mxu0 0.0
    %1322 = vmatprep.subr.mxu0 0.0
    %1323 = vmatpush1.xpose.msra.mxu0 0.0
    %1324 = vmatprep.subr.mxu0 0.0
    %1325 = vmatpush1.xpose.msra.mxu0 0.0
    %1326 = vmatprep.subr.mxu0 0.0
    %1327 = vmatpush1.xpose.msra.mxu0 0.0
    %1328 = vmatprep.subr.mxu0 0.0
    %1329 = vmatpush1.xpose.msra.mxu0 0.0
    %1330 = vmatprep.subr.mxu0 0.0
    %1331 = vmatpush1.xpose.msra.mxu0 0.0
    %1332 = vmatprep.subr.mxu0 0.0
    %1333 = vmatpush1.xpose.msra.mxu0 0.0
    %1334 = vmatprep.subr.mxu0 0.0
    %1335 = vmatpush1.xpose.msra.mxu0 0.0
    %1336 = vmatprep.subr.mxu0 0.0
    %1337 = vmatpush1.xpose.msra.mxu0 0.0
    %1338 = vmatprep.subr.mxu0 0.0
    %1339 = vmatpush1.xpose.msra.mxu0 0.0
    %1340 = vmatprep.subr.mxu0 0.0
    %1341 = vmatpush1.xpose.msra.mxu0 0.0
    %1342 = vmatprep.subr.mxu0 0.0
    %1343 = vmatpush1.xpose.msra.mxu0 0.0
    %1344 = vmatprep.subr.mxu0 0.0
    %1345 = vmatpush1.xpose.msra.mxu0 0.0
    %1346 = vmatprep.subr.mxu0 0.0
    %1347 = vmatpush1.xpose.msra.mxu0 0.0
    %1348 = vmatprep.subr.mxu0 0.0
    %1349 = vmatpush1.xpose.msra.mxu0 0.0
    %1350 = vmatprep.subr.mxu0 0.0
    %1351 = vmatpush1.xpose.msra.mxu0 0.0
    %1352 = vmatprep.subr.mxu0 0.0
    %1353 = vmatpush1.xpose.msra.mxu0 0.0
    %1354 = vmatprep.subr.mxu0 0.0
    %1355 = vmatpush1.xpose.msra.mxu0 0.0
    %1356 = vmatprep.subr.mxu0 0.0
    %1357 = vmatpush1.xpose.msra.mxu0 0.0
    %1358 = vmatprep.subr.mxu0 0.0
    %1359 = vmatpush1.xpose.msra.mxu0 0.0
    %1360 = vmatprep.subr.mxu0 0.0
    %1361 = vmatpush1.xpose.msra.mxu0 0.0
    %1362 = vmatprep.subr.mxu0 0.0
    %1363 = vmatpush1.xpose.msra.mxu0 0.0
    %1364 = vmatprep.subr.mxu0 0.0
    %1365 = vmatpush1.xpose.msra.mxu0 0.0
    %1366 = vmatprep.subr.mxu0 0.0
    %1367 = vmatpush1.xpose.msra.mxu0 0.0
    %1368 = vmatprep.subr.mxu0 0.0
    %1369 = vmatpush1.xpose.msra.mxu0 0.0
    %1370 = vmatprep.subr.mxu0 0.0
    %1371 = vmatpush1.xpose.msra.mxu0 0.0
    %1372 = vmatprep.subr.mxu0 0.0
    %1373 = vmatpush1.xpose.msra.mxu0 0.0
    %1374 = vmatprep.subr.mxu0 0.0
    %1375 = vmatpush1.xpose.msra.mxu0 0.0
    %1376 = vmatprep.subr.mxu0 0.0
    %1377 = vmatpush1.xpose.msra.mxu0 0.0
    %1378 = vmatprep.subr.mxu0 0.0
    %1379 = vmatpush1.xpose.msra.mxu0 0.0
    %1380 = vmatprep.mubr.f32.mxu0 0.0
    %1381 = vmatmul.mubr.f32.gmra.mrb[0].mxu0 %v1312
    %v1382 = vpop.f32.mrb[0].mxu0
    %v1383 = vadd.f32 0.0, %v1382
    %v1384 = vpop.f32.mrb[0].mxu0
    %1385 = vdwg.mxu0
    %v1386 = vsel %vm67, %v1305, -inf
    %1387 = vmax.xlane.f32.xlu0 %v1386
    %v1388 = vpop.xlane.xlu0 %1387
    %v1389 = vsel %vm67, %v1383, -inf
    %1390 = vmax.xlane.f32.xlu0 %v1389
    %v1391 = vpop.xlane.xlu0 %1390
    %v1392 = vsub.f32 %v1305, %v1388
    %v1393 = vsub.f32 %v1383, %v1391
    %v1394 = vmul.f32 %v1392, 1.442695
    %v1395 = vpow.pop %v1394
    %v1396 = vmul.f32 %v1393, 1.442695
    %v1397 = vpow.pop %v1396
    %v1398 = vsel %vm67, %v1395, 0.0
    %1399 = vadd.xlane.f32.xlu0 %v1398
    %v1400 = vpop.xlane.xlu0 %1399
    %v1401 = vsel %vm67, %v1397, 0.0
    %1402 = vadd.xlane.f32.xlu0 %v1401
    %v1403 = vpop.xlane.xlu0 %1402
    %v1404 = vrcp.pop %v1400
    %v1405 = vrcp.pop %v1403
    %v1406 = vmul.f32 %v1395, %v1404
    %v1407 = vmul.f32 %v1397, %v1405
    %1408 = vrot.lane.b32.xlu0 %v234, 40
    %v1409 = vpop.permute.xlu0 %1408
    %v1412 = vsel %vm67, %v1406, 0
    %1414 = vmatprep.subr.mxu0 0.0
    %1415 = vmatpush1.msra.mxu0 %v1409
    %1416 = vmatprep.subr.mxu0 0.0
    %1417 = vmatpush1.msra.mxu0 0.0
    %1418 = vmatprep.subr.mxu0 0.0
    %1419 = vmatpush1.msra.mxu0 0.0
    %1420 = vmatprep.subr.mxu0 0.0
    %1421 = vmatpush1.msra.mxu0 0.0
    %1422 = vmatprep.subr.mxu0 0.0
    %1423 = vmatpush1.msra.mxu0 0.0
    %1424 = vmatprep.subr.mxu0 0.0
    %1425 = vmatpush1.msra.mxu0 0.0
    %1426 = vmatprep.subr.mxu0 0.0
    %1427 = vmatpush1.msra.mxu0 0.0
    %1428 = vmatprep.subr.mxu0 0.0
    %1429 = vmatpush1.msra.mxu0 0.0
    %1430 = vmatprep.subr.mxu0 0.0
    %1431 = vmatpush1.msra.mxu0 0.0
    %1432 = vmatprep.subr.mxu0 0.0
    %1433 = vmatpush1.msra.mxu0 0.0
    %1434 = vmatprep.subr.mxu0 0.0
    %1435 = vmatpush1.msra.mxu0 0.0
    %1436 = vmatprep.subr.mxu0 0.0
    %1437 = vmatpush1.msra.mxu0 0.0
    %1438 = vmatprep.subr.mxu0 0.0
    %1439 = vmatpush1.msra.mxu0 0.0
    %1440 = vmatprep.subr.mxu0 0.0
    %1441 = vmatpush1.msra.mxu0 0.0
    %1442 = vmatprep.subr.mxu0 0.0
    %1443 = vmatpush1.msra.mxu0 0.0
    %1444 = vmatprep.subr.mxu0 0.0
    %1445 = vmatpush1.msra.mxu0 0.0
    %1446 = vmatprep.subr.mxu0 0.0
    %1447 = vmatpush1.msra.mxu0 0.0
    %1448 = vmatprep.subr.mxu0 0.0
    %1449 = vmatpush1.msra.mxu0 0.0
    %1450 = vmatprep.subr.mxu0 0.0
    %1451 = vmatpush1.msra.mxu0 0.0
    %1452 = vmatprep.subr.mxu0 0.0
    %1453 = vmatpush1.msra.mxu0 0.0
    %1454 = vmatprep.subr.mxu0 0.0
    %1455 = vmatpush1.msra.mxu0 0.0
    %1456 = vmatprep.subr.mxu0 0.0
    %1457 = vmatpush1.msra.mxu0 0.0
    %1458 = vmatprep.subr.mxu0 0.0
    %1459 = vmatpush1.msra.mxu0 0.0
    %1460 = vmatprep.subr.mxu0 0.0
    %1461 = vmatpush1.msra.mxu0 0.0
    %1462 = vmatprep.subr.mxu0 0.0
    %1463 = vmatpush1.msra.mxu0 0.0
    %1464 = vmatprep.subr.mxu0 0.0
    %1465 = vmatpush1.msra.mxu0 0.0
    %1466 = vmatprep.subr.mxu0 0.0
    %1467 = vmatpush1.msra.mxu0 0.0
    %1468 = vmatprep.subr.mxu0 0.0
    %1469 = vmatpush1.msra.mxu0 0.0
    %1470 = vmatprep.subr.mxu0 0.0
    %1471 = vmatpush1.msra.mxu0 0.0
    %1472 = vmatprep.subr.mxu0 0.0
    %1473 = vmatpush1.msra.mxu0 0.0
    %1474 = vmatprep.subr.mxu0 0.0
    %1475 = vmatpush1.msra.mxu0 0.0
    %1476 = vmatprep.subr.mxu0 0.0
    %1477 = vmatpush1.msra.mxu0 0.0
    %1478 = vmatprep.mubr.f32.mxu0 0.0
    %1479 = vmatmul.mubr.f32.gmra.mrb[0].mxu0 %v1412
    %v1480 = vpop.f32.mrb[0].mxu0
    %v1481 = vadd.f32 0.0, %v1480
    %v1482 = vpop.f32.mrb[0].mxu0
    %1483 = vdwg.mxu0
    %1484 = vrot.lane.b32.xlu0 %v239, 40
    %v1485 = vpop.permute.xlu0 %1484
    %v1488 = vsel %vm67, %v1407, 0
    %1490 = vmatprep.subr.mxu0 0.0
    %1491 = vmatpush1.msra.mxu0 %v1485
    %1492 = vmatprep.subr.mxu0 0.0
    %1493 = vmatpush1.msra.mxu0 0.0
    %1494 = vmatprep.subr.mxu0 0.0
    %1495 = vmatpush1.msra.mxu0 0.0
    %1496 = vmatprep.subr.mxu0 0.0
    %1497 = vmatpush1.msra.mxu0 0.0
    %1498 = vmatprep.subr.mxu0 0.0
    %1499 = vmatpush1.msra.mxu0 0.0
    %1500 = vmatprep.subr.mxu0 0.0
    %1501 = vmatpush1.msra.mxu0 0.0
    %1502 = vmatprep.subr.mxu0 0.0
    %1503 = vmatpush1.msra.mxu0 0.0
    %1504 = vmatprep.subr.mxu0 0.0
    %1505 = vmatpush1.msra.mxu0 0.0
    %1506 = vmatprep.subr.mxu0 0.0
    %1507 = vmatpush1.msra.mxu0 0.0
    %1508 = vmatprep.subr.mxu0 0.0
    %1509 = vmatpush1.msra.mxu0 0.0
    %1510 = vmatprep.subr.mxu0 0.0
    %1511 = vmatpush1.msra.mxu0 0.0
    %1512 = vmatprep.subr.mxu0 0.0
    %1513 = vmatpush1.msra.mxu0 0.0
    %1514 = vmatprep.subr.mxu0 0.0
    %1515 = vmatpush1.msra.mxu0 0.0
    %1516 = vmatprep.subr.mxu0 0.0
    %1517 = vmatpush1.msra.mxu0 0.0
    %1518 = vmatprep.subr.mxu0 0.0
    %1519 = vmatpush1.msra.mxu0 0.0
    %1520 = vmatprep.subr.mxu0 0.0
    %1521 = vmatpush1.msra.mxu0 0.0
    %1522 = vmatprep.subr.mxu0 0.0
    %1523 = vmatpush1.msra.mxu0 0.0
    %1524 = vmatprep.subr.mxu0 0.0
    %1525 = vmatpush1.msra.mxu0 0.0
    %1526 = vmatprep.subr.mxu0 0.0
    %1527 = vmatpush1.msra.mxu0 0.0
    %1528 = vmatprep.subr.mxu0 0.0
    %1529 = vmatpush1.msra.mxu0 0.0
    %1530 = vmatprep.subr.mxu0 0.0
    %1531 = vmatpush1.msra.mxu0 0.0
    %1532 = vmatprep.subr.mxu0 0.0
    %1533 = vmatpush1.msra.mxu0 0.0
    %1534 = vmatprep.subr.mxu0 0.0
    %1535 = vmatpush1.msra.mxu0 0.0
    %1536 = vmatprep.subr.mxu0 0.0
    %1537 = vmatpush1.msra.mxu0 0.0
    %1538 = vmatprep.subr.mxu0 0.0
    %1539 = vmatpush1.msra.mxu0 0.0
    %1540 = vmatprep.subr.mxu0 0.0
    %1541 = vmatpush1.msra.mxu0 0.0
    %1542 = vmatprep.subr.mxu0 0.0
    %1543 = vmatpush1.msra.mxu0 0.0
    %1544 = vmatprep.subr.mxu0 0.0
    %1545 = vmatpush1.msra.mxu0 0.0
    %1546 = vmatprep.subr.mxu0 0.0
    %1547 = vmatpush1.msra.mxu0 0.0
    %1548 = vmatprep.subr.mxu0 0.0
    %1549 = vmatpush1.msra.mxu0 0.0
    %1550 = vmatprep.subr.mxu0 0.0
    %1551 = vmatpush1.msra.mxu0 0.0
    %1552 = vmatprep.subr.mxu0 0.0
    %1553 = vmatpush1.msra.mxu0 0.0
    %1554 = vmatprep.mubr.f32.mxu0 0.0
    %1555 = vmatmul.mubr.f32.gmra.mrb[0].mxu0 %v1488
    %v1556 = vpop.f32.mrb[0].mxu0
    %v1557 = vadd.f32 0.0, %v1556
    %v1558 = vpop.f32.mrb[0].mxu0
    %1559 = vdwg.mxu0
    %1562 = vrot.lane.b32.xlu0 %v821, 8
    %v1563 = vpop.permute.xlu0 %1562
    %1564 = vrot.lane.b32.xlu0 %v897, 8
    %v1565 = vpop.permute.xlu0 %1564
    %1570 = vrot.lane.b32.xlu0 %v1151, 16
    %v1571 = vpop.permute.xlu0 %1570
    %1572 = vrot.lane.b32.xlu0 %v1227, 16
    %v1573 = vpop.permute.xlu0 %1572
    %1578 = vrot.lane.b32.xlu0 %v1481, 24
    %v1579 = vpop.permute.xlu0 %1578
    %1580 = vrot.lane.b32.xlu0 %v1557, 24
    %v1581 = vpop.permute.xlu0 %1580
    %v1584 = vsel %vm67, %v491, %v1563
    %v1585 = vsel %vm67, %v567, %v1565
    %vm1586 = vcmask 130048
    %v1587 = vsel %vm1586, %v1584, %v1571
    %v1588 = vsel %vm1586, %v1585, %v1573
    %vm1589 = vcmask 195584
    %v1590 = vsel %vm1589, %v1587, %v1579
    %v1591 = vsel %vm1589, %v1588, %v1581
    %v1592 = vld [vmem:[%s5] sm:$0xff]
    %v1593 = vld [vmem:[%s5 + $0x8] sm:$0xff]
    %v1594 = vld [vmem:[%s5 + $0x10] sm:$0xff]
    %v1595 = vld [vmem:[%s5 + $0x18] sm:$0xff]
    %v1596 = vld [vmem:[%s6] sm:$0x1]
    %v1598 = vlaneseq
    %v1599 = vshrl.u32 %v1598, 7
    %v1600 = vsub.s32 0, %v1599
    %v1601 = vrot.slane %v1596, %v1600
    %v1604 = vsel %vm160, %v1590, 0
    %v1607 = vsel %vm160, %v1591, 0
    %1609 = vmatprep.subr.mxu0 0.0
    %1610 = vmatpush1.msra.mxu0 %v1592
    %1611 = vmatprep.subr.mxu0 0.0
    %1612 = vmatpush1.msra.mxu0 %v1593
    %1613 = vmatprep.subr.mxu0 0.0
    %1614 = vmatpush1.msra.mxu0 %v1594
    %1615 = vmatprep.subr.mxu0 0.0
    %1616 = vmatpush1.msra.mxu0 %v1595
    %1617 = vmatprep.subr.mxu0 0.0
    %1618 = vmatpush1.msra.mxu0 0.0
    %1619 = vmatprep.subr.mxu0 0.0
    %1620 = vmatpush1.msra.mxu0 0.0
    %1621 = vmatprep.subr.mxu0 0.0
    %1622 = vmatpush1.msra.mxu0 0.0
    %1623 = vmatprep.subr.mxu0 0.0
    %1624 = vmatpush1.msra.mxu0 0.0
    %1625 = vmatprep.subr.mxu0 0.0
    %1626 = vmatpush1.msra.mxu0 0.0
    %1627 = vmatprep.subr.mxu0 0.0
    %1628 = vmatpush1.msra.mxu0 0.0
    %1629 = vmatprep.subr.mxu0 0.0
    %1630 = vmatpush1.msra.mxu0 0.0
    %1631 = vmatprep.subr.mxu0 0.0
    %1632 = vmatpush1.msra.mxu0 0.0
    %1633 = vmatprep.subr.mxu0 0.0
    %1634 = vmatpush1.msra.mxu0 0.0
    %1635 = vmatprep.subr.mxu0 0.0
    %1636 = vmatpush1.msra.mxu0 0.0
    %1637 = vmatprep.subr.mxu0 0.0
    %1638 = vmatpush1.msra.mxu0 0.0
    %1639 = vmatprep.subr.mxu0 0.0
    %1640 = vmatpush1.msra.mxu0 0.0
    %1641 = vmatprep.subr.mxu0 0.0
    %1642 = vmatpush1.msra.mxu0 0.0
    %1643 = vmatprep.subr.mxu0 0.0
    %1644 = vmatpush1.msra.mxu0 0.0
    %1645 = vmatprep.subr.mxu0 0.0
    %1646 = vmatpush1.msra.mxu0 0.0
    %1647 = vmatprep.subr.mxu0 0.0
    %1648 = vmatpush1.msra.mxu0 0.0
    %1649 = vmatprep.subr.mxu0 0.0
    %1650 = vmatpush1.msra.mxu0 0.0
    %1651 = vmatprep.subr.mxu0 0.0
    %1652 = vmatpush1.msra.mxu0 0.0
    %1653 = vmatprep.subr.mxu0 0.0
    %1654 = vmatpush1.msra.mxu0 0.0
    %1655 = vmatprep.subr.mxu0 0.0
    %1656 = vmatpush1.msra.mxu0 0.0
    %1657 = vmatprep.subr.mxu0 0.0
    %1658 = vmatpush1.msra.mxu0 0.0
    %1659 = vmatprep.subr.mxu0 0.0
    %1660 = vmatpush1.msra.mxu0 0.0
    %1661 = vmatprep.subr.mxu0 0.0
    %1662 = vmatpush1.msra.mxu0 0.0
    %1663 = vmatprep.subr.mxu0 0.0
    %1664 = vmatpush1.msra.mxu0 0.0
    %1665 = vmatprep.subr.mxu0 0.0
    %1666 = vmatpush1.msra.mxu0 0.0
    %1667 = vmatprep.subr.mxu0 0.0
    %1668 = vmatpush1.msra.mxu0 0.0
    %1669 = vmatprep.subr.mxu0 0.0
    %1670 = vmatpush1.msra.mxu0 0.0
    %1671 = vmatprep.subr.mxu0 0.0
    %1672 = vmatpush1.msra.mxu0 0.0
    %1673 = vmatprep.mubr.f32.mxu0 0.0
    %1674 = vmatmul.mubr.f32.gmra.mrb[0].mxu0 %v1604
    %v1675 = vpop.f32.mrb[0].mxu0
    %v1676 = vadd.f32 %v1601, %v1675
    %v1677 = vpop.f32.mrb[0].mxu0
    %1678 = vmatprep.mubr.f32.mxu0 0.0
    %1679 = vmatmul.mubr.f32.gmra.mrb[0].mxu0 %v1607
    %v1680 = vpop.f32.mrb[0].mxu0
    %v1681 = vadd.f32 %v1601, %v1680
    %v1682 = vpop.f32.mrb[0].mxu0
    %1683 = vdwg.mxu0
    %v1684 = vadd.f32 %v141, %v1676
    %v1685 = vadd.f32 %v146, %v1681
    %v1686 = vld [vmem:[%s11] sm:$0x1]
    %v1687 = vld [vmem:[%s12] sm:$0x1]
    %v1688 = vsel %vm160, %v1684, 0.0
    %1689 = vadd.xlane.f32.xlu0 %v1688
    %v1690 = vpop.xlane.xlu0 %1689
    %v1691 = vsel %vm160, %v1685, 0.0
    %1692 = vadd.xlane.f32.xlu0 %v1691
    %v1693 = vpop.xlane.xlu0 %1692
    %v1694 = vrcp.pop 32.0
    %v1695 = vmul.f32 %v1690, %v1694
    %v1696 = vmul.f32 %v1693, %v1694
    %v1697 = vsub.f32 %v1684, %v1695
    %v1698 = vsub.f32 %v1685, %v1696
    %v1699 = vmul.f32 %v1697, %v1697
    %v1700 = vmul.f32 %v1698, %v1698
    %v1701 = vsel %vm160, %v1699, 0.0
    %1702 = vadd.xlane.f32.xlu0 %v1701
    %v1703 = vpop.xlane.xlu0 %1702
    %v1704 = vsel %vm160, %v1700, 0.0
    %1705 = vadd.xlane.f32.xlu0 %v1704
    %v1706 = vpop.xlane.xlu0 %1705
    %v1707 = vmul.f32 %v1703, %v1694
    %v1708 = vmul.f32 %v1706, %v1694
    %v1709 = vadd.f32 %v1707, 1e-05
    %v1710 = vadd.f32 %v1708, 1e-05
    %v1711 = vrsqrt.pop %v1709
    %v1712 = vrsqrt.pop %v1710
    %v1713 = vmul.f32 %v1697, %v1711
    %v1714 = vmul.f32 %v1698, %v1712
    %v1716 = vlaneseq
    %v1717 = vshrl.u32 %v1716, 7
    %v1718 = vsub.s32 0, %v1717
    %v1719 = vrot.slane %v1686, %v1718
    %v1721 = vmul.f32 %v1713, %v1719
    %v1722 = vmul.f32 %v1714, %v1719
    %v1724 = vlaneseq
    %v1725 = vshrl.u32 %v1724, 7
    %v1726 = vsub.s32 0, %v1725
    %v1727 = vrot.slane %v1687, %v1726
    %v1729 = vadd.f32 %v1721, %v1727
    %v1730 = vadd.f32 %v1722, %v1727
    %v1731 = vld [vmem:[%s7] sm:$0xff]
    %v1732 = vld [vmem:[%s7 + $0x8] sm:$0xff]
    %v1733 = vld [vmem:[%s7 + $0x10] sm:$0xff]
    %v1734 = vld [vmem:[%s7 + $0x18] sm:$0xff]
    %v1735 = vld [vmem:[%s8] sm:$0x1]
    %v1737 = vlaneseq
    %v1738 = vshrl.u32 %v1737, 7
    %v1739 = vsub.s32 0, %v1738
    %v1740 = vrot.slane %v1735, %v1739
    %v1743 = vsel %vm160, %v1729, 0
    %v1746 = vsel %vm160, %v1730, 0
    %1748 = vmatprep.subr.mxu0 0.0
    %1749 = vmatpush1.msra.mxu0 %v1731
    %1750 = vmatprep.subr.mxu0 0.0
    %1751 = vmatpush1.msra.mxu0 %v1732
    %1752 = vmatprep.subr.mxu0 0.0
    %1753 = vmatpush1.msra.mxu0 %v1733
    %1754 = vmatprep.subr.mxu0 0.0
    %1755 = vmatpush1.msra.mxu0 %v1734
    %1756 = vmatprep.subr.mxu0 0.0
    %1757 = vmatpush1.msra.mxu0 0.0
    %1758 = vmatprep.subr.mxu0 0.0
    %1759 = vmatpush1.msra.mxu0 0.0
    %1760 = vmatprep.subr.mxu0 0.0
    %1761 = vmatpush1.msra.mxu0 0.0
    %1762 = vmatprep.subr.mxu0 0.0
    %1763 = vmatpush1.msra.mxu0 0.0
    %1764 = vmatprep.subr.mxu0 0.0
    %1765 = vmatpush1.msra.mxu0 0.0
    %1766 = vmatprep.subr.mxu0 0.0
    %1767 = vmatpush1.msra.mxu0 0.0
    %1768 = vmatprep.subr.mxu0 0.0
    %1769 = vmatpush1.msra.mxu0 0.0
    %1770 = vmatprep.subr.mxu0 0.0
    %1771 = vmatpush1.msra.mxu0 0.0
    %1772 = vmatprep.subr.mxu0 0.0
    %1773 = vmatpush1.msra.mxu0 0.0
    %1774 = vmatprep.subr.mxu0 0.0
    %1775 = vmatpush1.msra.mxu0 0.0
    %1776 = vmatprep.subr.mxu0 0.0
    %1777 = vmatpush1.msra.mxu0 0.0
    %1778 = vmatprep.subr.mxu0 0.0
    %1779 = vmatpush1.msra.mxu0 0.0
    %1780 = vmatprep.subr.mxu0 0.0
    %1781 = vmatpush1.msra.mxu0 0.0
    %1782 = vmatprep.subr.mxu0 0.0
    %1783 = vmatpush1.msra.mxu0 0.0
    %1784 = vmatprep.subr.mxu0 0.0
    %1785 = vmatpush1.msra.mxu0 0.0
    %1786 = vmatprep.subr.mxu0 0.0
    %1787 = vmatpush1.msra.mxu0 0.0
    %1788 = vmatprep.subr.mxu0 0.0
    %1789 = vmatpush1.msra.mxu0 0.0
    %1790 = vmatprep.subr.mxu0 0.0
    %1791 = vmatpush1.msra.mxu0 0.0
    %1792 = vmatprep.subr.mxu0 0.0
    %1793 = vmatpush1.msra.mxu0 0.0
    %1794 = vmatprep.subr.mxu0 0.0
    %1795 = vmatpush1.msra.mxu0 0.0
    %1796 = vmatprep.subr.mxu0 0.0
    %1797 = vmatpush1.msra.mxu0 0.0
    %1798 = vmatprep.subr.mxu0 0.0
    %1799 = vmatpush1.msra.mxu0 0.0
    %1800 = vmatprep.subr.mxu0 0.0
    %1801 = vmatpush1.msra.mxu0 0.0
    %1802 = vmatprep.subr.mxu0 0.0
    %1803 = vmatpush1.msra.mxu0 0.0
    %1804 = vmatprep.subr.mxu0 0.0
    %1805 = vmatpush1.msra.mxu0 0.0
    %1806 = vmatprep.subr.mxu0 0.0
    %1807 = vmatpush1.msra.mxu0 0.0
    %1808 = vmatprep.subr.mxu0 0.0
    %1809 = vmatpush1.msra.mxu0 0.0
    %1810 = vmatprep.subr.mxu0 0.0
    %1811 = vmatpush1.msra.mxu0 0.0
    %1812 = vmatprep.mubr.f32.mxu0 0.0
    %1813 = vmatmul.mubr.f32.gmra.mrb[0].mxu0 %v1743
    %v1814 = vpop.f32.mrb[0].mxu0
    %v1815 = vadd.f32 %v1740, %v1814
    %v1816 = vpop.f32.mrb[0].mxu0
    %1817 = vmatprep.mubr.f32.mxu0 0.0
    %1818 = vmatmul.mubr.f32.gmra.mrb[0].mxu0 %v1746
    %v1819 = vpop.f32.mrb[0].mxu0
    %v1820 = vadd.f32 %v1740, %v1819
    %v1821 = vpop.f32.mrb[0].mxu0
    %1822 = vdwg.mxu0
    %v1823 = vmax.f32 %v1815, 0.0
    %v1824 = vmax.f32 %v1820, 0.0
    %v1825 = vld [vmem:[%s9] sm:$0xff]
    %v1826 = vld [vmem:[%s9 + $0x8] sm:$0xff]
    %v1827 = vld [vmem:[%s9 + $0x10] sm:$0xff]
    %v1828 = vld [vmem:[%s9 + $0x18] sm:$0xff]
    %v1829 = vld [vmem:[%s9 + $0x20] sm:$0xff]
    %v1830 = vld [vmem:[%s9 + $0x28] sm:$0xff]
    %v1831 = vld [vmem:[%s9 + $0x30] sm:$0xff]
    %v1832 = vld [vmem:[%s9 + $0x38] sm:$0xff]
    %v1833 = vld [vmem:[%s9 + $0x40] sm:$0xff]
    %v1834 = vld [vmem:[%s9 + $0x48] sm:$0xff]
    %v1835 = vld [vmem:[%s9 + $0x50] sm:$0xff]
    %v1836 = vld [vmem:[%s9 + $0x58] sm:$0xff]
    %v1837 = vld [vmem:[%s9 + $0x60] sm:$0xff]
    %v1838 = vld [vmem:[%s9 + $0x68] sm:$0xff]
    %v1839 = vld [vmem:[%s9 + $0x70] sm:$0xff]
    %v1840 = vld [vmem:[%s9 + $0x78] sm:$0xff]
    %v1841 = vld [vmem:[%s10] sm:$0x1]
    %v1843 = vlaneseq
    %v1844 = vshrl.u32 %v1843, 7
    %v1845 = vsub.s32 0, %v1844
    %v1846 = vrot.slane %v1841, %v1845
    %1848 = vmatprep.subr.mxu0 0.0
    %1849 = vmatpush1.msra.mxu0 %v1825
    %1850 = vmatprep.subr.mxu0 0.0
    %1851 = vmatpush1.msra.mxu0 %v1826
    %1852 = vmatprep.subr.mxu0 0.0
    %1853 = vmatpush1.msra.mxu0 %v1827
    %1854 = vmatprep.subr.mxu0 0.0
    %1855 = vmatpush1.msra.mxu0 %v1828
    %1856 = vmatprep.subr.mxu0 0.0
    %1857 = vmatpush1.msra.mxu0 %v1829
    %1858 = vmatprep.subr.mxu0 0.0
    %1859 = vmatpush1.msra.mxu0 %v1830
    %1860 = vmatprep.subr.mxu0 0.0
    %1861 = vmatpush1.msra.mxu0 %v1831
    %1862 = vmatprep.subr.mxu0 0.0
    %1863 = vmatpush1.msra.mxu0 %v1832
    %1864 = vmatprep.subr.mxu0 0.0
    %1865 = vmatpush1.msra.mxu0 %v1833
    %1866 = vmatprep.subr.mxu0 0.0
    %1867 = vmatpush1.msra.mxu0 %v1834
    %1868 = vmatprep.subr.mxu0 0.0
    %1869 = vmatpush1.msra.mxu0 %v1835
    %1870 = vmatprep.subr.mxu0 0.0
    %1871 = vmatpush1.msra.mxu0 %v1836
    %1872 = vmatprep.subr.mxu0 0.0
    %1873 = vmatpush1.msra.mxu0 %v1837
    %1874 = vmatprep.subr.mxu0 0.0
    %1875 = vmatpush1.msra.mxu0 %v1838
    %1876 = vmatprep.subr.mxu0 0.0
    %1877 = vmatpush1.msra.mxu0 %v1839
    %1878 = vmatprep.subr.mxu0 0.0
    %1879 = vmatpush1.msra.mxu0 %v1840
    %1880 = vmatprep.subr.mxu0 0.0
    %1881 = vmatpush1.msra.mxu0 0.0
    %1882 = vmatprep.subr.mxu0 0.0
    %1883 = vmatpush1.msra.mxu0 0.0
    %1884 = vmatprep.subr.mxu0 0.0
    %1885 = vmatpush1.msra.mxu0 0.0
    %1886 = vmatprep.subr.mxu0 0.0
    %1887 = vmatpush1.msra.mxu0 0.0
    %1888 = vmatprep.subr.mxu0 0.0
    %1889 = vmatpush1.msra.mxu0 0.0
    %1890 = vmatprep.subr.mxu0 0.0
    %1891 = vmatpush1.msra.mxu0 0.0
    %1892 = vmatprep.subr.mxu0 0.0
    %1893 = vmatpush1.msra.mxu0 0.0
    %1894 = vmatprep.subr.mxu0 0.0
    %1895 = vmatpush1.msra.mxu0 0.0
    %1896 = vmatprep.subr.mxu0 0.0
    %1897 = vmatpush1.msra.mxu0 0.0
    %1898 = vmatprep.subr.mxu0 0.0
    %1899 = vmatpush1.msra.mxu0 0.0
    %1900 = vmatprep.subr.mxu0 0.0
    %1901 = vmatpush1.msra.mxu0 0.0
    %1902 = vmatprep.subr.mxu0 0.0
    %1903 = vmatpush1.msra.mxu0 0.0
    %1904 = vmatprep.subr.mxu0 0.0
    %1905 = vmatpush1.msra.mxu0 0.0
    %1906 = vmatprep.subr.mxu0 0.0
    %1907 = vmatpush1.msra.mxu0 0.0
    %1908 = vmatprep.subr.mxu0 0.0
    %1909 = vmatpush1.msra.mxu0 0.0
    %1910 = vmatprep.subr.mxu0 0.0
    %1911 = vmatpush1.msra.mxu0 0.0
    %1912 = vmatprep.mubr.f32.mxu0 0.0
    %1913 = vmatmul.mubr.f32.gmra.mrb[0].mxu0 %v1823
    %v1914 = vpop.f32.mrb[0].mxu0
    %v1915 = vadd.f32 %v1846, %v1914
    %v1916 = vpop.f32.mrb[0].mxu0
    %1917 = vmatprep.mubr.f32.mxu0 0.0
    %1918 = vmatmul.mubr.f32.gmra.mrb[0].mxu0 %v1824
    %v1919 = vpop.f32.mrb[0].mxu0
    %v1920 = vadd.f32 %v1846, %v1919
    %v1921 = vpop.f32.mrb[0].mxu0
    %1922 = vdwg.mxu0
    %v1923 = vadd.f32 %v1729, %v1915
    %v1924 = vadd.f32 %v1730, %v1920
    %v1925 = vld [vmem:[%s13] sm:$0x1]
    %v1926 = vld [vmem:[%s14] sm:$0x1]
    %v1927 = vsel %vm160, %v1923, 0.0
    %1928 = vadd.xlane.f32.xlu0 %v1927
    %v1929 = vpop.xlane.xlu0 %1928
    %v1930 = vsel %vm160, %v1924, 0.0
    %1931 = vadd.xlane.f32.xlu0 %v1930
    %v1932 = vpop.xlane.xlu0 %1931
    %v1933 = vmul.f32 %v1929, %v1694
    %v1934 = vmul.f32 %v1932, %v1694
    %v1935 = vsub.f32 %v1923, %v1933
    %v1936 = vsub.f32 %v1924, %v1934
    %v1937 = vmul.f32 %v1935, %v1935
    %v1938 = vmul.f32 %v1936, %v1936
    %v1939 = vsel %vm160, %v1937, 0.0
    %1940 = vadd.xlane.f32.xlu0 %v1939
    %v1941 = vpop.xlane.xlu0 %1940
    %v1942 = vsel %vm160, %v1938, 0.0
    %1943 = vadd.xlane.f32.xlu0 %v1942
    %v1944 = vpop.xlane.xlu0 %1943
    %v1945 = vmul.f32 %v1941, %v1694
    %v1946 = vmul.f32 %v1944, %v1694
    %v1947 = vadd.f32 %v1945, 1e-05
    %v1948 = vadd.f32 %v1946, 1e-05
    %v1949 = vrsqrt.pop %v1947
    %v1950 = vrsqrt.pop %v1948
    %v1951 = vmul.f32 %v1935, %v1949
    %v1952 = vmul.f32 %v1936, %v1950
    %v1954 = vlaneseq
    %v1955 = vshrl.u32 %v1954, 7
    %v1956 = vsub.s32 0, %v1955
    %v1957 = vrot.slane %v1925, %v1956
    %v1959 = vmul.f32 %v1951, %v1957
    %v1960 = vmul.f32 %v1952, %v1957
    %v1962 = vlaneseq
    %v1963 = vshrl.u32 %v1962, 7
    %v1964 = vsub.s32 0, %v1963
    %v1965 = vrot.slane %v1926, %v1964
    %v1967 = vadd.f32 %v1959, %v1965
    %v1968 = vadd.f32 %v1960, %v1965
    %s1969 = scalar_lea.vmem %s3, 32
    %v1970 = vld [vmem:[%s1969] sm:$0xff]
    %v1971 = vld [vmem:[%s1969 + $0x8] sm:$0xff]
    %v1972 = vld [vmem:[%s1969 + $0x10] sm:$0xff]
    %v1973 = vld [vmem:[%s1969 + $0x18] sm:$0xff]
    %s1974 = scalar_lea.vmem %s4, 1
    %v1975 = vld [vmem:[%s1974] sm:$0x1]
    %v1977 = vlaneseq
    %v1978 = vshrl.u32 %v1977, 7
    %v1979 = vsub.s32 0, %v1978
    %v1980 = vrot.slane %v1975, %v1979
    %v1983 = vsel %vm160, %v1967, 0
    %v1986 = vsel %vm160, %v1968, 0
    %1988 = vmatprep.subr.mxu0 0.0
    %1989 = vmatpush1.msra.mxu0 %v1970
    %1990 = vmatprep.subr.mxu0 0.0
    %1991 = vmatpush1.msra.mxu0 %v1971
    %1992 = vmatprep.subr.mxu0 0.0
    %1993 = vmatpush1.msra.mxu0 %v1972
    %1994 = vmatprep.subr.mxu0 0.0
    %1995 = vmatpush1.msra.mxu0 %v1973
    %1996 = vmatprep.subr.mxu0 0.0
    %1997 = vmatpush1.msra.mxu0 0.0
    %1998 = vmatprep.subr.mxu0 0.0
    %1999 = vmatpush1.msra.mxu0 0.0
    %2000 = vmatprep.subr.mxu0 0.0
    %2001 = vmatpush1.msra.mxu0 0.0
    %2002 = vmatprep.subr.mxu0 0.0
    %2003 = vmatpush1.msra.mxu0 0.0
    %2004 = vmatprep.subr.mxu0 0.0
    %2005 = vmatpush1.msra.mxu0 0.0
    %2006 = vmatprep.subr.mxu0 0.0
    %2007 = vmatpush1.msra.mxu0 0.0
    %2008 = vmatprep.subr.mxu0 0.0
    %2009 = vmatpush1.msra.mxu0 0.0
    %2010 = vmatprep.subr.mxu0 0.0
    %2011 = vmatpush1.msra.mxu0 0.0
    %2012 = vmatprep.subr.mxu0 0.0
    %2013 = vmatpush1.msra.mxu0 0.0
    %2014 = vmatprep.subr.mxu0 0.0
    %2015 = vmatpush1.msra.mxu0 0.0
    %2016 = vmatprep.subr.mxu0 0.0
    %2017 = vmatpush1.msra.mxu0 0.0
    %2018 = vmatprep.subr.mxu0 0.0
    %2019 = vmatpush1.msra.mxu0 0.0
    %2020 = vmatprep.subr.mxu0 0.0
    %2021 = vmatpush1.msra.mxu0 0.0
    %2022 = vmatprep.subr.mxu0 0.0
    %2023 = vmatpush1.msra.mxu0 0.0
    %2024 = vmatprep.subr.mxu0 0.0
    %2025 = vmatpush1.msra.mxu0 0.0
    %2026 = vmatprep.subr.mxu0 0.0
    %2027 = vmatpush1.msra.mxu0 0.0
    %2028 = vmatprep.subr.mxu0 0.0
    %2029 = vmatpush1.msra.mxu0 0.0
    %2030 = vmatprep.subr.mxu0 0.0
    %2031 = vmatpush1.msra.mxu0 0.0
    %2032 = vmatprep.subr.mxu0 0.0
    %2033 = vmatpush1.msra.mxu0 0.0
    %2034 = vmatprep.subr.mxu0 0.0
    %2035 = vmatpush1.msra.mxu0 0.0
    %2036 = vmatprep.subr.mxu0 0.0
    %2037 = vmatpush1.msra.mxu0 0.0
    %2038 = vmatprep.subr.mxu0 0.0
    %2039 = vmatpush1.msra.mxu0 0.0
    %2040 = vmatprep.subr.mxu0 0.0
    %2041 = vmatpush1.msra.mxu0 0.0
    %2042 = vmatprep.subr.mxu0 0.0
    %2043 = vmatpush1.msra.mxu0 0.0
    %2044 = vmatprep.subr.mxu0 0.0
    %2045 = vmatpush1.msra.mxu0 0.0
    %2046 = vmatprep.subr.mxu0 0.0
    %2047 = vmatpush1.msra.mxu0 0.0
    %2048 = vmatprep.subr.mxu0 0.0
    %2049 = vmatpush1.msra.mxu0 0.0
    %2050 = vmatprep.subr.mxu0 0.0
    %2051 = vmatpush1.msra.mxu0 0.0
    %2052 = vmatprep.mubr.f32.mxu0 0.0
    %2053 = vmatmul.mubr.f32.gmra.mrb[0].mxu0 %v1983
    %v2054 = vpop.f32.mrb[0].mxu0
    %v2055 = vadd.f32 %v1980, %v2054
    %v2056 = vpop.f32.mrb[0].mxu0
    %2057 = vmatprep.mubr.f32.mxu0 0.0
    %2058 = vmatmul.mubr.f32.gmra.mrb[0].mxu0 %v1986
    %v2059 = vpop.f32.mrb[0].mxu0
    %v2060 = vadd.f32 %v1980, %v2059
    %v2061 = vpop.f32.mrb[0].mxu0
    %2062 = vdwg.mxu0
    %2064 = vrot.lane.b32.xlu0 %v2055, 96
    %v2065 = vpop.permute.xlu0 %2064
    %v2066 = vsel %vm67, %v2055, 0
    %v2068 = vsel %vm67, %v2065, 0
    %2070 = vmatprep.subr.mxu0 0.0
    %2071 = vmatpush1.xpose.msra.mxu0 %v2068
    %2072 = vmatprep.subr.mxu0 0.0
    %2073 = vmatpush1.xpose.msra.mxu0 0.0
    %2074 = vmatprep.subr.mxu0 0.0
    %2075 = vmatpush1.xpose.msra.mxu0 0.0
    %2076 = vmatprep.subr.mxu0 0.0
    %2077 = vmatpush1.xpose.msra.mxu0 0.0
    %2078 = vmatprep.subr.mxu0 0.0
    %2079 = vmatpush1.xpose.msra.mxu0 0.0
    %2080 = vmatprep.subr.mxu0 0.0
    %2081 = vmatpush1.xpose.msra.mxu0 0.0
    %2082 = vmatprep.subr.mxu0 0.0
    %2083 = vmatpush1.xpose.msra.mxu0 0.0
    %2084 = vmatprep.subr.mxu0 0.0
    %2085 = vmatpush1.xpose.msra.mxu0 0.0
    %2086 = vmatprep.subr.mxu0 0.0
    %2087 = vmatpush1.xpose.msra.mxu0 0.0
    %2088 = vmatprep.subr.mxu0 0.0
    %2089 = vmatpush1.xpose.msra.mxu0 0.0
    %2090 = vmatprep.subr.mxu0 0.0
    %2091 = vmatpush1.xpose.msra.mxu0 0.0
    %2092 = vmatprep.subr.mxu0 0.0
    %2093 = vmatpush1.xpose.msra.mxu0 0.0
    %2094 = vmatprep.subr.mxu0 0.0
    %2095 = vmatpush1.xpose.msra.mxu0 0.0
    %2096 = vmatprep.subr.mxu0 0.0
    %2097 = vmatpush1.xpose.msra.mxu0 0.0
    %2098 = vmatprep.subr.mxu0 0.0
    %2099 = vmatpush1.xpose.msra.mxu0 0.0
    %2100 = vmatprep.subr.mxu0 0.0
    %2101 = vmatpush1.xpose.msra.mxu0 0.0
    %2102 = vmatprep.subr.mxu0 0.0
    %2103 = vmatpush1.xpose.msra.mxu0 0.0
    %2104 = vmatprep.subr.mxu0 0.0
    %2105 = vmatpush1.xpose.msra.mxu0 0.0
    %2106 = vmatprep.subr.mxu0 0.0
    %2107 = vmatpush1.xpose.msra.mxu0 0.0
    %2108 = vmatprep.subr.mxu0 0.0
    %2109 = vmatpush1.xpose.msra.mxu0 0.0
    %2110 = vmatprep.subr.mxu0 0.0
    %2111 = vmatpush1.xpose.msra.mxu0 0.0
    %2112 = vmatprep.subr.mxu0 0.0
    %2113 = vmatpush1.xpose.msra.mxu0 0.0
    %2114 = vmatprep.subr.mxu0 0.0
    %2115 = vmatpush1.xpose.msra.mxu0 0.0
    %2116 = vmatprep.subr.mxu0 0.0
    %2117 = vmatpush1.xpose.msra.mxu0 0.0
    %2118 = vmatprep.subr.mxu0 0.0
    %2119 = vmatpush1.xpose.msra.mxu0 0.0
    %2120 = vmatprep.subr.mxu0 0.0
    %2121 = vmatpush1.xpose.msra.mxu0 0.0
    %2122 = vmatprep.subr.mxu0 0.0
    %2123 = vmatpush1.xpose.msra.mxu0 0.0
    %2124 = vmatprep.subr.mxu0 0.0
    %2125 = vmatpush1.xpose.msra.mxu0 0.0
    %2126 = vmatprep.subr.mxu0 0.0
    %2127 = vmatpush1.xpose.msra.mxu0 0.0
    %2128 = vmatprep.subr.mxu0 0.0
    %2129 = vmatpush1.xpose.msra.mxu0 0.0
    %2130 = vmatprep.subr.mxu0 0.0
    %2131 = vmatpush1.xpose.msra.mxu0 0.0
    %2132 = vmatprep.subr.mxu0 0.0
    %2133 = vmatpush1.xpose.msra.mxu0 0.0
    %2134 = vmatprep.mubr.f32.mxu0 0.0
    %2135 = vmatmul.mubr.f32.gmra.mrb[0].mxu0 %v2066
    %v2136 = vpop.f32.mrb[0].mxu0
    %v2137 = vadd.f32 0.0, %v2136
    %v2138 = vpop.f32.mrb[0].mxu0
    %2139 = vdwg.mxu0
    %2141 = vrot.lane.b32.xlu0 %v2060, 96
    %v2142 = vpop.permute.xlu0 %2141
    %v2143 = vsel %vm67, %v2060, 0
    %v2145 = vsel %vm67, %v2142, 0
    %2147 = vmatprep.subr.mxu0 0.0
    %2148 = vmatpush1.xpose.msra.mxu0 %v2145
    %2149 = vmatprep.subr.mxu0 0.0
    %2150 = vmatpush1.xpose.msra.mxu0 0.0
    %2151 = vmatprep.subr.mxu0 0.0
    %2152 = vmatpush1.xpose.msra.mxu0 0.0
    %2153 = vmatprep.subr.mxu0 0.0
    %2154 = vmatpush1.xpose.msra.mxu0 0.0
    %2155 = vmatprep.subr.mxu0 0.0
    %2156 = vmatpush1.xpose.msra.mxu0 0.0
    %2157 = vmatprep.subr.mxu0 0.0
    %2158 = vmatpush1.xpose.msra.mxu0 0.0
    %2159 = vmatprep.subr.mxu0 0.0
    %2160 = vmatpush1.xpose.msra.mxu0 0.0
    %2161 = vmatprep.subr.mxu0 0.0
    %2162 = vmatpush1.xpose.msra.mxu0 0.0
    %2163 = vmatprep.subr.mxu0 0.0
    %2164 = vmatpush1.xpose.msra.mxu0 0.0
    %2165 = vmatprep.subr.mxu0 0.0
    %2166 = vmatpush1.xpose.msra.mxu0 0.0
    %2167 = vmatprep.subr.mxu0 0.0
    %2168 = vmatpush1.xpose.msra.mxu0 0.0
    %2169 = vmatprep.subr.mxu0 0.0
    %2170 = vmatpush1.xpose.msra.mxu0 0.0
    %2171 = vmatprep.subr.mxu0 0.0
    %2172 = vmatpush1.xpose.msra.mxu0 0.0
    %2173 = vmatprep.subr.mxu0 0.0
    %2174 = vmatpush1.xpose.msra.mxu0 0.0
    %2175 = vmatprep.subr.mxu0 0.0
    %2176 = vmatpush1.xpose.msra.mxu0 0.0
    %2177 = vmatprep.subr.mxu0 0.0
    %2178 = vmatpush1.xpose.msra.mxu0 0.0
    %2179 = vmatprep.subr.mxu0 0.0
    %2180 = vmatpush1.xpose.msra.mxu0 0.0
    %2181 = vmatprep.subr.mxu0 0.0
    %2182 = vmatpush1.xpose.msra.mxu0 0.0
    %2183 = vmatprep.subr.mxu0 0.0
    %2184 = vmatpush1.xpose.msra.mxu0 0.0
    %2185 = vmatprep.subr.mxu0 0.0
    %2186 = vmatpush1.xpose.msra.mxu0 0.0
    %2187 = vmatprep.subr.mxu0 0.0
    %2188 = vmatpush1.xpose.msra.mxu0 0.0
    %2189 = vmatprep.subr.mxu0 0.0
    %2190 = vmatpush1.xpose.msra.mxu0 0.0
    %2191 = vmatprep.subr.mxu0 0.0
    %2192 = vmatpush1.xpose.msra.mxu0 0.0
    %2193 = vmatprep.subr.mxu0 0.0
    %2194 = vmatpush1.xpose.msra.mxu0 0.0
    %2195 = vmatprep.subr.mxu0 0.0
    %2196 = vmatpush1.xpose.msra.mxu0 0.0
    %2197 = vmatprep.subr.mxu0 0.0
    %2198 = vmatpush1.xpose.msra.mxu0 0.0
    %2199 = vmatprep.subr.mxu0 0.0
    %2200 = vmatpush1.xpose.msra.mxu0 0.0
    %2201 = vmatprep.subr.mxu0 0.0
    %2202 = vmatpush1.xpose.msra.mxu0 0.0
    %2203 = vmatprep.subr.mxu0 0.0
    %2204 = vmatpush1.xpose.msra.mxu0 0.0
    %2205 = vmatprep.subr.mxu0 0.0
    %2206 = vmatpush1.xpose.msra.mxu0 0.0
    %2207 = vmatprep.subr.mxu0 0.0
    %2208 = vmatpush1.xpose.msra.mxu0 0.0
    %2209 = vmatprep.subr.mxu0 0.0
    %2210 = vmatpush1.xpose.msra.mxu0 0.0
    %2211 = vmatprep.mubr.f32.mxu0 0.0
    %2212 = vmatmul.mubr.f32.gmra.mrb[0].mxu0 %v2143
    %v2213 = vpop.f32.mrb[0].mxu0
    %v2214 = vadd.f32 0.0, %v2213
    %v2215 = vpop.f32.mrb[0].mxu0
    %2216 = vdwg.mxu0
    %v2217 = vsel %vm67, %v2137, -inf
    %2218 = vmax.xlane.f32.xlu0 %v2217
    %v2219 = vpop.xlane.xlu0 %2218
    %v2220 = vsel %vm67, %v2214, -inf
    %2221 = vmax.xlane.f32.xlu0 %v2220
    %v2222 = vpop.xlane.xlu0 %2221
    %v2223 = vsub.f32 %v2137, %v2219
    %v2224 = vsub.f32 %v2214, %v2222
    %v2225 = vmul.f32 %v2223, 1.442695
    %v2226 = vpow.pop %v2225
    %v2227 = vmul.f32 %v2224, 1.442695
    %v2228 = vpow.pop %v2227
    %v2229 = vsel %vm67, %v2226, 0.0
    %2230 = vadd.xlane.f32.xlu0 %v2229
    %v2231 = vpop.xlane.xlu0 %2230
    %v2232 = vsel %vm67, %v2228, 0.0
    %2233 = vadd.xlane.f32.xlu0 %v2232
    %v2234 = vpop.xlane.xlu0 %2233
    %v2235 = vrcp.pop %v2231
    %v2236 = vrcp.pop %v2234
    %v2237 = vmul.f32 %v2226, %v2235
    %v2238 = vmul.f32 %v2228, %v2236
    %2239 = vrot.lane.b32.xlu0 %v2055, 64
    %v2240 = vpop.permute.xlu0 %2239
    %v2243 = vsel %vm67, %v2237, 0
    %2245 = vmatprep.subr.mxu0 0.0
    %2246 = vmatpush1.msra.mxu0 %v2240
    %2247 = vmatprep.subr.mxu0 0.0
    %2248 = vmatpush1.msra.mxu0 0.0
    %2249 = vmatprep.subr.mxu0 0.0
    %2250 = vmatpush1.msra.mxu0 0.0
    %2251 = vmatprep.subr.mxu0 0.0
    %2252 = vmatpush1.msra.mxu0 0.0
    %2253 = vmatprep.subr.mxu0 0.0
    %2254 = vmatpush1.msra.mxu0 0.0
    %2255 = vmatprep.subr.mxu0 0.0
    %2256 = vmatpush1.msra.mxu0 0.0
    %2257 = vmatprep.subr.mxu0 0.0
    %2258 = vmatpush1.msra.mxu0 0.0
    %2259 = vmatprep.subr.mxu0 0.0
    %2260 = vmatpush1.msra.mxu0 0.0
    %2261 = vmatprep.subr.mxu0 0.0
    %2262 = vmatpush1.msra.mxu0 0.0
    %2263 = vmatprep.subr.mxu0 0.0
    %2264 = vmatpush1.msra.mxu0 0.0
    %2265 = vmatprep.subr.mxu0 0.0
    %2266 = vmatpush1.msra.mxu0 0.0
    %2267 = vmatprep.subr.mxu0 0.0
    %2268 = vmatpush1.msra.mxu0 0.0
    %2269 = vmatprep.subr.mxu0 0.0
    %2270 = vmatpush1.msra.mxu0 0.0
    %2271 = vmatprep.subr.mxu0 0.0
    %2272 = vmatpush1.msra.mxu0 0.0
    %2273 = vmatprep.subr.mxu0 0.0
    %2274 = vmatpush1.msra.mxu0 0.0
    %2275 = vmatprep.subr.mxu0 0.0
    %2276 = vmatpush1.msra.mxu0 0.0
    %2277 = vmatprep.subr.mxu0 0.0
    %2278 = vmatpush1.msra.mxu0 0.0
    %2279 = vmatprep.subr.mxu0 0.0
    %2280 = vmatpush1.msra.mxu0 0.0
    %2281 = vmatprep.subr.mxu0 0.0
    %2282 = vmatpush1.msra.mxu0 0.0
    %2283 = vmatprep.subr.mxu0 0.0
    %2284 = vmatpush1.msra.mxu0 0.0
    %2285 = vmatprep.subr.mxu0 0.0
    %2286 = vmatpush1.msra.mxu0 0.0
    %2287 = vmatprep.subr.mxu0 0.0
    %2288 = vmatpush1.msra.mxu0 0.0
    %2289 = vmatprep.subr.mxu0 0.0
    %2290 = vmatpush1.msra.mxu0 0.0
    %2291 = vmatprep.subr.mxu0 0.0
    %2292 = vmatpush1.msra.mxu0 0.0
    %2293 = vmatprep.subr.mxu0 0.0
    %2294 = vmatpush1.msra.mxu0 0.0
    %2295 = vmatprep.subr.mxu0 0.0
    %2296 = vmatpush1.msra.mxu0 0.0
    %2297 = vmatprep.subr.mxu0 0.0
    %2298 = vmatpush1.msra.mxu0 0.0
    %2299 = vmatprep.subr.mxu0 0.0
    %2300 = vmatpush1.msra.mxu0 0.0
    %2301 = vmatprep.subr.mxu0 0.0
    %2302 = vmatpush1.msra.mxu0 0.0
    %2303 = vmatprep.subr.mxu0 0.0
    %2304 = vmatpush1.msra.mxu0 0.0
    %2305 = vmatprep.subr.mxu0 0.0
    %2306 = vmatpush1.msra.mxu0 0.0
    %2307 = vmatprep.subr.mxu0 0.0
    %2308 = vmatpush1.msra.mxu0 0.0
    %2309 = vmatprep.mubr.f32.mxu0 0.0
    %2310 = vmatmul.mubr.f32.gmra.mrb[0].mxu0 %v2243
    %v2311 = vpop.f32.mrb[0].mxu0
    %v2312 = vadd.f32 0.0, %v2311
    %v2313 = vpop.f32.mrb[0].mxu0
    %2314 = vdwg.mxu0
    %2315 = vrot.lane.b32.xlu0 %v2060, 64
    %v2316 = vpop.permute.xlu0 %2315
    %v2319 = vsel %vm67, %v2238, 0
    %2321 = vmatprep.subr.mxu0 0.0
    %2322 = vmatpush1.msra.mxu0 %v2316
    %2323 = vmatprep.subr.mxu0 0.0
    %2324 = vmatpush1.msra.mxu0 0.0
    %2325 = vmatprep.subr.mxu0 0.0
    %2326 = vmatpush1.msra.mxu0 0.0
    %2327 = vmatprep.subr.mxu0 0.0
    %2328 = vmatpush1.msra.mxu0 0.0
    %2329 = vmatprep.subr.mxu0 0.0
    %2330 = vmatpush1.msra.mxu0 0.0
    %2331 = vmatprep.subr.mxu0 0.0
    %2332 = vmatpush1.msra.mxu0 0.0
    %2333 = vmatprep.subr.mxu0 0.0
    %2334 = vmatpush1.msra.mxu0 0.0
    %2335 = vmatprep.subr.mxu0 0.0
    %2336 = vmatpush1.msra.mxu0 0.0
    %2337 = vmatprep.subr.mxu0 0.0
    %2338 = vmatpush1.msra.mxu0 0.0
    %2339 = vmatprep.subr.mxu0 0.0
    %2340 = vmatpush1.msra.mxu0 0.0
    %2341 = vmatprep.subr.mxu0 0.0
    %2342 = vmatpush1.msra.mxu0 0.0
    %2343 = vmatprep.subr.mxu0 0.0
    %2344 = vmatpush1.msra.mxu0 0.0
    %2345 = vmatprep.subr.mxu0 0.0
    %2346 = vmatpush1.msra.mxu0 0.0
    %2347 = vmatprep.subr.mxu0 0.0
    %2348 = vmatpush1.msra.mxu0 0.0
    %2349 = vmatprep.subr.mxu0 0.0
    %2350 = vmatpush1.msra.mxu0 0.0
    %2351 = vmatprep.subr.mxu0 0.0
    %2352 = vmatpush1.msra.mxu0 0.0
    %2353 = vmatprep.subr.mxu0 0.0
    %2354 = vmatpush1.msra.mxu0 0.0
    %2355 = vmatprep.subr.mxu0 0.0
    %2356 = vmatpush1.msra.mxu0 0.0
    %2357 = vmatprep.subr.mxu0 0.0
    %2358 = vmatpush1.msra.mxu0 0.0
    %2359 = vmatprep.subr.mxu0 0.0
    %2360 = vmatpush1.msra.mxu0 0.0
    %2361 = vmatprep.subr.mxu0 0.0
    %2362 = vmatpush1.msra.mxu0 0.0
    %2363 = vmatprep.subr.mxu0 0.0
    %2364 = vmatpush1.msra.mxu0 0.0
    %2365 = vmatprep.subr.mxu0 0.0
    %2366 = vmatpush1.msra.mxu0 0.0
    %2367 = vmatprep.subr.mxu0 0.0
    %2368 = vmatpush1.msra.mxu0 0.0
    %2369 = vmatprep.subr.mxu0 0.0
    %2370 = vmatpush1.msra.mxu0 0.0
    %2371 = vmatprep.subr.mxu0 0.0
    %2372 = vmatpush1.msra.mxu0 0.0
    %2373 = vmatprep.subr.mxu0 0.0
    %2374 = vmatpush1.msra.mxu0 0.0
    %2375 = vmatprep.subr.mxu0 0.0
    %2376 = vmatpush1.msra.mxu0 0.0
    %2377 = vmatprep.subr.mxu0 0.0
    %2378 = vmatpush1.msra.mxu0 0.0
    %2379 = vmatprep.subr.mxu0 0.0
    %2380 = vmatpush1.msra.mxu0 0.0
    %2381 = vmatprep.subr.mxu0 0.0
    %2382 = vmatpush1.msra.mxu0 0.0
    %2383 = vmatprep.subr.mxu0 0.0
    %2384 = vmatpush1.msra.mxu0 0.0
    %2385 = vmatprep.mubr.f32.mxu0 0.0
    %2386 = vmatmul.mubr.f32.gmra.mrb[0].mxu0 %v2319
    %v2387 = vpop.f32.mrb[0].mxu0
    %v2388 = vadd.f32 0.0, %v2387
    %v2389 = vpop.f32.mrb[0].mxu0
    %2390 = vdwg.mxu0
    %2391 = vrot.lane.b32.xlu0 %v2055, 120
    %v2392 = vpop.permute.xlu0 %2391
    %2393 = vrot.lane.b32.xlu0 %v2055, 88
    %v2394 = vpop.permute.xlu0 %2393
    %v2395 = vsel %vm67, %v2392, 0
    %v2397 = vsel %vm67, %v2394, 0
    %2399 = vmatprep.subr.mxu0 0.0
    %2400 = vmatpush1.xpose.msra.mxu0 %v2397
    %2401 = vmatprep.subr.mxu0 0.0
    %2402 = vmatpush1.xpose.msra.mxu0 0.0
    %2403 = vmatprep.subr.mxu0 0.0
    %2404 = vmatpush1.xpose.msra.mxu0 0.0
    %2405 = vmatprep.subr.mxu0 0.0
    %2406 = vmatpush1.xpose.msra.mxu0 0.0
    %2407 = vmatprep.subr.mxu0 0.0
    %2408 = vmatpush1.xpose.msra.mxu0 0.0
    %2409 = vmatprep.subr.mxu0 0.0
    %2410 = vmatpush1.xpose.msra.mxu0 0.0
    %2411 = vmatprep.subr.mxu0 0.0
    %2412 = vmatpush1.xpose.msra.mxu0 0.0
    %2413 = vmatprep.subr.mxu0 0.0
    %2414 = vmatpush1.xpose.msra.mxu0 0.0
    %2415 = vmatprep.subr.mxu0 0.0
    %2416 = vmatpush1.xpose.msra.mxu0 0.0
    %2417 = vmatprep.subr.mxu0 0.0
    %2418 = vmatpush1.xpose.msra.mxu0 0.0
    %2419 = vmatprep.subr.mxu0 0.0
    %2420 = vmatpush1.xpose.msra.mxu0 0.0
    %2421 = vmatprep.subr.mxu0 0.0
    %2422 = vmatpush1.xpose.msra.mxu0 0.0
    %2423 = vmatprep.subr.mxu0 0.0
    %2424 = vmatpush1.xpose.msra.mxu0 0.0
    %2425 = vmatprep.subr.mxu0 0.0
    %2426 = vmatpush1.xpose.msra.mxu0 0.0
    %2427 = vmatprep.subr.mxu0 0.0
    %2428 = vmatpush1.xpose.msra.mxu0 0.0
    %2429 = vmatprep.subr.mxu0 0.0
    %2430 = vmatpush1.xpose.msra.mxu0 0.0
    %2431 = vmatprep.subr.mxu0 0.0
    %2432 = vmatpush1.xpose.msra.mxu0 0.0
    %2433 = vmatprep.subr.mxu0 0.0
    %2434 = vmatpush1.xpose.msra.mxu0 0.0
    %2435 = vmatprep.subr.mxu0 0.0
    %2436 = vmatpush1.xpose.msra.mxu0 0.0
    %2437 = vmatprep.subr.mxu0 0.0
    %2438 = vmatpush1.xpose.msra.mxu0 0.0
    %2439 = vmatprep.subr.mxu0 0.0
    %2440 = vmatpush1.xpose.msra.mxu0 0.0
    %2441 = vmatprep.subr.mxu0 0.0
    %2442 = vmatpush1.xpose.msra.mxu0 0.0
    %2443 = vmatprep.subr.mxu0 0.0
    %2444 = vmatpush1.xpose.msra.mxu0 0.0
    %2445 = vmatprep.subr.mxu0 0.0
    %2446 = vmatpush1.xpose.msra.mxu0 0.0
    %2447 = vmatprep.subr.mxu0 0.0
    %2448 = vmatpush1.xpose.msra.mxu0 0.0
    %2449 = vmatprep.subr.mxu0 0.0
    %2450 = vmatpush1.xpose.msra.mxu0 0.0
    %2451 = vmatprep.subr.mxu0 0.0
    %2452 = vmatpush1.xpose.msra.mxu0 0.0
    %2453 = vmatprep.subr.mxu0 0.0
    %2454 = vmatpush1.xpose.msra.mxu0 0.0
    %2455 = vmatprep.subr.mxu0 0.0
    %2456 = vmatpush1.xpose.msra.mxu0 0.0
    %2457 = vmatprep.subr.mxu0 0.0
    %2458 = vmatpush1.xpose.msra.mxu0 0.0
    %2459 = vmatprep.subr.mxu0 0.0
    %2460 = vmatpush1.xpose.msra.mxu0 0.0
    %2461 = vmatprep.subr.mxu0 0.0
    %2462 = vmatpush1.xpose.msra.mxu0 0.0
    %2463 = vmatprep.mubr.f32.mxu0 0.0
    %2464 = vmatmul.mubr.f32.gmra.mrb[0].mxu0 %v2395
    %v2465 = vpop.f32.mrb[0].mxu0
    %v2466 = vadd.f32 0.0, %v2465
    %v2467 = vpop.f32.mrb[0].mxu0
    %2468 = vdwg.mxu0
    %2469 = vrot.lane.b32.xlu0 %v2060, 120
    %v2470 = vpop.permute.xlu0 %2469
    %2471 = vrot.lane.b32.xlu0 %v2060, 88
    %v2472 = vpop.permute.xlu0 %2471
    %v2473 = vsel %vm67, %v2470, 0
    %v2475 = vsel %vm67, %v2472, 0
    %2477 = vmatprep.subr.mxu0 0.0
    %2478 = vmatpush1.xpose.msra.mxu0 %v2475
    %2479 = vmatprep.subr.mxu0 0.0
    %2480 = vmatpush1.xpose.msra.mxu0 0.0
    %2481 = vmatprep.subr.mxu0 0.0
    %2482 = vmatpush1.xpose.msra.mxu0 0.0
    %2483 = vmatprep.subr.mxu0 0.0
    %2484 = vmatpush1.xpose.msra.mxu0 0.0
    %2485 = vmatprep.subr.mxu0 0.0
    %2486 = vmatpush1.xpose.msra.mxu0 0.0
    %2487 = vmatprep.subr.mxu0 0.0
    %2488 = vmatpush1.xpose.msra.mxu0 0.0
    %2489 = vmatprep.subr.mxu0 0.0
    %2490 = vmatpush1.xpose.msra.mxu0 0.0
    %2491 = vmatprep.subr.mxu0 0.0
    %2492 = vmatpush1.xpose.msra.mxu0 0.0
    %2493 = vmatprep.subr.mxu0 0.0
    %2494 = vmatpush1.xpose.msra.mxu0 0.0
    %2495 = vmatprep.subr.mxu0 0.0
    %2496 = vmatpush1.xpose.msra.mxu0 0.0
    %2497 = vmatprep.subr.mxu0 0.0
    %2498 = vmatpush1.xpose.msra.mxu0 0.0
    %2499 = vmatprep.subr.mxu0 0.0
    %2500 = vmatpush1.xpose.msra.mxu0 0.0
    %2501 = vmatprep.subr.mxu0 0.0
    %2502 = vmatpush1.xpose.msra.mxu0 0.0
    %2503 = vmatprep.subr.mxu0 0.0
    %2504 = vmatpush1.xpose.msra.mxu0 0.0
    %2505 = vmatprep.subr.mxu0 0.0
    %2506 = vmatpush1.xpose.msra.mxu0 0.0
    %2507 = vmatprep.subr.mxu0 0.0
    %2508 = vmatpush1.xpose.msra.mxu0 0.0
    %2509 = vmatprep.subr.mxu0 0.0
    %2510 = vmatpush1.xpose.msra.mxu0 0.0
    %2511 = vmatprep.subr.mxu0 0.0
    %2512 = vmatpush1.xpose.msra.mxu0 0.0
    %2513 = vmatprep.subr.mxu0 0.0
    %2514 = vmatpush1.xpose.msra.mxu0 0.0
    %2515 = vmatprep.subr.mxu0 0.0
    %2516 = vmatpush1.xpose.msra.mxu0 0.0
    %2517 = vmatprep.subr.mxu0 0.0
    %2518 = vmatpush1.xpose.msra.mxu0 0.0
    %2519 = vmatprep.subr.mxu0 0.0
    %2520 = vmatpush1.xpose.msra.mxu0 0.0
    %2521 = vmatprep.subr.mxu0 0.0
    %2522 = vmatpush1.xpose.msra.mxu0 0.0
    %2523 = vmatprep.subr.mxu0 0.0
    %2524 = vmatpush1.xpose.msra.mxu0 0.0
    %2525 = vmatprep.subr.mxu0 0.0
    %2526 = vmatpush1.xpose.msra.mxu0 0.0
    %2527 = vmatprep.subr.mxu0 0.0
    %2528 = vmatpush1.xpose.msra.mxu0 0.0
    %2529 = vmatprep.subr.mxu0 0.0
    %2530 = vmatpush1.xpose.msra.mxu0 0.0
    %2531 = vmatprep.subr.mxu0 0.0
    %2532 = vmatpush1.xpose.msra.mxu0 0.0
    %2533 = vmatprep.subr.mxu0 0.0
    %2534 = vmatpush1.xpose.msra.mxu0 0.0
    %2535 = vmatprep.subr.mxu0 0.0
    %2536 = vmatpush1.xpose.msra.mxu0 0.0
    %2537 = vmatprep.subr.mxu0 0.0
    %2538 = vmatpush1.xpose.msra.mxu0 0.0
    %2539 = vmatprep.subr.mxu0 0.0
    %2540 = vmatpush1.xpose.msra.mxu0 0.0
    %2541 = vmatprep.mubr.f32.mxu0 0.0
    %2542 = vmatmul.mubr.f32.gmra.mrb[0].mxu0 %v2473
    %v2543 = vpop.f32.mrb[0].mxu0
    %v2544 = vadd.f32 0.0, %v2543
    %v2545 = vpop.f32.mrb[0].mxu0
    %2546 = vdwg.mxu0
    %v2547 = vsel %vm67, %v2466, -inf
    %2548 = vmax.xlane.f32.xlu0 %v2547
    %v2549 = vpop.xlane.xlu0 %2548
    %v2550 = vsel %vm67, %v2544, -inf
    %2551 = vmax.xlane.f32.xlu0 %v2550
    %v2552 = vpop.xlane.xlu0 %2551
    %v2553 = vsub.f32 %v2466, %v2549
    %v2554 = vsub.f32 %v2544, %v2552
    %v2555 = vmul.f32 %v2553, 1.442695
    %v2556 = vpow.pop %v2555
    %v2557 = vmul.f32 %v2554, 1.442695
    %v2558 = vpow.pop %v2557
    %v2559 = vsel %vm67, %v2556, 0.0
    %2560 = vadd.xlane.f32.xlu0 %v2559
    %v2561 = vpop.xlane.xlu0 %2560
    %v2562 = vsel %vm67, %v2558, 0.0
    %2563 = vadd.xlane.f32.xlu0 %v2562
    %v2564 = vpop.xlane.xlu0 %2563
    %v2565 = vrcp.pop %v2561
    %v2566 = vrcp.pop %v2564
    %v2567 = vmul.f32 %v2556, %v2565
    %v2568 = vmul.f32 %v2558, %v2566
    %2569 = vrot.lane.b32.xlu0 %v2055, 56
    %v2570 = vpop.permute.xlu0 %2569
    %v2573 = vsel %vm67, %v2567, 0
    %2575 = vmatprep.subr.mxu0 0.0
    %2576 = vmatpush1.msra.mxu0 %v2570
    %2577 = vmatprep.subr.mxu0 0.0
    %2578 = vmatpush1.msra.mxu0 0.0
    %2579 = vmatprep.subr.mxu0 0.0
    %2580 = vmatpush1.msra.mxu0 0.0
    %2581 = vmatprep.subr.mxu0 0.0
    %2582 = vmatpush1.msra.mxu0 0.0
    %2583 = vmatprep.subr.mxu0 0.0
    %2584 = vmatpush1.msra.mxu0 0.0
    %2585 = vmatprep.subr.mxu0 0.0
    %2586 = vmatpush1.msra.mxu0 0.0
    %2587 = vmatprep.subr.mxu0 0.0
    %2588 = vmatpush1.msra.mxu0 0.0
    %2589 = vmatprep.subr.mxu0 0.0
    %2590 = vmatpush1.msra.mxu0 0.0
    %2591 = vmatprep.subr.mxu0 0.0
    %2592 = vmatpush1.msra.mxu0 0.0
    %2593 = vmatprep.subr.mxu0 0.0
    %2594 = vmatpush1.msra.mxu0 0.0
    %2595 = vmatprep.subr.mxu0 0.0
    %2596 = vmatpush1.msra.mxu0 0.0
    %2597 = vmatprep.subr.mxu0 0.0
    %2598 = vmatpush1.msra.mxu0 0.0
    %2599 = vmatprep.subr.mxu0 0.0
    %2600 = vmatpush1.msra.mxu0 0.0
    %2601 = vmatprep.subr.mxu0 0.0
    %2602 = vmatpush1.msra.mxu0 0.0
    %2603 = vmatprep.subr.mxu0 0.0
    %2604 = vmatpush1.msra.mxu0 0.0
    %2605 = vmatprep.subr.mxu0 0.0
    %2606 = vmatpush1.msra.mxu0 0.0
    %2607 = vmatprep.subr.mxu0 0.0
    %2608 = vmatpush1.msra.mxu0 0.0
    %2609 = vmatprep.subr.mxu0 0.0
    %2610 = vmatpush1.msra.mxu0 0.0
    %2611 = vmatprep.subr.mxu0 0.0
    %2612 = vmatpush1.msra.mxu0 0.0
    %2613 = vmatprep.subr.mxu0 0.0
    %2614 = vmatpush1.msra.mxu0 0.0
    %2615 = vmatprep.subr.mxu0 0.0
    %2616 = vmatpush1.msra.mxu0 0.0
    %2617 = vmatprep.subr.mxu0 0.0
    %2618 = vmatpush1.msra.mxu0 0.0
    %2619 = vmatprep.subr.mxu0 0.0
    %2620 = vmatpush1.msra.mxu0 0.0
    %2621 = vmatprep.subr.mxu0 0.0
    %2622 = vmatpush1.msra.mxu0 0.0
    %2623 = vmatprep.subr.mxu0 0.0
    %2624 = vmatpush1.msra.mxu0 0.0
    %2625 = vmatprep.subr.mxu0 0.0
    %2626 = vmatpush1.msra.mxu0 0.0
    %2627 = vmatprep.subr.mxu0 0.0
    %2628 = vmatpush1.msra.mxu0 0.0
    %2629 = vmatprep.subr.mxu0 0.0
    %2630 = vmatpush1.msra.mxu0 0.0
    %2631 = vmatprep.subr.mxu0 0.0
    %2632 = vmatpush1.msra.mxu0 0.0
    %2633 = vmatprep.subr.mxu0 0.0
    %2634 = vmatpush1.msra.mxu0 0.0
    %2635 = vmatprep.subr.mxu0 0.0
    %2636 = vmatpush1.msra.mxu0 0.0
    %2637 = vmatprep.subr.mxu0 0.0
    %2638 = vmatpush1.msra.mxu0 0.0
    %2639 = vmatprep.mubr.f32.mxu0 0.0
    %2640 = vmatmul.mubr.f32.gmra.mrb[0].mxu0 %v2573
    %v2641 = vpop.f32.mrb[0].mxu0
    %v2642 = vadd.f32 0.0, %v2641
    %v2643 = vpop.f32.mrb[0].mxu0
    %2644 = vdwg.mxu0
    %2645 = vrot.lane.b32.xlu0 %v2060, 56
    %v2646 = vpop.permute.xlu0 %2645
    %v2649 = vsel %vm67, %v2568, 0
    %2651 = vmatprep.subr.mxu0 0.0
    %2652 = vmatpush1.msra.mxu0 %v2646
    %2653 = vmatprep.subr.mxu0 0.0
    %2654 = vmatpush1.msra.mxu0 0.0
    %2655 = vmatprep.subr.mxu0 0.0
    %2656 = vmatpush1.msra.mxu0 0.0
    %2657 = vmatprep.subr.mxu0 0.0
    %2658 = vmatpush1.msra.mxu0 0.0
    %2659 = vmatprep.subr.mxu0 0.0
    %2660 = vmatpush1.msra.mxu0 0.0
    %2661 = vmatprep.subr.mxu0 0.0
    %2662 = vmatpush1.msra.mxu0 0.0
    %2663 = vmatprep.subr.mxu0 0.0
    %2664 = vmatpush1.msra.mxu0 0.0
    %2665 = vmatprep.subr.mxu0 0.0
    %2666 = vmatpush1.msra.mxu0 0.0
    %2667 = vmatprep.subr.mxu0 0.0
    %2668 = vmatpush1.msra.mxu0 0.0
    %2669 = vmatprep.subr.mxu0 0.0
    %2670 = vmatpush1.msra.mxu0 0.0
    %2671 = vmatprep.subr.mxu0 0.0
    %2672 = vmatpush1.msra.mxu0 0.0
    %2673 = vmatprep.subr.mxu0 0.0
    %2674 = vmatpush1.msra.mxu0 0.0
    %2675 = vmatprep.subr.mxu0 0.0
    %2676 = vmatpush1.msra.mxu0 0.0
    %2677 = vmatprep.subr.mxu0 0.0
    %2678 = vmatpush1.msra.mxu0 0.0
    %2679 = vmatprep.subr.mxu0 0.0
    %2680 = vmatpush1.msra.mxu0 0.0
    %2681 = vmatprep.subr.mxu0 0.0
    %2682 = vmatpush1.msra.mxu0 0.0
    %2683 = vmatprep.subr.mxu0 0.0
    %2684 = vmatpush1.msra.mxu0 0.0
    %2685 = vmatprep.subr.mxu0 0.0
    %2686 = vmatpush1.msra.mxu0 0.0
    %2687 = vmatprep.subr.mxu0 0.0
    %2688 = vmatpush1.msra.mxu0 0.0
    %2689 = vmatprep.subr.mxu0 0.0
    %2690 = vmatpush1.msra.mxu0 0.0
    %2691 = vmatprep.subr.mxu0 0.0
    %2692 = vmatpush1.msra.mxu0 0.0
    %2693 = vmatprep.subr.mxu0 0.0
    %2694 = vmatpush1.msra.mxu0 0.0
    %2695 = vmatprep.subr.mxu0 0.0
    %2696 = vmatpush1.msra.mxu0 0.0
    %2697 = vmatprep.subr.mxu0 0.0
    %2698 = vmatpush1.msra.mxu0 0.0
    %2699 = vmatprep.subr.mxu0 0.0
    %2700 = vmatpush1.msra.mxu0 0.0
    %2701 = vmatprep.subr.mxu0 0.0
    %2702 = vmatpush1.msra.mxu0 0.0
    %2703 = vmatprep.subr.mxu0 0.0
    %2704 = vmatpush1.msra.mxu0 0.0
    %2705 = vmatprep.subr.mxu0 0.0
    %2706 = vmatpush1.msra.mxu0 0.0
    %2707 = vmatprep.subr.mxu0 0.0
    %2708 = vmatpush1.msra.mxu0 0.0
    %2709 = vmatprep.subr.mxu0 0.0
    %2710 = vmatpush1.msra.mxu0 0.0
    %2711 = vmatprep.subr.mxu0 0.0
    %2712 = vmatpush1.msra.mxu0 0.0
    %2713 = vmatprep.subr.mxu0 0.0
    %2714 = vmatpush1.msra.mxu0 0.0
    %2715 = vmatprep.mubr.f32.mxu0 0.0
    %2716 = vmatmul.mubr.f32.gmra.mrb[0].mxu0 %v2649
    %v2717 = vpop.f32.mrb[0].mxu0
    %v2718 = vadd.f32 0.0, %v2717
    %v2719 = vpop.f32.mrb[0].mxu0
    %2720 = vdwg.mxu0
    %2721 = vrot.lane.b32.xlu0 %v2055, 112
    %v2722 = vpop.permute.xlu0 %2721
    %2723 = vrot.lane.b32.xlu0 %v2055, 80
    %v2724 = vpop.permute.xlu0 %2723
    %v2725 = vsel %vm67, %v2722, 0
    %v2727 = vsel %vm67, %v2724, 0
    %2729 = vmatprep.subr.mxu0 0.0
    %2730 = vmatpush1.xpose.msra.mxu0 %v2727
    %2731 = vmatprep.subr.mxu0 0.0
    %2732 = vmatpush1.xpose.msra.mxu0 0.0
    %2733 = vmatprep.subr.mxu0 0.0
    %2734 = vmatpush1.xpose.msra.mxu0 0.0
    %2735 = vmatprep.subr.mxu0 0.0
    %2736 = vmatpush1.xpose.msra.mxu0 0.0
    %2737 = vmatprep.subr.mxu0 0.0
    %2738 = vmatpush1.xpose.msra.mxu0 0.0
    %2739 = vmatprep.subr.mxu0 0.0
    %2740 = vmatpush1.xpose.msra.mxu0 0.0
    %2741 = vmatprep.subr.mxu0 0.0
    %2742 = vmatpush1.xpose.msra.mxu0 0.0
    %2743 = vmatprep.subr.mxu0 0.0
    %2744 = vmatpush1.xpose.msra.mxu0 0.0
    %2745 = vmatprep.subr.mxu0 0.0
    %2746 = vmatpush1.xpose.msra.mxu0 0.0
    %2747 = vmatprep.subr.mxu0 0.0
    %2748 = vmatpush1.xpose.msra.mxu0 0.0
    %2749 = vmatprep.subr.mxu0 0.0
    %2750 = vmatpush1.xpose.msra.mxu0 0.0
    %2751 = vmatprep.subr.mxu0 0.0
    %2752 = vmatpush1.xpose.msra.mxu0 0.0
    %2753 = vmatprep.subr.mxu0 0.0
    %2754 = vmatpush1.xpose.msra.mxu0 0.0
    %2755 = vmatprep.subr.mxu0 0.0
    %2756 = vmatpush1.xpose.msra.mxu0 0.0
    %2757 = vmatprep.subr.mxu0 0.0
    %2758 = vmatpush1.xpose.msra.mxu0 0.0
    %2759 = vmatprep.subr.mxu0 0.0
    %2760 = vmatpush1.xpose.msra.mxu0 0.0
    %2761 = vmatprep.subr.mxu0 0.0
    %2762 = vmatpush1.xpose.msra.mxu0 0.0
    %2763 = vmatprep.subr.mxu0 0.0
    %2764 = vmatpush1.xpose.msra.mxu0 0.0
    %2765 = vmatprep.subr.mxu0 0.0
    %2766 = vmatpush1.xpose.msra.mxu0 0.0
    %2767 = vmatprep.subr.mxu0 0.0
    %2768 = vmatpush1.xpose.msra.mxu0 0.0
    %2769 = vmatprep.subr.mxu0 0.0
    %2770 = vmatpush1.xpose.msra.mxu0 0.0
    %2771 = vmatprep.subr.mxu0 0.0
    %2772 = vmatpush1.xpose.msra.mxu0 0.0
    %2773 = vmatprep.subr.mxu0 0.0
    %2774 = vmatpush1.xpose.msra.mxu0 0.0
    %2775 = vmatprep.subr.mxu0 0.0
    %2776 = vmatpush1.xpose.msra.mxu0 0.0
    %2777 = vmatprep.subr.mxu0 0.0
    %2778 = vmatpush1.xpose.msra.mxu0 0.0
    %2779 = vmatprep.subr.mxu0 0.0
    %2780 = vmatpush1.xpose.msra.mxu0 0.0
    %2781 = vmatprep.subr.mxu0 0.0
    %2782 = vmatpush1.xpose.msra.mxu0 0.0
    %2783 = vmatprep.subr.mxu0 0.0
    %2784 = vmatpush1.xpose.msra.mxu0 0.0
    %2785 = vmatprep.subr.mxu0 0.0
    %2786 = vmatpush1.xpose.msra.mxu0 0.0
    %2787 = vmatprep.subr.mxu0 0.0
    %2788 = vmatpush1.xpose.msra.mxu0 0.0
    %2789 = vmatprep.subr.mxu0 0.0
    %2790 = vmatpush1.xpose.msra.mxu0 0.0
    %2791 = vmatprep.subr.mxu0 0.0
    %2792 = vmatpush1.xpose.msra.mxu0 0.0
    %2793 = vmatprep.mubr.f32.mxu0 0.0
    %2794 = vmatmul.mubr.f32.gmra.mrb[0].mxu0 %v2725
    %v2795 = vpop.f32.mrb[0].mxu0
    %v2796 = vadd.f32 0.0, %v2795
    %v2797 = vpop.f32.mrb[0].mxu0
    %2798 = vdwg.mxu0
    %2799 = vrot.lane.b32.xlu0 %v2060, 112
    %v2800 = vpop.permute.xlu0 %2799
    %2801 = vrot.lane.b32.xlu0 %v2060, 80
    %v2802 = vpop.permute.xlu0 %2801
    %v2803 = vsel %vm67, %v2800, 0
    %v2805 = vsel %vm67, %v2802, 0
    %2807 = vmatprep.subr.mxu0 0.0
    %2808 = vmatpush1.xpose.msra.mxu0 %v2805
    %2809 = vmatprep.subr.mxu0 0.0
    %2810 = vmatpush1.xpose.msra.mxu0 0.0
    %2811 = vmatprep.subr.mxu0 0.0
    %2812 = vmatpush1.xpose.msra.mxu0 0.0
    %2813 = vmatprep.subr.mxu0 0.0
    %2814 = vmatpush1.xpose.msra.mxu0 0.0
    %2815 = vmatprep.subr.mxu0 0.0
    %2816 = vmatpush1.xpose.msra.mxu0 0.0
    %2817 = vmatprep.subr.mxu0 0.0
    %2818 = vmatpush1.xpose.msra.mxu0 0.0
    %2819 = vmatprep.subr.mxu0 0.0
    %2820 = vmatpush1.xpose.msra.mxu0 0.0
    %2821 = vmatprep.subr.mxu0 0.0
    %2822 = vmatpush1.xpose.msra.mxu0 0.0
    %2823 = vmatprep.subr.mxu0 0.0
    %2824 = vmatpush1.xpose.msra.mxu0 0.0
    %2825 = vmatprep.subr.mxu0 0.0
    %2826 = vmatpush1.xpose.msra.mxu0 0.0
    %2827 = vmatprep.subr.mxu0 0.0
    %2828 = vmatpush1.xpose.msra.mxu0 0.0
    %2829 = vmatprep.subr.mxu0 0.0
    %2830 = vmatpush1.xpose.msra.mxu0 0.0
    %2831 = vmatprep.subr.mxu0 0.0
    %2832 = vmatpush1.xpose.msra.mxu0 0.0
    %2833 = vmatprep.subr.mxu0 0.0
    %2834 = vmatpush1.xpose.msra.mxu0 0.0
    %2835 = vmatprep.subr.mxu0 0.0
    %2836 = vmatpush1.xpose.msra.mxu0 0.0
    %2837 = vmatprep.subr.mxu0 0.0
    %2838 = vmatpush1.xpose.msra.mxu0 0.0
    %2839 = vmatprep.subr.mxu0 0.0
    %2840 = vmatpush1.xpose.msra.mxu0 0.0
    %2841 = vmatprep.subr.mxu0 0.0
    %2842 = vmatpush1.xpose.msra.mxu0 0.0
    %2843 = vmatprep.subr.mxu0 0.0
    %2844 = vmatpush1.xpose.msra.mxu0 0.0
    %2845 = vmatprep.subr.mxu0 0.0
    %2846 = vmatpush1.xpose.msra.mxu0 0.0
    %2847 = vmatprep.subr.mxu0 0.0
    %2848 = vmatpush1.xpose.msra.mxu0 0.0
    %2849 = vmatprep.subr.mxu0 0.0
    %2850 = vmatpush1.xpose.msra.mxu0 0.0
    %2851 = vmatprep.subr.mxu0 0.0
    %2852 = vmatpush1.xpose.msra.mxu0 0.0
    %2853 = vmatprep.subr.mxu0 0.0
    %2854 = vmatpush1.xpose.msra.mxu0 0.0
    %2855 = vmatprep.subr.mxu0 0.0
    %2856 = vmatpush1.xpose.msra.mxu0 0.0
    %2857 = vmatprep.subr.mxu0 0.0
    %2858 = vmatpush1.xpose.msra.mxu0 0.0
    %2859 = vmatprep.subr.mxu0 0.0
    %2860 = vmatpush1.xpose.msra.mxu0 0.0
    %2861 = vmatprep.subr.mxu0 0.0
    %2862 = vmatpush1.xpose.msra.mxu0 0.0
    %2863 = vmatprep.subr.mxu0 0.0
    %2864 = vmatpush1.xpose.msra.mxu0 0.0
    %2865 = vmatprep.subr.mxu0 0.0
    %2866 = vmatpush1.xpose.msra.mxu0 0.0
    %2867 = vmatprep.subr.mxu0 0.0
    %2868 = vmatpush1.xpose.msra.mxu0 0.0
    %2869 = vmatprep.subr.mxu0 0.0
    %2870 = vmatpush1.xpose.msra.mxu0 0.0
    %2871 = vmatprep.mubr.f32.mxu0 0.0
    %2872 = vmatmul.mubr.f32.gmra.mrb[0].mxu0 %v2803
    %v2873 = vpop.f32.mrb[0].mxu0
    %v2874 = vadd.f32 0.0, %v2873
    %v2875 = vpop.f32.mrb[0].mxu0
    %2876 = vdwg.mxu0
    %v2877 = vsel %vm67, %v2796, -inf
    %2878 = vmax.xlane.f32.xlu0 %v2877
    %v2879 = vpop.xlane.xlu0 %2878
    %v2880 = vsel %vm67, %v2874, -inf
    %2881 = vmax.xlane.f32.xlu0 %v2880
    %v2882 = vpop.xlane.xlu0 %2881
    %v2883 = vsub.f32 %v2796, %v2879
    %v2884 = vsub.f32 %v2874, %v2882
    %v2885 = vmul.f32 %v2883, 1.442695
    %v2886 = vpow.pop %v2885
    %v2887 = vmul.f32 %v2884, 1.442695
    %v2888 = vpow.pop %v2887
    %v2889 = vsel %vm67, %v2886, 0.0
    %2890 = vadd.xlane.f32.xlu0 %v2889
    %v2891 = vpop.xlane.xlu0 %2890
    %v2892 = vsel %vm67, %v2888, 0.0
    %2893 = vadd.xlane.f32.xlu0 %v2892
    %v2894 = vpop.xlane.xlu0 %2893
    %v2895 = vrcp.pop %v2891
    %v2896 = vrcp.pop %v2894
    %v2897 = vmul.f32 %v2886, %v2895
    %v2898 = vmul.f32 %v2888, %v2896
    %2899 = vrot.lane.b32.xlu0 %v2055, 48
    %v2900 = vpop.permute.xlu0 %2899
    %v2903 = vsel %vm67, %v2897, 0
    %2905 = vmatprep.subr.mxu0 0.0
    %2906 = vmatpush1.msra.mxu0 %v2900
    %2907 = vmatprep.subr.mxu0 0.0
    %2908 = vmatpush1.msra.mxu0 0.0
    %2909 = vmatprep.subr.mxu0 0.0
    %2910 = vmatpush1.msra.mxu0 0.0
    %2911 = vmatprep.subr.mxu0 0.0
    %2912 = vmatpush1.msra.mxu0 0.0
    %2913 = vmatprep.subr.mxu0 0.0
    %2914 = vmatpush1.msra.mxu0 0.0
    %2915 = vmatprep.subr.mxu0 0.0
    %2916 = vmatpush1.msra.mxu0 0.0
    %2917 = vmatprep.subr.mxu0 0.0
    %2918 = vmatpush1.msra.mxu0 0.0
    %2919 = vmatprep.subr.mxu0 0.0
    %2920 = vmatpush1.msra.mxu0 0.0
    %2921 = vmatprep.subr.mxu0 0.0
    %2922 = vmatpush1.msra.mxu0 0.0
    %2923 = vmatprep.subr.mxu0 0.0
    %2924 = vmatpush1.msra.mxu0 0.0
    %2925 = vmatprep.subr.mxu0 0.0
    %2926 = vmatpush1.msra.mxu0 0.0
    %2927 = vmatprep.subr.mxu0 0.0
    %2928 = vmatpush1.msra.mxu0 0.0
    %2929 = vmatprep.subr.mxu0 0.0
    %2930 = vmatpush1.msra.mxu0 0.0
    %2931 = vmatprep.subr.mxu0 0.0
    %2932 = vmatpush1.msra.mxu0 0.0
    %2933 = vmatprep.subr.mxu0 0.0
    %2934 = vmatpush1.msra.mxu0 0.0
    %2935 = vmatprep.subr.mxu0 0.0
    %2936 = vmatpush1.msra.mxu0 0.0
    %2937 = vmatprep.subr.mxu0 0.0
    %2938 = vmatpush1.msra.mxu0 0.0
    %2939 = vmatprep.subr.mxu0 0.0
    %2940 = vmatpush1.msra.mxu0 0.0
    %2941 = vmatprep.subr.mxu0 0.0
    %2942 = vmatpush1.msra.mxu0 0.0
    %2943 = vmatprep.subr.mxu0 0.0
    %2944 = vmatpush1.msra.mxu0 0.0
    %2945 = vmatprep.subr.mxu0 0.0
    %2946 = vmatpush1.msra.mxu0 0.0
    %2947 = vmatprep.subr.mxu0 0.0
    %2948 = vmatpush1.msra.mxu0 0.0
    %2949 = vmatprep.subr.mxu0 0.0
    %2950 = vmatpush1.msra.mxu0 0.0
    %2951 = vmatprep.subr.mxu0 0.0
    %2952 = vmatpush1.msra.mxu0 0.0
    %2953 = vmatprep.subr.mxu0 0.0
    %2954 = vmatpush1.msra.mxu0 0.0
    %2955 = vmatprep.subr.mxu0 0.0
    %2956 = vmatpush1.msra.mxu0 0.0
    %2957 = vmatprep.subr.mxu0 0.0
    %2958 = vmatpush1.msra.mxu0 0.0
    %2959 = vmatprep.subr.mxu0 0.0
    %2960 = vmatpush1.msra.mxu0 0.0
    %2961 = vmatprep.subr.mxu0 0.0
    %2962 = vmatpush1.msra.mxu0 0.0
    %2963 = vmatprep.subr.mxu0 0.0
    %2964 = vmatpush1.msra.mxu0 0.0
    %2965 = vmatprep.subr.mxu0 0.0
    %2966 = vmatpush1.msra.mxu0 0.0
    %2967 = vmatprep.subr.mxu0 0.0
    %2968 = vmatpush1.msra.mxu0 0.0
    %2969 = vmatprep.mubr.f32.mxu0 0.0
    %2970 = vmatmul.mubr.f32.gmra.mrb[0].mxu0 %v2903
    %v2971 = vpop.f32.mrb[0].mxu0
    %v2972 = vadd.f32 0.0, %v2971
    %v2973 = vpop.f32.mrb[0].mxu0
    %2974 = vdwg.mxu0
    %2975 = vrot.lane.b32.xlu0 %v2060, 48
    %v2976 = vpop.permute.xlu0 %2975
    %v2979 = vsel %vm67, %v2898, 0
    %2981 = vmatprep.subr.mxu0 0.0
    %2982 = vmatpush1.msra.mxu0 %v2976
    %2983 = vmatprep.subr.mxu0 0.0
    %2984 = vmatpush1.msra.mxu0 0.0
    %2985 = vmatprep.subr.mxu0 0.0
    %2986 = vmatpush1.msra.mxu0 0.0
    %2987 = vmatprep.subr.mxu0 0.0
    %2988 = vmatpush1.msra.mxu0 0.0
    %2989 = vmatprep.subr.mxu0 0.0
    %2990 = vmatpush1.msra.mxu0 0.0
    %2991 = vmatprep.subr.mxu0 0.0
    %2992 = vmatpush1.msra.mxu0 0.0
    %2993 = vmatprep.subr.mxu0 0.0
    %2994 = vmatpush1.msra.mxu0 0.0
    %2995 = vmatprep.subr.mxu0 0.0
    %2996 = vmatpush1.msra.mxu0 0.0
    %2997 = vmatprep.subr.mxu0 0.0
    %2998 = vmatpush1.msra.mxu0 0.0
    %2999 = vmatprep.subr.mxu0 0.0
    %3000 = vmatpush1.msra.mxu0 0.0
    %3001 = vmatprep.subr.mxu0 0.0
    %3002 = vmatpush1.msra.mxu0 0.0
    %3003 = vmatprep.subr.mxu0 0.0
    %3004 = vmatpush1.msra.mxu0 0.0
    %3005 = vmatprep.subr.mxu0 0.0
    %3006 = vmatpush1.msra.mxu0 0.0
    %3007 = vmatprep.subr.mxu0 0.0
    %3008 = vmatpush1.msra.mxu0 0.0
    %3009 = vmatprep.subr.mxu0 0.0
    %3010 = vmatpush1.msra.mxu0 0.0
    %3011 = vmatprep.subr.mxu0 0.0
    %3012 = vmatpush1.msra.mxu0 0.0
    %3013 = vmatprep.subr.mxu0 0.0
    %3014 = vmatpush1.msra.mxu0 0.0
    %3015 = vmatprep.subr.mxu0 0.0
    %3016 = vmatpush1.msra.mxu0 0.0
    %3017 = vmatprep.subr.mxu0 0.0
    %3018 = vmatpush1.msra.mxu0 0.0
    %3019 = vmatprep.subr.mxu0 0.0
    %3020 = vmatpush1.msra.mxu0 0.0
    %3021 = vmatprep.subr.mxu0 0.0
    %3022 = vmatpush1.msra.mxu0 0.0
    %3023 = vmatprep.subr.mxu0 0.0
    %3024 = vmatpush1.msra.mxu0 0.0
    %3025 = vmatprep.subr.mxu0 0.0
    %3026 = vmatpush1.msra.mxu0 0.0
    %3027 = vmatprep.subr.mxu0 0.0
    %3028 = vmatpush1.msra.mxu0 0.0
    %3029 = vmatprep.subr.mxu0 0.0
    %3030 = vmatpush1.msra.mxu0 0.0
    %3031 = vmatprep.subr.mxu0 0.0
    %3032 = vmatpush1.msra.mxu0 0.0
    %3033 = vmatprep.subr.mxu0 0.0
    %3034 = vmatpush1.msra.mxu0 0.0
    %3035 = vmatprep.subr.mxu0 0.0
    %3036 = vmatpush1.msra.mxu0 0.0
    %3037 = vmatprep.subr.mxu0 0.0
    %3038 = vmatpush1.msra.mxu0 0.0
    %3039 = vmatprep.subr.mxu0 0.0
    %3040 = vmatpush1.msra.mxu0 0.0
    %3041 = vmatprep.subr.mxu0 0.0
    %3042 = vmatpush1.msra.mxu0 0.0
    %3043 = vmatprep.subr.mxu0 0.0
    %3044 = vmatpush1.msra.mxu0 0.0
    %3045 = vmatprep.mubr.f32.mxu0 0.0
    %3046 = vmatmul.mubr.f32.gmra.mrb[0].mxu0 %v2979
    %v3047 = vpop.f32.mrb[0].mxu0
    %v3048 = vadd.f32 0.0, %v3047
    %v3049 = vpop.f32.mrb[0].mxu0
    %3050 = vdwg.mxu0
    %3051 = vrot.lane.b32.xlu0 %v2055, 104
    %v3052 = vpop.permute.xlu0 %3051
    %3053 = vrot.lane.b32.xlu0 %v2055, 72
    %v3054 = vpop.permute.xlu0 %3053
    %v3055 = vsel %vm67, %v3052, 0
    %v3057 = vsel %vm67, %v3054, 0
    %3059 = vmatprep.subr.mxu0 0.0
    %3060 = vmatpush1.xpose.msra.mxu0 %v3057
    %3061 = vmatprep.subr.mxu0 0.0
    %3062 = vmatpush1.xpose.msra.mxu0 0.0
    %3063 = vmatprep.subr.mxu0 0.0
    %3064 = vmatpush1.xpose.msra.mxu0 0.0
    %3065 = vmatprep.subr.mxu0 0.0
    %3066 = vmatpush1.xpose.msra.mxu0 0.0
    %3067 = vmatprep.subr.mxu0 0.0
    %3068 = vmatpush1.xpose.msra.mxu0 0.0
    %3069 = vmatprep.subr.mxu0 0.0
    %3070 = vmatpush1.xpose.msra.mxu0 0.0
    %3071 = vmatprep.subr.mxu0 0.0
    %3072 = vmatpush1.xpose.msra.mxu0 0.0
    %3073 = vmatprep.subr.mxu0 0.0
    %3074 = vmatpush1.xpose.msra.mxu0 0.0
    %3075 = vmatprep.subr.mxu0 0.0
    %3076 = vmatpush1.xpose.msra.mxu0 0.0
    %3077 = vmatprep.subr.mxu0 0.0
    %3078 = vmatpush1.xpose.msra.mxu0 0.0
    %3079 = vmatprep.subr.mxu0 0.0
    %3080 = vmatpush1.xpose.msra.mxu0 0.0
    %3081 = vmatprep.subr.mxu0 0.0
    %3082 = vmatpush1.xpose.msra.mxu0 0.0
    %3083 = vmatprep.subr.mxu0 0.0
    %3084 = vmatpush1.xpose.msra.mxu0 0.0
    %3085 = vmatprep.subr.mxu0 0.0
    %3086 = vmatpush1.xpose.msra.mxu0 0.0
    %3087 = vmatprep.subr.mxu0 0.0
    %3088 = vmatpush1.xpose.msra.mxu0 0.0
    %3089 = vmatprep.subr.mxu0 0.0
    %3090 = vmatpush1.xpose.msra.mxu0 0.0
    %3091 = vmatprep.subr.mxu0 0.0
    %3092 = vmatpush1.xpose.msra.mxu0 0.0
    %3093 = vmatprep.subr.mxu0 0.0
    %3094 = vmatpush1.xpose.msra.mxu0 0.0
    %3095 = vmatprep.subr.mxu0 0.0
    %3096 = vmatpush1.xpose.msra.mxu0 0.0
    %3097 = vmatprep.subr.mxu0 0.0
    %3098 = vmatpush1.xpose.msra.mxu0 0.0
    %3099 = vmatprep.subr.mxu0 0.0
    %3100 = vmatpush1.xpose.msra.mxu0 0.0
    %3101 = vmatprep.subr.mxu0 0.0
    %3102 = vmatpush1.xpose.msra.mxu0 0.0
    %3103 = vmatprep.subr.mxu0 0.0
    %3104 = vmatpush1.xpose.msra.mxu0 0.0
    %3105 = vmatprep.subr.mxu0 0.0
    %3106 = vmatpush1.xpose.msra.mxu0 0.0
    %3107 = vmatprep.subr.mxu0 0.0
    %3108 = vmatpush1.xpose.msra.mxu0 0.0
    %3109 = vmatprep.subr.mxu0 0.0
    %3110 = vmatpush1.xpose.msra.mxu0 0.0
    %3111 = vmatprep.subr.mxu0 0.0
    %3112 = vmatpush1.xpose.msra.mxu0 0.0
    %3113 = vmatprep.subr.mxu0 0.0
    %3114 = vmatpush1.xpose.msra.mxu0 0.0
    %3115 = vmatprep.subr.mxu0 0.0
    %3116 = vmatpush1.xpose.msra.mxu0 0.0
    %3117 = vmatprep.subr.mxu0 0.0
    %3118 = vmatpush1.xpose.msra.mxu0 0.0
    %3119 = vmatprep.subr.mxu0 0.0
    %3120 = vmatpush1.xpose.msra.mxu0 0.0
    %3121 = vmatprep.subr.mxu0 0.0
    %3122 = vmatpush1.xpose.msra.mxu0 0.0
    %3123 = vmatprep.mubr.f32.mxu0 0.0
    %3124 = vmatmul.mubr.f32.gmra.mrb[0].mxu0 %v3055
    %v3125 = vpop.f32.mrb[0].mxu0
    %v3126 = vadd.f32 0.0, %v3125
    %v3127 = vpop.f32.mrb[0].mxu0
    %3128 = vdwg.mxu0
    %3129 = vrot.lane.b32.xlu0 %v2060, 104
    %v3130 = vpop.permute.xlu0 %3129
    %3131 = vrot.lane.b32.xlu0 %v2060, 72
    %v3132 = vpop.permute.xlu0 %3131
    %v3133 = vsel %vm67, %v3130, 0
    %v3135 = vsel %vm67, %v3132, 0
    %3137 = vmatprep.subr.mxu0 0.0
    %3138 = vmatpush1.xpose.msra.mxu0 %v3135
    %3139 = vmatprep.subr.mxu0 0.0
    %3140 = vmatpush1.xpose.msra.mxu0 0.0
    %3141 = vmatprep.subr.mxu0 0.0
    %3142 = vmatpush1.xpose.msra.mxu0 0.0
    %3143 = vmatprep.subr.mxu0 0.0
    %3144 = vmatpush1.xpose.msra.mxu0 0.0
    %3145 = vmatprep.subr.mxu0 0.0
    %3146 = vmatpush1.xpose.msra.mxu0 0.0
    %3147 = vmatprep.subr.mxu0 0.0
    %3148 = vmatpush1.xpose.msra.mxu0 0.0
    %3149 = vmatprep.subr.mxu0 0.0
    %3150 = vmatpush1.xpose.msra.mxu0 0.0
    %3151 = vmatprep.subr.mxu0 0.0
    %3152 = vmatpush1.xpose.msra.mxu0 0.0
    %3153 = vmatprep.subr.mxu0 0.0
    %3154 = vmatpush1.xpose.msra.mxu0 0.0
    %3155 = vmatprep.subr.mxu0 0.0
    %3156 = vmatpush1.xpose.msra.mxu0 0.0
    %3157 = vmatprep.subr.mxu0 0.0
    %3158 = vmatpush1.xpose.msra.mxu0 0.0
    %3159 = vmatprep.subr.mxu0 0.0
    %3160 = vmatpush1.xpose.msra.mxu0 0.0
    %3161 = vmatprep.subr.mxu0 0.0
    %3162 = vmatpush1.xpose.msra.mxu0 0.0
    %3163 = vmatprep.subr.mxu0 0.0
    %3164 = vmatpush1.xpose.msra.mxu0 0.0
    %3165 = vmatprep.subr.mxu0 0.0
    %3166 = vmatpush1.xpose.msra.mxu0 0.0
    %3167 = vmatprep.subr.mxu0 0.0
    %3168 = vmatpush1.xpose.msra.mxu0 0.0
    %3169 = vmatprep.subr.mxu0 0.0
    %3170 = vmatpush1.xpose.msra.mxu0 0.0
    %3171 = vmatprep.subr.mxu0 0.0
    %3172 = vmatpush1.xpose.msra.mxu0 0.0
    %3173 = vmatprep.subr.mxu0 0.0
    %3174 = vmatpush1.xpose.msra.mxu0 0.0
    %3175 = vmatprep.subr.mxu0 0.0
    %3176 = vmatpush1.xpose.msra.mxu0 0.0
    %3177 = vmatprep.subr.mxu0 0.0
    %3178 = vmatpush1.xpose.msra.mxu0 0.0
    %3179 = vmatprep.subr.mxu0 0.0
    %3180 = vmatpush1.xpose.msra.mxu0 0.0
    %3181 = vmatprep.subr.mxu0 0.0
    %3182 = vmatpush1.xpose.msra.mxu0 0.0
    %3183 = vmatprep.subr.mxu0 0.0
    %3184 = vmatpush1.xpose.msra.mxu0 0.0
    %3185 = vmatprep.subr.mxu0 0.0
    %3186 = vmatpush1.xpose.msra.mxu0 0.0
    %3187 = vmatprep.subr.mxu0 0.0
    %3188 = vmatpush1.xpose.msra.mxu0 0.0
    %3189 = vmatprep.subr.mxu0 0.0
    %3190 = vmatpush1.xpose.msra.mxu0 0.0
    %3191 = vmatprep.subr.mxu0 0.0
    %3192 = vmatpush1.xpose.msra.mxu0 0.0
    %3193 = vmatprep.subr.mxu0 0.0
    %3194 = vmatpush1.xpose.msra.mxu0 0.0
    %3195 = vmatprep.subr.mxu0 0.0
    %3196 = vmatpush1.xpose.msra.mxu0 0.0
    %3197 = vmatprep.subr.mxu0 0.0
    %3198 = vmatpush1.xpose.msra.mxu0 0.0
    %3199 = vmatprep.subr.mxu0 0.0
    %3200 = vmatpush1.xpose.msra.mxu0 0.0
    %3201 = vmatprep.mubr.f32.mxu0 0.0
    %3202 = vmatmul.mubr.f32.gmra.mrb[0].mxu0 %v3133
    %v3203 = vpop.f32.mrb[0].mxu0
    %v3204 = vadd.f32 0.0, %v3203
    %v3205 = vpop.f32.mrb[0].mxu0
    %3206 = vdwg.mxu0
    %v3207 = vsel %vm67, %v3126, -inf
    %3208 = vmax.xlane.f32.xlu0 %v3207
    %v3209 = vpop.xlane.xlu0 %3208
    %v3210 = vsel %vm67, %v3204, -inf
    %3211 = vmax.xlane.f32.xlu0 %v3210
    %v3212 = vpop.xlane.xlu0 %3211
    %v3213 = vsub.f32 %v3126, %v3209
    %v3214 = vsub.f32 %v3204, %v3212
    %v3215 = vmul.f32 %v3213, 1.442695
    %v3216 = vpow.pop %v3215
    %v3217 = vmul.f32 %v3214, 1.442695
    %v3218 = vpow.pop %v3217
    %v3219 = vsel %vm67, %v3216, 0.0
    %3220 = vadd.xlane.f32.xlu0 %v3219
    %v3221 = vpop.xlane.xlu0 %3220
    %v3222 = vsel %vm67, %v3218, 0.0
    %3223 = vadd.xlane.f32.xlu0 %v3222
    %v3224 = vpop.xlane.xlu0 %3223
    %v3225 = vrcp.pop %v3221
    %v3226 = vrcp.pop %v3224
    %v3227 = vmul.f32 %v3216, %v3225
    %v3228 = vmul.f32 %v3218, %v3226
    %3229 = vrot.lane.b32.xlu0 %v2055, 40
    %v3230 = vpop.permute.xlu0 %3229
    %v3233 = vsel %vm67, %v3227, 0
    %3235 = vmatprep.subr.mxu0 0.0
    %3236 = vmatpush1.msra.mxu0 %v3230
    %3237 = vmatprep.subr.mxu0 0.0
    %3238 = vmatpush1.msra.mxu0 0.0
    %3239 = vmatprep.subr.mxu0 0.0
    %3240 = vmatpush1.msra.mxu0 0.0
    %3241 = vmatprep.subr.mxu0 0.0
    %3242 = vmatpush1.msra.mxu0 0.0
    %3243 = vmatprep.subr.mxu0 0.0
    %3244 = vmatpush1.msra.mxu0 0.0
    %3245 = vmatprep.subr.mxu0 0.0
    %3246 = vmatpush1.msra.mxu0 0.0
    %3247 = vmatprep.subr.mxu0 0.0
    %3248 = vmatpush1.msra.mxu0 0.0
    %3249 = vmatprep.subr.mxu0 0.0
    %3250 = vmatpush1.msra.mxu0 0.0
    %3251 = vmatprep.subr.mxu0 0.0
    %3252 = vmatpush1.msra.mxu0 0.0
    %3253 = vmatprep.subr.mxu0 0.0
    %3254 = vmatpush1.msra.mxu0 0.0
    %3255 = vmatprep.subr.mxu0 0.0
    %3256 = vmatpush1.msra.mxu0 0.0
    %3257 = vmatprep.subr.mxu0 0.0
    %3258 = vmatpush1.msra.mxu0 0.0
    %3259 = vmatprep.subr.mxu0 0.0
    %3260 = vmatpush1.msra.mxu0 0.0
    %3261 = vmatprep.subr.mxu0 0.0
    %3262 = vmatpush1.msra.mxu0 0.0
    %3263 = vmatprep.subr.mxu0 0.0
    %3264 = vmatpush1.msra.mxu0 0.0
    %3265 = vmatprep.subr.mxu0 0.0
    %3266 = vmatpush1.msra.mxu0 0.0
    %3267 = vmatprep.subr.mxu0 0.0
    %3268 = vmatpush1.msra.mxu0 0.0
    %3269 = vmatprep.subr.mxu0 0.0
    %3270 = vmatpush1.msra.mxu0 0.0
    %3271 = vmatprep.subr.mxu0 0.0
    %3272 = vmatpush1.msra.mxu0 0.0
    %3273 = vmatprep.subr.mxu0 0.0
    %3274 = vmatpush1.msra.mxu0 0.0
    %3275 = vmatprep.subr.mxu0 0.0
    %3276 = vmatpush1.msra.mxu0 0.0
    %3277 = vmatprep.subr.mxu0 0.0
    %3278 = vmatpush1.msra.mxu0 0.0
    %3279 = vmatprep.subr.mxu0 0.0
    %3280 = vmatpush1.msra.mxu0 0.0
    %3281 = vmatprep.subr.mxu0 0.0
    %3282 = vmatpush1.msra.mxu0 0.0
    %3283 = vmatprep.subr.mxu0 0.0
    %3284 = vmatpush1.msra.mxu0 0.0
    %3285 = vmatprep.subr.mxu0 0.0
    %3286 = vmatpush1.msra.mxu0 0.0
    %3287 = vmatprep.subr.mxu0 0.0
    %3288 = vmatpush1.msra.mxu0 0.0
    %3289 = vmatprep.subr.mxu0 0.0
    %3290 = vmatpush1.msra.mxu0 0.0
    %3291 = vmatprep.subr.mxu0 0.0
    %3292 = vmatpush1.msra.mxu0 0.0
    %3293 = vmatprep.subr.mxu0 0.0
    %3294 = vmatpush1.msra.mxu0 0.0
    %3295 = vmatprep.subr.mxu0 0.0
    %3296 = vmatpush1.msra.mxu0 0.0
    %3297 = vmatprep.subr.mxu0 0.0
    %3298 = vmatpush1.msra.mxu0 0.0
    %3299 = vmatprep.mubr.f32.mxu0 0.0
    %3300 = vmatmul.mubr.f32.gmra.mrb[0].mxu0 %v3233
    %v3301 = vpop.f32.mrb[0].mxu0
    %v3302 = vadd.f32 0.0, %v3301
    %v3303 = vpop.f32.mrb[0].mxu0
    %3304 = vdwg.mxu0
    %3305 = vrot.lane.b32.xlu0 %v2060, 40
    %v3306 = vpop.permute.xlu0 %3305
    %v3309 = vsel %vm67, %v3228, 0
    %3311 = vmatprep.subr.mxu0 0.0
    %3312 = vmatpush1.msra.mxu0 %v3306
    %3313 = vmatprep.subr.mxu0 0.0
    %3314 = vmatpush1.msra.mxu0 0.0
    %3315 = vmatprep.subr.mxu0 0.0
    %3316 = vmatpush1.msra.mxu0 0.0
    %3317 = vmatprep.subr.mxu0 0.0
    %3318 = vmatpush1.msra.mxu0 0.0
    %3319 = vmatprep.subr.mxu0 0.0
    %3320 = vmatpush1.msra.mxu0 0.0
    %3321 = vmatprep.subr.mxu0 0.0
    %3322 = vmatpush1.msra.mxu0 0.0
    %3323 = vmatprep.subr.mxu0 0.0
    %3324 = vmatpush1.msra.mxu0 0.0
    %3325 = vmatprep.subr.mxu0 0.0
    %3326 = vmatpush1.msra.mxu0 0.0
    %3327 = vmatprep.subr.mxu0 0.0
    %3328 = vmatpush1.msra.mxu0 0.0
    %3329 = vmatprep.subr.mxu0 0.0
    %3330 = vmatpush1.msra.mxu0 0.0
    %3331 = vmatprep.subr.mxu0 0.0
    %3332 = vmatpush1.msra.mxu0 0.0
    %3333 = vmatprep.subr.mxu0 0.0
    %3334 = vmatpush1.msra.mxu0 0.0
    %3335 = vmatprep.subr.mxu0 0.0
    %3336 = vmatpush1.msra.mxu0 0.0
    %3337 = vmatprep.subr.mxu0 0.0
    %3338 = vmatpush1.msra.mxu0 0.0
    %3339 = vmatprep.subr.mxu0 0.0
    %3340 = vmatpush1.msra.mxu0 0.0
    %3341 = vmatprep.subr.mxu0 0.0
    %3342 = vmatpush1.msra.mxu0 0.0
    %3343 = vmatprep.subr.mxu0 0.0
    %3344 = vmatpush1.msra.mxu0 0.0
    %3345 = vmatprep.subr.mxu0 0.0
    %3346 = vmatpush1.msra.mxu0 0.0
    %3347 = vmatprep.subr.mxu0 0.0
    %3348 = vmatpush1.msra.mxu0 0.0
    %3349 = vmatprep.subr.mxu0 0.0
    %3350 = vmatpush1.msra.mxu0 0.0
    %3351 = vmatprep.subr.mxu0 0.0
    %3352 = vmatpush1.msra.mxu0 0.0
    %3353 = vmatprep.subr.mxu0 0.0
    %3354 = vmatpush1.msra.mxu0 0.0
    %3355 = vmatprep.subr.mxu0 0.0
    %3356 = vmatpush1.msra.mxu0 0.0
    %3357 = vmatprep.subr.mxu0 0.0
    %3358 = vmatpush1.msra.mxu0 0.0
    %3359 = vmatprep.subr.mxu0 0.0
    %3360 = vmatpush1.msra.mxu0 0.0
    %3361 = vmatprep.subr.mxu0 0.0
    %3362 = vmatpush1.msra.mxu0 0.0
    %3363 = vmatprep.subr.mxu0 0.0
    %3364 = vmatpush1.msra.mxu0 0.0
    %3365 = vmatprep.subr.mxu0 0.0
    %3366 = vmatpush1.msra.mxu0 0.0
    %3367 = vmatprep.subr.mxu0 0.0
    %3368 = vmatpush1.msra.mxu0 0.0
    %3369 = vmatprep.subr.mxu0 0.0
    %3370 = vmatpush1.msra.mxu0 0.0
    %3371 = vmatprep.subr.mxu0 0.0
    %3372 = vmatpush1.msra.mxu0 0.0
    %3373 = vmatprep.subr.mxu0 0.0
    %3374 = vmatpush1.msra.mxu0 0.0
    %3375 = vmatprep.mubr.f32.mxu0 0.0
    %3376 = vmatmul.mubr.f32.gmra.mrb[0].mxu0 %v3309
    %v3377 = vpop.f32.mrb[0].mxu0
    %v3378 = vadd.f32 0.0, %v3377
    %v3379 = vpop.f32.mrb[0].mxu0
    %3380 = vdwg.mxu0
    %3383 = vrot.lane.b32.xlu0 %v2642, 8
    %v3384 = vpop.permute.xlu0 %3383
    %3385 = vrot.lane.b32.xlu0 %v2718, 8
    %v3386 = vpop.permute.xlu0 %3385
    %3391 = vrot.lane.b32.xlu0 %v2972, 16
    %v3392 = vpop.permute.xlu0 %3391
    %3393 = vrot.lane.b32.xlu0 %v3048, 16
    %v3394 = vpop.permute.xlu0 %3393
    %3399 = vrot.lane.b32.xlu0 %v3302, 24
    %v3400 = vpop.permute.xlu0 %3399
    %3401 = vrot.lane.b32.xlu0 %v3378, 24
    %v3402 = vpop.permute.xlu0 %3401
    %v3405 = vsel %vm67, %v2312, %v3384
    %v3406 = vsel %vm67, %v2388, %v3386
    %v3407 = vsel %vm1586, %v3405, %v3392
    %v3408 = vsel %vm1586, %v3406, %v3394
    %v3409 = vsel %vm1589, %v3407, %v3400
    %v3410 = vsel %vm1589, %v3408, %v3402
    %s3411 = scalar_lea.vmem %s5, 32
    %v3412 = vld [vmem:[%s3411] sm:$0xff]
    %v3413 = vld [vmem:[%s3411 + $0x8] sm:$0xff]
    %v3414 = vld [vmem:[%s3411 + $0x10] sm:$0xff]
    %v3415 = vld [vmem:[%s3411 + $0x18] sm:$0xff]
    %s3416 = scalar_lea.vmem %s6, 1
    %v3417 = vld [vmem:[%s3416] sm:$0x1]
    %v3419 = vlaneseq
    %v3420 = vshrl.u32 %v3419, 7
    %v3421 = vsub.s32 0, %v3420
    %v3422 = vrot.slane %v3417, %v3421
    %v3425 = vsel %vm160, %v3409, 0
    %v3428 = vsel %vm160, %v3410, 0
    %3430 = vmatprep.subr.mxu0 0.0
    %3431 = vmatpush1.msra.mxu0 %v3412
    %3432 = vmatprep.subr.mxu0 0.0
    %3433 = vmatpush1.msra.mxu0 %v3413
    %3434 = vmatprep.subr.mxu0 0.0
    %3435 = vmatpush1.msra.mxu0 %v3414
    %3436 = vmatprep.subr.mxu0 0.0
    %3437 = vmatpush1.msra.mxu0 %v3415
    %3438 = vmatprep.subr.mxu0 0.0
    %3439 = vmatpush1.msra.mxu0 0.0
    %3440 = vmatprep.subr.mxu0 0.0
    %3441 = vmatpush1.msra.mxu0 0.0
    %3442 = vmatprep.subr.mxu0 0.0
    %3443 = vmatpush1.msra.mxu0 0.0
    %3444 = vmatprep.subr.mxu0 0.0
    %3445 = vmatpush1.msra.mxu0 0.0
    %3446 = vmatprep.subr.mxu0 0.0
    %3447 = vmatpush1.msra.mxu0 0.0
    %3448 = vmatprep.subr.mxu0 0.0
    %3449 = vmatpush1.msra.mxu0 0.0
    %3450 = vmatprep.subr.mxu0 0.0
    %3451 = vmatpush1.msra.mxu0 0.0
    %3452 = vmatprep.subr.mxu0 0.0
    %3453 = vmatpush1.msra.mxu0 0.0
    %3454 = vmatprep.subr.mxu0 0.0
    %3455 = vmatpush1.msra.mxu0 0.0
    %3456 = vmatprep.subr.mxu0 0.0
    %3457 = vmatpush1.msra.mxu0 0.0
    %3458 = vmatprep.subr.mxu0 0.0
    %3459 = vmatpush1.msra.mxu0 0.0
    %3460 = vmatprep.subr.mxu0 0.0
    %3461 = vmatpush1.msra.mxu0 0.0
    %3462 = vmatprep.subr.mxu0 0.0
    %3463 = vmatpush1.msra.mxu0 0.0
    %3464 = vmatprep.subr.mxu0 0.0
    %3465 = vmatpush1.msra.mxu0 0.0
    %3466 = vmatprep.subr.mxu0 0.0
    %3467 = vmatpush1.msra.mxu0 0.0
    %3468 = vmatprep.subr.mxu0 0.0
    %3469 = vmatpush1.msra.mxu0 0.0
    %3470 = vmatprep.subr.mxu0 0.0
    %3471 = vmatpush1.msra.mxu0 0.0
    %3472 = vmatprep.subr.mxu0 0.0
    %3473 = vmatpush1.msra.mxu0 0.0
    %3474 = vmatprep.subr.mxu0 0.0
    %3475 = vmatpush1.msra.mxu0 0.0
    %3476 = vmatprep.subr.mxu0 0.0
    %3477 = vmatpush1.msra.mxu0 0.0
    %3478 = vmatprep.subr.mxu0 0.0
    %3479 = vmatpush1.msra.mxu0 0.0
    %3480 = vmatprep.subr.mxu0 0.0
    %3481 = vmatpush1.msra.mxu0 0.0
    %3482 = vmatprep.subr.mxu0 0.0
    %3483 = vmatpush1.msra.mxu0 0.0
    %3484 = vmatprep.subr.mxu0 0.0
    %3485 = vmatpush1.msra.mxu0 0.0
    %3486 = vmatprep.subr.mxu0 0.0
    %3487 = vmatpush1.msra.mxu0 0.0
    %3488 = vmatprep.subr.mxu0 0.0
    %3489 = vmatpush1.msra.mxu0 0.0
    %3490 = vmatprep.subr.mxu0 0.0
    %3491 = vmatpush1.msra.mxu0 0.0
    %3492 = vmatprep.subr.mxu0 0.0
    %3493 = vmatpush1.msra.mxu0 0.0
    %3494 = vmatprep.mubr.f32.mxu0 0.0
    %3495 = vmatmul.mubr.f32.gmra.mrb[0].mxu0 %v3425
    %v3496 = vpop.f32.mrb[0].mxu0
    %v3497 = vadd.f32 %v3422, %v3496
    %v3498 = vpop.f32.mrb[0].mxu0
    %3499 = vmatprep.mubr.f32.mxu0 0.0
    %3500 = vmatmul.mubr.f32.gmra.mrb[0].mxu0 %v3428
    %v3501 = vpop.f32.mrb[0].mxu0
    %v3502 = vadd.f32 %v3422, %v3501
    %v3503 = vpop.f32.mrb[0].mxu0
    %3504 = vdwg.mxu0
    %v3505 = vadd.f32 %v1967, %v3497
    %v3506 = vadd.f32 %v1968, %v3502
    %s3507 = scalar_lea.vmem %s11, 1
    %v3508 = vld [vmem:[%s3507] sm:$0x1]
    %s3509 = scalar_lea.vmem %s12, 1
    %v3510 = vld [vmem:[%s3509] sm:$0x1]
    %v3511 = vsel %vm160, %v3505, 0.0
    %3512 = vadd.xlane.f32.xlu0 %v3511
    %v3513 = vpop.xlane.xlu0 %3512
    %v3514 = vsel %vm160, %v3506, 0.0
    %3515 = vadd.xlane.f32.xlu0 %v3514
    %v3516 = vpop.xlane.xlu0 %3515
    %v3517 = vmul.f32 %v3513, %v1694
    %v3518 = vmul.f32 %v3516, %v1694
    %v3519 = vsub.f32 %v3505, %v3517
    %v3520 = vsub.f32 %v3506, %v3518
    %v3521 = vmul.f32 %v3519, %v3519
    %v3522 = vmul.f32 %v3520, %v3520
    %v3523 = vsel %vm160, %v3521, 0.0
    %3524 = vadd.xlane.f32.xlu0 %v3523
    %v3525 = vpop.xlane.xlu0 %3524
    %v3526 = vsel %vm160, %v3522, 0.0
    %3527 = vadd.xlane.f32.xlu0 %v3526
    %v3528 = vpop.xlane.xlu0 %3527
    %v3529 = vmul.f32 %v3525, %v1694
    %v3530 = vmul.f32 %v3528, %v1694
    %v3531 = vadd.f32 %v3529, 1e-05
    %v3532 = vadd.f32 %v3530, 1e-05
    %v3533 = vrsqrt.pop %v3531
    %v3534 = vrsqrt.pop %v3532
    %v3535 = vmul.f32 %v3519, %v3533
    %v3536 = vmul.f32 %v3520, %v3534
    %v3538 = vlaneseq
    %v3539 = vshrl.u32 %v3538, 7
    %v3540 = vsub.s32 0, %v3539
    %v3541 = vrot.slane %v3508, %v3540
    %v3543 = vmul.f32 %v3535, %v3541
    %v3544 = vmul.f32 %v3536, %v3541
    %v3546 = vlaneseq
    %v3547 = vshrl.u32 %v3546, 7
    %v3548 = vsub.s32 0, %v3547
    %v3549 = vrot.slane %v3510, %v3548
    %v3551 = vadd.f32 %v3543, %v3549
    %v3552 = vadd.f32 %v3544, %v3549
    %s3553 = scalar_lea.vmem %s7, 32
    %v3554 = vld [vmem:[%s3553] sm:$0xff]
    %v3555 = vld [vmem:[%s3553 + $0x8] sm:$0xff]
    %v3556 = vld [vmem:[%s3553 + $0x10] sm:$0xff]
    %v3557 = vld [vmem:[%s3553 + $0x18] sm:$0xff]
    %s3558 = scalar_lea.vmem %s8, 1
    %v3559 = vld [vmem:[%s3558] sm:$0x1]
    %v3561 = vlaneseq
    %v3562 = vshrl.u32 %v3561, 7
    %v3563 = vsub.s32 0, %v3562
    %v3564 = vrot.slane %v3559, %v3563
    %v3567 = vsel %vm160, %v3551, 0
    %v3570 = vsel %vm160, %v3552, 0
    %3572 = vmatprep.subr.mxu0 0.0
    %3573 = vmatpush1.msra.mxu0 %v3554
    %3574 = vmatprep.subr.mxu0 0.0
    %3575 = vmatpush1.msra.mxu0 %v3555
    %3576 = vmatprep.subr.mxu0 0.0
    %3577 = vmatpush1.msra.mxu0 %v3556
    %3578 = vmatprep.subr.mxu0 0.0
    %3579 = vmatpush1.msra.mxu0 %v3557
    %3580 = vmatprep.subr.mxu0 0.0
    %3581 = vmatpush1.msra.mxu0 0.0
    %3582 = vmatprep.subr.mxu0 0.0
    %3583 = vmatpush1.msra.mxu0 0.0
    %3584 = vmatprep.subr.mxu0 0.0
    %3585 = vmatpush1.msra.mxu0 0.0
    %3586 = vmatprep.subr.mxu0 0.0
    %3587 = vmatpush1.msra.mxu0 0.0
    %3588 = vmatprep.subr.mxu0 0.0
    %3589 = vmatpush1.msra.mxu0 0.0
    %3590 = vmatprep.subr.mxu0 0.0
    %3591 = vmatpush1.msra.mxu0 0.0
    %3592 = vmatprep.subr.mxu0 0.0
    %3593 = vmatpush1.msra.mxu0 0.0
    %3594 = vmatprep.subr.mxu0 0.0
    %3595 = vmatpush1.msra.mxu0 0.0
    %3596 = vmatprep.subr.mxu0 0.0
    %3597 = vmatpush1.msra.mxu0 0.0
    %3598 = vmatprep.subr.mxu0 0.0
    %3599 = vmatpush1.msra.mxu0 0.0
    %3600 = vmatprep.subr.mxu0 0.0
    %3601 = vmatpush1.msra.mxu0 0.0
    %3602 = vmatprep.subr.mxu0 0.0
    %3603 = vmatpush1.msra.mxu0 0.0
    %3604 = vmatprep.subr.mxu0 0.0
    %3605 = vmatpush1.msra.mxu0 0.0
    %3606 = vmatprep.subr.mxu0 0.0
    %3607 = vmatpush1.msra.mxu0 0.0
    %3608 = vmatprep.subr.mxu0 0.0
    %3609 = vmatpush1.msra.mxu0 0.0
    %3610 = vmatprep.subr.mxu0 0.0
    %3611 = vmatpush1.msra.mxu0 0.0
    %3612 = vmatprep.subr.mxu0 0.0
    %3613 = vmatpush1.msra.mxu0 0.0
    %3614 = vmatprep.subr.mxu0 0.0
    %3615 = vmatpush1.msra.mxu0 0.0
    %3616 = vmatprep.subr.mxu0 0.0
    %3617 = vmatpush1.msra.mxu0 0.0
    %3618 = vmatprep.subr.mxu0 0.0
    %3619 = vmatpush1.msra.mxu0 0.0
    %3620 = vmatprep.subr.mxu0 0.0
    %3621 = vmatpush1.msra.mxu0 0.0
    %3622 = vmatprep.subr.mxu0 0.0
    %3623 = vmatpush1.msra.mxu0 0.0
    %3624 = vmatprep.subr.mxu0 0.0
    %3625 = vmatpush1.msra.mxu0 0.0
    %3626 = vmatprep.subr.mxu0 0.0
    %3627 = vmatpush1.msra.mxu0 0.0
    %3628 = vmatprep.subr.mxu0 0.0
    %3629 = vmatpush1.msra.mxu0 0.0
    %3630 = vmatprep.subr.mxu0 0.0
    %3631 = vmatpush1.msra.mxu0 0.0
    %3632 = vmatprep.subr.mxu0 0.0
    %3633 = vmatpush1.msra.mxu0 0.0
    %3634 = vmatprep.subr.mxu0 0.0
    %3635 = vmatpush1.msra.mxu0 0.0
    %3636 = vmatprep.mubr.f32.mxu0 0.0
    %3637 = vmatmul.mubr.f32.gmra.mrb[0].mxu0 %v3567
    %v3638 = vpop.f32.mrb[0].mxu0
    %v3639 = vadd.f32 %v3564, %v3638
    %v3640 = vpop.f32.mrb[0].mxu0
    %3641 = vmatprep.mubr.f32.mxu0 0.0
    %3642 = vmatmul.mubr.f32.gmra.mrb[0].mxu0 %v3570
    %v3643 = vpop.f32.mrb[0].mxu0
    %v3644 = vadd.f32 %v3564, %v3643
    %v3645 = vpop.f32.mrb[0].mxu0
    %3646 = vdwg.mxu0
    %v3647 = vmax.f32 %v3639, 0.0
    %v3648 = vmax.f32 %v3644, 0.0
    %s3649 = scalar_lea.vmem %s9, 128
    %v3650 = vld [vmem:[%s3649] sm:$0xff]
    %v3651 = vld [vmem:[%s3649 + $0x8] sm:$0xff]
    %v3652 = vld [vmem:[%s3649 + $0x10] sm:$0xff]
    %v3653 = vld [vmem:[%s3649 + $0x18] sm:$0xff]
    %v3654 = vld [vmem:[%s3649 + $0x20] sm:$0xff]
    %v3655 = vld [vmem:[%s3649 + $0x28] sm:$0xff]
    %v3656 = vld [vmem:[%s3649 + $0x30] sm:$0xff]
    %v3657 = vld [vmem:[%s3649 + $0x38] sm:$0xff]
    %v3658 = vld [vmem:[%s3649 + $0x40] sm:$0xff]
    %v3659 = vld [vmem:[%s3649 + $0x48] sm:$0xff]
    %v3660 = vld [vmem:[%s3649 + $0x50] sm:$0xff]
    %v3661 = vld [vmem:[%s3649 + $0x58] sm:$0xff]
    %v3662 = vld [vmem:[%s3649 + $0x60] sm:$0xff]
    %v3663 = vld [vmem:[%s3649 + $0x68] sm:$0xff]
    %v3664 = vld [vmem:[%s3649 + $0x70] sm:$0xff]
    %v3665 = vld [vmem:[%s3649 + $0x78] sm:$0xff]
    %s3666 = scalar_lea.vmem %s10, 1
    %v3667 = vld [vmem:[%s3666] sm:$0x1]
    %v3669 = vlaneseq
    %v3670 = vshrl.u32 %v3669, 7
    %v3671 = vsub.s32 0, %v3670
    %v3672 = vrot.slane %v3667, %v3671
    %3674 = vmatprep.subr.mxu0 0.0
    %3675 = vmatpush1.msra.mxu0 %v3650
    %3676 = vmatprep.subr.mxu0 0.0
    %3677 = vmatpush1.msra.mxu0 %v3651
    %3678 = vmatprep.subr.mxu0 0.0
    %3679 = vmatpush1.msra.mxu0 %v3652
    %3680 = vmatprep.subr.mxu0 0.0
    %3681 = vmatpush1.msra.mxu0 %v3653
    %3682 = vmatprep.subr.mxu0 0.0
    %3683 = vmatpush1.msra.mxu0 %v3654
    %3684 = vmatprep.subr.mxu0 0.0
    %3685 = vmatpush1.msra.mxu0 %v3655
    %3686 = vmatprep.subr.mxu0 0.0
    %3687 = vmatpush1.msra.mxu0 %v3656
    %3688 = vmatprep.subr.mxu0 0.0
    %3689 = vmatpush1.msra.mxu0 %v3657
    %3690 = vmatprep.subr.mxu0 0.0
    %3691 = vmatpush1.msra.mxu0 %v3658
    %3692 = vmatprep.subr.mxu0 0.0
    %3693 = vmatpush1.msra.mxu0 %v3659
    %3694 = vmatprep.subr.mxu0 0.0
    %3695 = vmatpush1.msra.mxu0 %v3660
    %3696 = vmatprep.subr.mxu0 0.0
    %3697 = vmatpush1.msra.mxu0 %v3661
    %3698 = vmatprep.subr.mxu0 0.0
    %3699 = vmatpush1.msra.mxu0 %v3662
    %3700 = vmatprep.subr.mxu0 0.0
    %3701 = vmatpush1.msra.mxu0 %v3663
    %3702 = vmatprep.subr.mxu0 0.0
    %3703 = vmatpush1.msra.mxu0 %v3664
    %3704 = vmatprep.subr.mxu0 0.0
    %3705 = vmatpush1.msra.mxu0 %v3665
    %3706 = vmatprep.subr.mxu0 0.0
    %3707 = vmatpush1.msra.mxu0 0.0
    %3708 = vmatprep.subr.mxu0 0.0
    %3709 = vmatpush1.msra.mxu0 0.0
    %3710 = vmatprep.subr.mxu0 0.0
    %3711 = vmatpush1.msra.mxu0 0.0
    %3712 = vmatprep.subr.mxu0 0.0
    %3713 = vmatpush1.msra.mxu0 0.0
    %3714 = vmatprep.subr.mxu0 0.0
    %3715 = vmatpush1.msra.mxu0 0.0
    %3716 = vmatprep.subr.mxu0 0.0
    %3717 = vmatpush1.msra.mxu0 0.0
    %3718 = vmatprep.subr.mxu0 0.0
    %3719 = vmatpush1.msra.mxu0 0.0
    %3720 = vmatprep.subr.mxu0 0.0
    %3721 = vmatpush1.msra.mxu0 0.0
    %3722 = vmatprep.subr.mxu0 0.0
    %3723 = vmatpush1.msra.mxu0 0.0
    %3724 = vmatprep.subr.mxu0 0.0
    %3725 = vmatpush1.msra.mxu0 0.0
    %3726 = vmatprep.subr.mxu0 0.0
    %3727 = vmatpush1.msra.mxu0 0.0
    %3728 = vmatprep.subr.mxu0 0.0
    %3729 = vmatpush1.msra.mxu0 0.0
    %3730 = vmatprep.subr.mxu0 0.0
    %3731 = vmatpush1.msra.mxu0 0.0
    %3732 = vmatprep.subr.mxu0 0.0
    %3733 = vmatpush1.msra.mxu0 0.0
    %3734 = vmatprep.subr.mxu0 0.0
    %3735 = vmatpush1.msra.mxu0 0.0
    %3736 = vmatprep.subr.mxu0 0.0
    %3737 = vmatpush1.msra.mxu0 0.0
    %3738 = vmatprep.mubr.f32.mxu0 0.0
    %3739 = vmatmul.mubr.f32.gmra.mrb[0].mxu0 %v3647
    %v3740 = vpop.f32.mrb[0].mxu0
    %v3741 = vadd.f32 %v3672, %v3740
    %v3742 = vpop.f32.mrb[0].mxu0
    %3743 = vmatprep.mubr.f32.mxu0 0.0
    %3744 = vmatmul.mubr.f32.gmra.mrb[0].mxu0 %v3648
    %v3745 = vpop.f32.mrb[0].mxu0
    %v3746 = vadd.f32 %v3672, %v3745
    %v3747 = vpop.f32.mrb[0].mxu0
    %3748 = vdwg.mxu0
    %v3749 = vadd.f32 %v3551, %v3741
    %v3750 = vadd.f32 %v3552, %v3746
    %s3751 = scalar_lea.vmem %s13, 1
    %v3752 = vld [vmem:[%s3751] sm:$0x1]
    %s3753 = scalar_lea.vmem %s14, 1
    %v3754 = vld [vmem:[%s3753] sm:$0x1]
    %v3755 = vsel %vm160, %v3749, 0.0
    %3756 = vadd.xlane.f32.xlu0 %v3755
    %v3757 = vpop.xlane.xlu0 %3756
    %v3758 = vsel %vm160, %v3750, 0.0
    %3759 = vadd.xlane.f32.xlu0 %v3758
    %v3760 = vpop.xlane.xlu0 %3759
    %v3761 = vmul.f32 %v3757, %v1694
    %v3762 = vmul.f32 %v3760, %v1694
    %v3763 = vsub.f32 %v3749, %v3761
    %v3764 = vsub.f32 %v3750, %v3762
    %v3765 = vmul.f32 %v3763, %v3763
    %v3766 = vmul.f32 %v3764, %v3764
    %v3767 = vsel %vm160, %v3765, 0.0
    %3768 = vadd.xlane.f32.xlu0 %v3767
    %v3769 = vpop.xlane.xlu0 %3768
    %v3770 = vsel %vm160, %v3766, 0.0
    %3771 = vadd.xlane.f32.xlu0 %v3770
    %v3772 = vpop.xlane.xlu0 %3771
    %v3773 = vmul.f32 %v3769, %v1694
    %v3774 = vmul.f32 %v3772, %v1694
    %v3775 = vadd.f32 %v3773, 1e-05
    %v3776 = vadd.f32 %v3774, 1e-05
    %v3777 = vrsqrt.pop %v3775
    %v3778 = vrsqrt.pop %v3776
    %v3779 = vmul.f32 %v3763, %v3777
    %v3780 = vmul.f32 %v3764, %v3778
    %v3782 = vlaneseq
    %v3783 = vshrl.u32 %v3782, 7
    %v3784 = vsub.s32 0, %v3783
    %v3785 = vrot.slane %v3752, %v3784
    %v3787 = vmul.f32 %v3779, %v3785
    %v3788 = vmul.f32 %v3780, %v3785
    %v3790 = vlaneseq
    %v3791 = vshrl.u32 %v3790, 7
    %v3792 = vsub.s32 0, %v3791
    %v3793 = vrot.slane %v3754, %v3792
    %v3795 = vadd.f32 %v3787, %v3793
    %v3796 = vadd.f32 %v3788, %v3793
    %v3797 = vld [vmem:[%s15] sm:$0xff]
    %v3798 = vld [vmem:[%s15 + $0x8] sm:$0xff]
    %v3799 = vld [vmem:[%s15 + $0x10] sm:$0xff]
    %v3800 = vld [vmem:[%s15 + $0x18] sm:$0xff]
    %v3801 = vld [vmem:[%s16] sm:$0x1]
    %v3803 = vlaneseq
    %v3804 = vshrl.u32 %v3803, 7
    %v3805 = vsub.s32 0, %v3804
    %v3806 = vrot.slane %v3801, %v3805
    %v3810 = vrot.slane %v3795, 7
    %v3811 = vrot.slane %v3796, 6
    %vm3812 = vcmask 1041409
    %v3813 = vsel %vm3812, %v3811, %v3810
    %v3814 = vsel %vm160, %v3813, 0
    %3816 = vmatprep.subr.mxu0 0.0
    %3817 = vmatpush1.msra.mxu0 %v3797
    %3818 = vmatprep.subr.mxu0 0.0
    %3819 = vmatpush1.msra.mxu0 %v3798
    %3820 = vmatprep.subr.mxu0 0.0
    %3821 = vmatpush1.msra.mxu0 %v3799
    %3822 = vmatprep.subr.mxu0 0.0
    %3823 = vmatpush1.msra.mxu0 %v3800
    %3824 = vmatprep.subr.mxu0 0.0
    %3825 = vmatpush1.msra.mxu0 0.0
    %3826 = vmatprep.subr.mxu0 0.0
    %3827 = vmatpush1.msra.mxu0 0.0
    %3828 = vmatprep.subr.mxu0 0.0
    %3829 = vmatpush1.msra.mxu0 0.0
    %3830 = vmatprep.subr.mxu0 0.0
    %3831 = vmatpush1.msra.mxu0 0.0
    %3832 = vmatprep.subr.mxu0 0.0
    %3833 = vmatpush1.msra.mxu0 0.0
    %3834 = vmatprep.subr.mxu0 0.0
    %3835 = vmatpush1.msra.mxu0 0.0
    %3836 = vmatprep.subr.mxu0 0.0
    %3837 = vmatpush1.msra.mxu0 0.0
    %3838 = vmatprep.subr.mxu0 0.0
    %3839 = vmatpush1.msra.mxu0 0.0
    %3840 = vmatprep.subr.mxu0 0.0
    %3841 = vmatpush1.msra.mxu0 0.0
    %3842 = vmatprep.subr.mxu0 0.0
    %3843 = vmatpush1.msra.mxu0 0.0
    %3844 = vmatprep.subr.mxu0 0.0
    %3845 = vmatpush1.msra.mxu0 0.0
    %3846 = vmatprep.subr.mxu0 0.0
    %3847 = vmatpush1.msra.mxu0 0.0
    %3848 = vmatprep.subr.mxu0 0.0
    %3849 = vmatpush1.msra.mxu0 0.0
    %3850 = vmatprep.subr.mxu0 0.0
    %3851 = vmatpush1.msra.mxu0 0.0
    %3852 = vmatprep.subr.mxu0 0.0
    %3853 = vmatpush1.msra.mxu0 0.0
    %3854 = vmatprep.subr.mxu0 0.0
    %3855 = vmatpush1.msra.mxu0 0.0
    %3856 = vmatprep.subr.mxu0 0.0
    %3857 = vmatpush1.msra.mxu0 0.0
    %3858 = vmatprep.subr.mxu0 0.0
    %3859 = vmatpush1.msra.mxu0 0.0
    %3860 = vmatprep.subr.mxu0 0.0
    %3861 = vmatpush1.msra.mxu0 0.0
    %3862 = vmatprep.subr.mxu0 0.0
    %3863 = vmatpush1.msra.mxu0 0.0
    %3864 = vmatprep.subr.mxu0 0.0
    %3865 = vmatpush1.msra.mxu0 0.0
    %3866 = vmatprep.subr.mxu0 0.0
    %3867 = vmatpush1.msra.mxu0 0.0
    %3868 = vmatprep.subr.mxu0 0.0
    %3869 = vmatpush1.msra.mxu0 0.0
    %3870 = vmatprep.subr.mxu0 0.0
    %3871 = vmatpush1.msra.mxu0 0.0
    %3872 = vmatprep.subr.mxu0 0.0
    %3873 = vmatpush1.msra.mxu0 0.0
    %3874 = vmatprep.subr.mxu0 0.0
    %3875 = vmatpush1.msra.mxu0 0.0
    %3876 = vmatprep.subr.mxu0 0.0
    %3877 = vmatpush1.msra.mxu0 0.0
    %3878 = vmatprep.subr.mxu0 0.0
    %3879 = vmatpush1.msra.mxu0 0.0
    %3880 = vmatprep.mubr.f32.mxu0 0.0
    %3881 = vmatmul.mubr.f32.gmra.mrb[0].mxu0 %v3814
    %v3882 = vpop.f32.mrb[0].mxu0
    %v3883 = vadd.f32 %v3806, %v3882
    %v3884 = vpop.f32.mrb[0].mxu0
    %3885 = vdwg.mxu0
    %vm3886 = vcmask 25600
    %3887 = vst.msk [vmem:[#allocation2] sm:$0x3] %vm3886, %v3883
    // Predicated region
    $region70: #{aws_cost_transformer.1} parent=1 // pred_check
      _
    $region71: #{aws_cost_transformer.1} parent=1 // pred_check_branch
      %3889 = sbr.rel (0) target = $region73
    $region72: #{aws_cost_transformer.1} parent=1 // pred_region
      %s3891 = ssub.s32 32, 32
      %3892 = vsyncadd [#allocation3], %s3891
      %s3894 = sshll.u32 [#allocation2], 4
      %s3895 = int_to_ptr.vmem [resolvable:$true] %s3894
      %3897 = dma.vmem_to_hbm [thread:$0]  %s3895, 32, %s17, [#allocation3]
    $region73: #{aws_cost_transformer.1} parent=1 // pred_fallthru
      _
    // Predicated region
    $region74: #{aws_cost_transformer.1} parent=1 // pred_check
      _
    $region75: #{aws_cost_transformer.1} parent=1 // pred_check_branch
      %3899 = sbr.rel (0) target = $region77
    $region76: #{aws_cost_transformer.1} parent=1 // pred_region
      %3900 = dma.done [#allocation3], 32
    $region77: #{aws_cost_transformer.1} parent=1 // pred_fallthru
      _
    %3901 = vsyncpa [#allocation3], 1

</llo_original>
